<compile_context>
chip_gen: v6e
topology: v6e:2x2x1
jax: 0.10.0
libtpu: 0.0.40
codegen_flags: <defaults>
</compile_context>

<pallas_src>
import functools

import jax
import jax.numpy as jnp
from jax.experimental import pallas as pl
from jax.experimental.pallas import tpu as pltpu


# ----------------------------------------------------------------------------
# Fused whole-network kernel.
# ----------------------------------------------------------------------------
def _fused_chain_kernel(x_ref,
                        w11_ref, b11_ref, w12_ref, b12_ref,
                        w13_ref, b13_ref, w21_ref, b21_ref,
                        w22_ref, b22_ref, w31_ref, b31_ref,
                        w32_ref, b32_ref,
                        o_ref,
                        p2_ref, p3_ref, p5_ref,
                        *, H, W, Ho, Wo):
    f32 = jnp.float32

    # Padded VMEM scratch buffers: zero once so the halo rows/cols are 0.
    p2_ref[...] = jnp.zeros_like(p2_ref)   # padded v2, (H+2, W+2, 32)
    p3_ref[...] = jnp.zeros_like(p3_ref)   # padded v3, (Ho+2, Wo+2, 32)
    p5_ref[...] = jnp.zeros_like(p5_ref)   # padded v5, (Ho+2, Wo+2, 32)

    def conv3x3_row(src_ref, r0, w_ref, wout):
        """One output row of a 3x3 stride-1 conv from a spatially padded ref.

        Reads padded rows r0, r0+1, r0+2; returns the (wout, Cout) f32
        accumulation (bias NOT added).  All matmuls are 2-D MXU ops on
        static slices of the loaded row (fused im2col in VMEM).
        """
        acc = None
        for kh in range(3):
            row = src_ref[r0 + kh]                       # (Wpad, Cin)
            for kw in range(3):
                part = jnp.dot(row[kw:kw + wout, :], w_ref[kh, kw],
                               preferred_element_type=f32)
                acc = part if acc is None else acc + part
        return acc

    # ---- v1 = relu(conv11(x)); v2 = conv12(v1)  -> padded p2 ---------------
    def body1(r, carry):
        a = conv3x3_row(x_ref, r, w11_ref, W) + b11_ref[...]
        v1 = jnp.maximum(a, 0.0)
        v2 = jnp.dot(v1, w12_ref[...], preferred_element_type=f32) + b12_ref[...]
        p2_ref[r + 1, 1:W + 1, :] = v2
        return carry

    jax.lax.fori_loop(0, H, body1, 0)

    # ---- v3 = conv13(v2)  (3x3, stride 2)  -> padded p3 ---------------------
    # Column subsampling (stride 2) via a 0/1 selection matmul: sel[j, 2j] = 1.
    rr = jax.lax.broadcasted_iota(jnp.int32, (Wo, W), 0)
    cc = jax.lax.broadcasted_iota(jnp.int32, (Wo, W), 1)
    sel = (cc == 2 * rr).astype(f32)                     # (Wo, W)

    def body2(i, carry):
        full = conv3x3_row(p2_ref, 2 * i, w13_ref, W)    # stride-1 row, (W, 32)
        v3 = jnp.dot(sel, full, preferred_element_type=f32) + b13_ref[...]
        p3_ref[i + 1, 1:Wo + 1, :] = v3
        return carry

    jax.lax.fori_loop(0, Ho, body2, 0)

    # ---- v4 = relu(conv21(v3)); v5 = conv22(v4)  -> padded p5 ---------------
    def body3(i, carry):
        a = conv3x3_row(p3_ref, i, w21_ref, Wo) + b21_ref[...]
        v4 = jnp.maximum(a, 0.0)
        v5 = jnp.dot(v4, w22_ref[...], preferred_element_type=f32) + b22_ref[...]
        p5_ref[i + 1, 1:Wo + 1, :] = v5
        return carry

    jax.lax.fori_loop(0, Ho, body3, 0)

    # ---- v6 = relu(conv31(v5)); v7 = conv32(v6)  -> output ------------------
    def body4(i, carry):
        a = conv3x3_row(p5_ref, i, w31_ref, Wo) + b31_ref[...]
        v6 = jnp.maximum(a, 0.0)
        v7 = jnp.dot(v6, w32_ref[...], preferred_element_type=f32) + b32_ref[...]
        o_ref[i] = v7.astype(o_ref.dtype)
        return carry

    jax.lax.fori_loop(0, Ho, body4, 0)


# ----------------------------------------------------------------------------
# Wrapper: NCHW in / NCHW out, one pallas_call for the whole network.
# ----------------------------------------------------------------------------
def model_forward(params, x_nchw):
    x = jnp.transpose(x_nchw, (0, 2, 3, 1)).astype(jnp.float32)  # NCHW -> NHWC
    N, H, W, Cin = x.shape
    Ho = (H - 1) // 2 + 1          # conv13: k=3, stride=2, padding=1
    Wo = (W - 1) // 2 + 1
    Hp, Wp = H + 2, W + 2

    xpad = jnp.pad(x, ((0, 0), (1, 1), (1, 1), (0, 0)))  # tiny (input only)

    w11, b11 = params["conv11"]
    w12, b12 = params["conv12"]
    w13, b13 = params["conv13"]
    w21, b21 = params["conv21"]
    w22, b22 = params["conv22"]
    w31, b31 = params["conv31"]
    w32, b32 = params["conv32"]

    w12_2d = w12.reshape(w12.shape[2], w12.shape[3])
    w22_2d = w22.reshape(w22.shape[2], w22.shape[3])
    w32_2d = w32.reshape(w32.shape[2], w32.shape[3])

    def b2d(b):
        return b.reshape(1, -1).astype(jnp.float32)

    def full_spec(shape):
        return pl.BlockSpec(shape, lambda n, _s=len(shape): (0,) * _s)

    kernel = functools.partial(_fused_chain_kernel, H=H, W=W, Ho=Ho, Wo=Wo)

    out_nhwc = pl.pallas_call(
        kernel,
        out_shape=jax.ShapeDtypeStruct((N, Ho, Wo, 3), jnp.float32),
        grid_spec=pltpu.PrefetchScalarGridSpec(
            num_scalar_prefetch=0,
            grid=(N,),
            in_specs=[
                pl.BlockSpec((None, Hp, Wp, Cin), lambda n: (n, 0, 0, 0)),
                full_spec(w11.shape),    full_spec((1, b11.shape[0])),
                full_spec(w12_2d.shape), full_spec((1, b12.shape[0])),
                full_spec(w13.shape),    full_spec((1, b13.shape[0])),
                full_spec(w21.shape),    full_spec((1, b21.shape[0])),
                full_spec(w22_2d.shape), full_spec((1, b22.shape[0])),
                full_spec(w31.shape),    full_spec((1, b31.shape[0])),
                full_spec(w32_2d.shape), full_spec((1, b32.shape[0])),
            ],
            out_specs=pl.BlockSpec((None, Ho, Wo, 3), lambda n: (n, 0, 0, 0)),
            scratch_shapes=[
                pltpu.VMEM((Hp, Wp, 32), jnp.float32),          # padded v2
                pltpu.VMEM((Ho + 2, Wo + 2, 32), jnp.float32),  # padded v3
                pltpu.VMEM((Ho + 2, Wo + 2, 32), jnp.float32),  # padded v5
            ],
        ),
        compiler_params=pltpu.CompilerParams(
            dimension_semantics=("parallel",),
            vmem_limit_bytes=48 * 1024 * 1024,   # > v5e 16MiB default, < v7x 64MiB
        ),
    )(
        xpad,
        w11, b2d(b11), w12_2d, b2d(b12),
        w13, b2d(b13), w21, b2d(b21),
        w22_2d, b2d(b22), w31, b2d(b31),
        w32_2d, b2d(b32),
    )
    return jnp.transpose(out_nhwc, (0, 3, 1, 2))   # NHWC -> NCHW


# ----------------------------------------------------------------------------
# Parameter init (deterministic, mirrors PyTorch Conv2d default init bounds).
# ----------------------------------------------------------------------------
def init_conv_params(key, cin, cout, k):
    fan_in = cin * k * k
    bound = 1.0 / (fan_in ** 0.5)
    kw_, kb_ = jax.random.split(key)
    w = jax.random.uniform(kw_, (k, k, cin, cout), jnp.float32, -bound, bound)
    b = jax.random.uniform(kb_, (cout,), jnp.float32, -bound, bound)
    return w, b


def init_model_params(key):
    keys = jax.random.split(key, 7)
    return {
        "conv11": init_conv_params(keys[0], 3, 32, 3),
        "conv12": init_conv_params(keys[1], 32, 32, 1),
        "conv13": init_conv_params(keys[2], 32, 32, 3),
        "conv21": init_conv_params(keys[3], 32, 32, 3),
        "conv22": init_conv_params(keys[4], 32, 32, 1),
        "conv31": init_conv_params(keys[5], 32, 32, 3),
        "conv32": init_conv_params(keys[6], 32, 3, 1),
    }


# ----------------------------------------------------------------------------
# Pure-JAX reference (correctness check).
# ----------------------------------------------------------------------------
def _conv2d_ref(x, w, b, stride, padding, relu):
    out = jax.lax.conv_general_dilated(
        x, w, window_strides=(stride, stride),
        padding=[(padding, padding), (padding, padding)],
        dimension_numbers=("NHWC", "HWIO", "NHWC"),
        precision=jax.lax.Precision.HIGHEST)
    out = out + b
    return jnp.maximum(out, 0.0) if relu else out


def model_forward_ref(params, x_nchw):
    x = jnp.transpose(x_nchw, (0, 2, 3, 1))
    v1 = _conv2d_ref(x,  *params["conv11"], 1, 1, True)
    v2 = _conv2d_ref(v1, *params["conv12"], 1, 0, False)
    v3 = _conv2d_ref(v2, *params["conv13"], 2, 1, False)
    v4 = _conv2d_ref(v3, *params["conv21"], 1, 1, True)
    v5 = _conv2d_ref(v4, *params["conv22"], 1, 0, False)
    v6 = _conv2d_ref(v5, *params["conv31"], 1, 1, True)
    v7 = _conv2d_ref(v6, *params["conv32"], 1, 0, False)
    return jnp.transpose(v7, (0, 3, 1, 2))


if __name__ == "__main__":
    root = jax.random.PRNGKey(0)
    k_params, k_x = jax.random.split(root)
    params = init_model_params(k_params)

    # Small-shape analogue of torch.randn(1, 3, 224, 224): (1, 3, 16, 16) NCHW.
    x = jax.random.normal(k_x, (1, 3, 16, 16), dtype=jnp.float32)

    fwd = jax.jit(model_forward)
    out = jax.block_until_ready(fwd(params, x))

    ref = jax.block_until_ready(model_forward_ref(params, x))
    assert out.shape == (1, 3, 8, 8), out.shape          # stride-2 conv halves HxW
    max_err = float(jnp.max(jnp.abs(out - ref)))
    assert jnp.allclose(out, ref, rtol=1e-2, atol=1e-2), max_err

    print("KERNEL_OK")
</pallas_src>

<mosaic_0001>
module attributes {stable_mosaic.version = 11 : i64} {
  func.func @_fused_chain_kernel(%arg0: i32, %arg1: memref<1x18x18x3xf32, #tpu.memory_space<vmem>>, %arg2: memref<3x3x3x32xf32, #tpu.memory_space<vmem>>, %arg3: memref<1x32xf32, #tpu.memory_space<vmem>>, %arg4: memref<32x32xf32, #tpu.memory_space<vmem>>, %arg5: memref<1x32xf32, #tpu.memory_space<vmem>>, %arg6: memref<3x3x32x32xf32, #tpu.memory_space<vmem>>, %arg7: memref<1x32xf32, #tpu.memory_space<vmem>>, %arg8: memref<3x3x32x32xf32, #tpu.memory_space<vmem>>, %arg9: memref<1x32xf32, #tpu.memory_space<vmem>>, %arg10: memref<32x32xf32, #tpu.memory_space<vmem>>, %arg11: memref<1x32xf32, #tpu.memory_space<vmem>>, %arg12: memref<3x3x32x32xf32, #tpu.memory_space<vmem>>, %arg13: memref<1x32xf32, #tpu.memory_space<vmem>>, %arg14: memref<32x3xf32, #tpu.memory_space<vmem>>, %arg15: memref<1x3xf32, #tpu.memory_space<vmem>>, %arg16: memref<1x8x8x3xf32, #tpu.memory_space<vmem>>, %arg17: memref<18x18x32xf32, #tpu.memory_space<vmem>>, %arg18: memref<10x10x32xf32, #tpu.memory_space<vmem>>, %arg19: memref<10x10x32xf32, #tpu.memory_space<vmem>>) attributes {dimension_semantics = [#tpu.dimension_semantics<parallel>], iteration_bounds = array<i64: 1>, scalar_prefetch = 0 : i64, scratch_operands = 3 : i64, tpu.core_type = #tpu.core_type<tc>, window_params = [{transform_indices = @transform_0, window_bounds = array<i64: 1, 18, 18, 3>}, {pipeline_mode = #tpu.pipeline_mode<synchronous>, transform_indices = @transform_1, window_bounds = array<i64: 3, 3, 3, 32>}, {pipeline_mode = #tpu.pipeline_mode<synchronous>, transform_indices = @transform_2, window_bounds = array<i64: 1, 32>}, {pipeline_mode = #tpu.pipeline_mode<synchronous>, transform_indices = @transform_3, window_bounds = array<i64: 32, 32>}, {pipeline_mode = #tpu.pipeline_mode<synchronous>, transform_indices = @transform_4, window_bounds = array<i64: 1, 32>}, {pipeline_mode = #tpu.pipeline_mode<synchronous>, transform_indices = @transform_5, window_bounds = array<i64: 3, 3, 32, 32>}, {pipeline_mode = #tpu.pipeline_mode<synchronous>, transform_indices = @transform_6, window_bounds = array<i64: 1, 32>}, {pipeline_mode = #tpu.pipeline_mode<synchronous>, transform_indices = @transform_7, window_bounds = array<i64: 3, 3, 32, 32>}, {pipeline_mode = #tpu.pipeline_mode<synchronous>, transform_indices = @transform_8, window_bounds = array<i64: 1, 32>}, {pipeline_mode = #tpu.pipeline_mode<synchronous>, transform_indices = @transform_9, window_bounds = array<i64: 32, 32>}, {pipeline_mode = #tpu.pipeline_mode<synchronous>, transform_indices = @transform_10, window_bounds = array<i64: 1, 32>}, {pipeline_mode = #tpu.pipeline_mode<synchronous>, transform_indices = @transform_11, window_bounds = array<i64: 3, 3, 32, 32>}, {pipeline_mode = #tpu.pipeline_mode<synchronous>, transform_indices = @transform_12, window_bounds = array<i64: 1, 32>}, {pipeline_mode = #tpu.pipeline_mode<synchronous>, transform_indices = @transform_13, window_bounds = array<i64: 32, 3>}, {pipeline_mode = #tpu.pipeline_mode<synchronous>, transform_indices = @transform_14, window_bounds = array<i64: 1, 3>}, {transform_indices = @transform_15, window_bounds = array<i64: 1, 8, 8, 3>}]} {
    %cst = arith.constant 0.000000e+00 : f32
    %0 = vector.broadcast %cst : f32 to vector<18x18x32xf32>
    %c0 = arith.constant 0 : index
    %c0_0 = arith.constant 0 : index
    %c0_1 = arith.constant 0 : index
    %1 = vector.load %arg17[%c0, %c0_0, %c0_1] : memref<18x18x32xf32, #tpu.memory_space<vmem>>, vector<18x18x32xf32>
    tpu.vector_store %arg17[%c0, %c0_0, %c0_1], %0 {strides = array<i32>} : memref<18x18x32xf32, #tpu.memory_space<vmem>>, vector<18x18x32xf32>,
    %cst_2 = arith.constant 0.000000e+00 : f32
    %2 = vector.broadcast %cst_2 : f32 to vector<10x10x32xf32>
    %c0_3 = arith.constant 0 : index
    %c0_4 = arith.constant 0 : index
    %c0_5 = arith.constant 0 : index
    %3 = vector.load %arg18[%c0_3, %c0_4, %c0_5] : memref<10x10x32xf32, #tpu.memory_space<vmem>>, vector<10x10x32xf32>
    tpu.vector_store %arg18[%c0_3, %c0_4, %c0_5], %2 {strides = array<i32>} : memref<10x10x32xf32, #tpu.memory_space<vmem>>, vector<10x10x32xf32>,
    %cst_6 = arith.constant 0.000000e+00 : f32
    %4 = vector.broadcast %cst_6 : f32 to vector<10x10x32xf32>
    %c0_7 = arith.constant 0 : index
    %c0_8 = arith.constant 0 : index
    %c0_9 = arith.constant 0 : index
    %5 = vector.load %arg19[%c0_7, %c0_8, %c0_9] : memref<10x10x32xf32, #tpu.memory_space<vmem>>, vector<10x10x32xf32>
    tpu.vector_store %arg19[%c0_7, %c0_8, %c0_9], %4 {strides = array<i32>} : memref<10x10x32xf32, #tpu.memory_space<vmem>>, vector<10x10x32xf32>,
    %c0_i32 = arith.constant 0 : i32
    %c16_i32 = arith.constant 16 : i32
    %6 = arith.addi %c0_i32, %c16_i32 : i32
    %c1_i32 = arith.constant 1 : i32
    scf.for %arg20 = %c0_i32 to %6 step %c1_i32  : i32 {
      %c0_i32_22 = arith.constant 0 : i32
      %17 = arith.addi %arg20, %c0_i32_22 : i32
      %c0_23 = arith.constant 0 : index
      %18 = arith.index_cast %17 : i32 to index
      %c0_24 = arith.constant 0 : index
      %c0_25 = arith.constant 0 : index
      %19 = vector.load %arg1[%c0_23, %18, %c0_24, %c0_25] : memref<1x18x18x3xf32, #tpu.memory_space<vmem>>, vector<1x1x18x3xf32>
      %20 = vector.shape_cast %19 : vector<1x1x18x3xf32> to vector<18x3xf32>
      %21 = vector.extract_strided_slice %20 {offsets = [0, 0], sizes = [16, 3], strides = [1, 1]} : vector<18x3xf32> to vector<16x3xf32>
      %c0_26 = arith.constant 0 : index
      %c0_27 = arith.constant 0 : index
      %c0_28 = arith.constant 0 : index
      %c0_29 = arith.constant 0 : index
      %22 = vector.load %arg2[%c0_26, %c0_27, %c0_28, %c0_29] : memref<3x3x3x32xf32, #tpu.memory_space<vmem>>, vector<1x1x3x32xf32>
      %23 = vector.shape_cast %22 : vector<1x1x3x32xf32> to vector<3x32xf32>
      %cst_30 = arith.constant dense<0.000000e+00> : vector<16x32xf32>
      %24 = tpu.matmul %21, %23, %cst_30 {dimension_numbers = #tpu.dot_dimension_numbers<[1], [0], [0], [1], [0, 0, 1, 1], [], []>} : vector<16x3xf32>, vector<3x32xf32>, vector<16x32xf32> -> vector<16x32xf32>
      %25 = vector.extract_strided_slice %20 {offsets = [1, 0], sizes = [16, 3], strides = [1, 1]} : vector<18x3xf32> to vector<16x3xf32>
      %c0_31 = arith.constant 0 : index
      %c1 = arith.constant 1 : index
      %c0_32 = arith.constant 0 : index
      %c0_33 = arith.constant 0 : index
      %26 = vector.load %arg2[%c0_31, %c1, %c0_32, %c0_33] : memref<3x3x3x32xf32, #tpu.memory_space<vmem>>, vector<1x1x3x32xf32>
      %27 = vector.shape_cast %26 : vector<1x1x3x32xf32> to vector<3x32xf32>
      %cst_34 = arith.constant dense<0.000000e+00> : vector<16x32xf32>
      %28 = tpu.matmul %25, %27, %cst_34 {dimension_numbers = #tpu.dot_dimension_numbers<[1], [0], [0], [1], [0, 0, 1, 1], [], []>} : vector<16x3xf32>, vector<3x32xf32>, vector<16x32xf32> -> vector<16x32xf32>
      %29 = arith.addf %24, %28 : vector<16x32xf32>
      %30 = vector.extract_strided_slice %20 {offsets = [2, 0], sizes = [16, 3], strides = [1, 1]} : vector<18x3xf32> to vector<16x3xf32>
      %c0_35 = arith.constant 0 : index
      %c2 = arith.constant 2 : index
      %c0_36 = arith.constant 0 : index
      %c0_37 = arith.constant 0 : index
      %31 = vector.load %arg2[%c0_35, %c2, %c0_36, %c0_37] : memref<3x3x3x32xf32, #tpu.memory_space<vmem>>, vector<1x1x3x32xf32>
      %32 = vector.shape_cast %31 : vector<1x1x3x32xf32> to vector<3x32xf32>
      %cst_38 = arith.constant dense<0.000000e+00> : vector<16x32xf32>
      %33 = tpu.matmul %30, %32, %cst_38 {dimension_numbers = #tpu.dot_dimension_numbers<[1], [0], [0], [1], [0, 0, 1, 1], [], []>} : vector<16x3xf32>, vector<3x32xf32>, vector<16x32xf32> -> vector<16x32xf32>
      %34 = arith.addf %29, %33 : vector<16x32xf32>
      %c1_i32_39 = arith.constant 1 : i32
      %35 = arith.addi %arg20, %c1_i32_39 : i32
      %c0_40 = arith.constant 0 : index
      %36 = arith.index_cast %35 : i32 to index
      %c0_41 = arith.constant 0 : index
      %c0_42 = arith.constant 0 : index
      %37 = vector.load %arg1[%c0_40, %36, %c0_41, %c0_42] : memref<1x18x18x3xf32, #tpu.memory_space<vmem>>, vector<1x1x18x3xf32>
      %38 = vector.shape_cast %37 : vector<1x1x18x3xf32> to vector<18x3xf32>
      %39 = vector.extract_strided_slice %38 {offsets = [0, 0], sizes = [16, 3], strides = [1, 1]} : vector<18x3xf32> to vector<16x3xf32>
      %c1_43 = arith.constant 1 : index
      %c0_44 = arith.constant 0 : index
      %c0_45 = arith.constant 0 : index
      %c0_46 = arith.constant 0 : index
      %40 = vector.load %arg2[%c1_43, %c0_44, %c0_45, %c0_46] : memref<3x3x3x32xf32, #tpu.memory_space<vmem>>, vector<1x1x3x32xf32>
      %41 = vector.shape_cast %40 : vector<1x1x3x32xf32> to vector<3x32xf32>
      %cst_47 = arith.constant dense<0.000000e+00> : vector<16x32xf32>
      %42 = tpu.matmul %39, %41, %cst_47 {dimension_numbers = #tpu.dot_dimension_numbers<[1], [0], [0], [1], [0, 0, 1, 1], [], []>} : vector<16x3xf32>, vector<3x32xf32>, vector<16x32xf32> -> vector<16x32xf32>
      %43 = arith.addf %34, %42 : vector<16x32xf32>
      %44 = vector.extract_strided_slice %38 {offsets = [1, 0], sizes = [16, 3], strides = [1, 1]} : vector<18x3xf32> to vector<16x3xf32>
      %c1_48 = arith.constant 1 : index
      %c1_49 = arith.constant 1 : index
      %c0_50 = arith.constant 0 : index
      %c0_51 = arith.constant 0 : index
      %45 = vector.load %arg2[%c1_48, %c1_49, %c0_50, %c0_51] : memref<3x3x3x32xf32, #tpu.memory_space<vmem>>, vector<1x1x3x32xf32>
      %46 = vector.shape_cast %45 : vector<1x1x3x32xf32> to vector<3x32xf32>
      %cst_52 = arith.constant dense<0.000000e+00> : vector<16x32xf32>
      %47 = tpu.matmul %44, %46, %cst_52 {dimension_numbers = #tpu.dot_dimension_numbers<[1], [0], [0], [1], [0, 0, 1, 1], [], []>} : vector<16x3xf32>, vector<3x32xf32>, vector<16x32xf32> -> vector<16x32xf32>
      %48 = arith.addf %43, %47 : vector<16x32xf32>
      %49 = vector.extract_strided_slice %38 {offsets = [2, 0], sizes = [16, 3], strides = [1, 1]} : vector<18x3xf32> to vector<16x3xf32>
      %c1_53 = arith.constant 1 : index
      %c2_54 = arith.constant 2 : index
      %c0_55 = arith.constant 0 : index
      %c0_56 = arith.constant 0 : index
      %50 = vector.load %arg2[%c1_53, %c2_54, %c0_55, %c0_56] : memref<3x3x3x32xf32, #tpu.memory_space<vmem>>, vector<1x1x3x32xf32>
      %51 = vector.shape_cast %50 : vector<1x1x3x32xf32> to vector<3x32xf32>
      %cst_57 = arith.constant dense<0.000000e+00> : vector<16x32xf32>
      %52 = tpu.matmul %49, %51, %cst_57 {dimension_numbers = #tpu.dot_dimension_numbers<[1], [0], [0], [1], [0, 0, 1, 1], [], []>} : vector<16x3xf32>, vector<3x32xf32>, vector<16x32xf32> -> vector<16x32xf32>
      %53 = arith.addf %48, %52 : vector<16x32xf32>
      %c2_i32_58 = arith.constant 2 : i32
      %54 = arith.addi %arg20, %c2_i32_58 : i32
      %c0_59 = arith.constant 0 : index
      %55 = arith.index_cast %54 : i32 to index
      %c0_60 = arith.constant 0 : index
      %c0_61 = arith.constant 0 : index
      %56 = vector.load %arg1[%c0_59, %55, %c0_60, %c0_61] : memref<1x18x18x3xf32, #tpu.memory_space<vmem>>, vector<1x1x18x3xf32>
      %57 = vector.shape_cast %56 : vector<1x1x18x3xf32> to vector<18x3xf32>
      %58 = vector.extract_strided_slice %57 {offsets = [0, 0], sizes = [16, 3], strides = [1, 1]} : vector<18x3xf32> to vector<16x3xf32>
      %c2_62 = arith.constant 2 : index
      %c0_63 = arith.constant 0 : index
      %c0_64 = arith.constant 0 : index
      %c0_65 = arith.constant 0 : index
      %59 = vector.load %arg2[%c2_62, %c0_63, %c0_64, %c0_65] : memref<3x3x3x32xf32, #tpu.memory_space<vmem>>, vector<1x1x3x32xf32>
      %60 = vector.shape_cast %59 : vector<1x1x3x32xf32> to vector<3x32xf32>
      %cst_66 = arith.constant dense<0.000000e+00> : vector<16x32xf32>
      %61 = tpu.matmul %58, %60, %cst_66 {dimension_numbers = #tpu.dot_dimension_numbers<[1], [0], [0], [1], [0, 0, 1, 1], [], []>} : vector<16x3xf32>, vector<3x32xf32>, vector<16x32xf32> -> vector<16x32xf32>
      %62 = arith.addf %53, %61 : vector<16x32xf32>
      %63 = vector.extract_strided_slice %57 {offsets = [1, 0], sizes = [16, 3], strides = [1, 1]} : vector<18x3xf32> to vector<16x3xf32>
      %c2_67 = arith.constant 2 : index
      %c1_68 = arith.constant 1 : index
      %c0_69 = arith.constant 0 : index
      %c0_70 = arith.constant 0 : index
      %64 = vector.load %arg2[%c2_67, %c1_68, %c0_69, %c0_70] : memref<3x3x3x32xf32, #tpu.memory_space<vmem>>, vector<1x1x3x32xf32>
      %65 = vector.shape_cast %64 : vector<1x1x3x32xf32> to vector<3x32xf32>
      %cst_71 = arith.constant dense<0.000000e+00> : vector<16x32xf32>
      %66 = tpu.matmul %63, %65, %cst_71 {dimension_numbers = #tpu.dot_dimension_numbers<[1], [0], [0], [1], [0, 0, 1, 1], [], []>} : vector<16x3xf32>, vector<3x32xf32>, vector<16x32xf32> -> vector<16x32xf32>
      %67 = arith.addf %62, %66 : vector<16x32xf32>
      %68 = vector.extract_strided_slice %57 {offsets = [2, 0], sizes = [16, 3], strides = [1, 1]} : vector<18x3xf32> to vector<16x3xf32>
      %c2_72 = arith.constant 2 : index
      %c2_73 = arith.constant 2 : index
      %c0_74 = arith.constant 0 : index
      %c0_75 = arith.constant 0 : index
      %69 = vector.load %arg2[%c2_72, %c2_73, %c0_74, %c0_75] : memref<3x3x3x32xf32, #tpu.memory_space<vmem>>, vector<1x1x3x32xf32>
      %70 = vector.shape_cast %69 : vector<1x1x3x32xf32> to vector<3x32xf32>
      %cst_76 = arith.constant dense<0.000000e+00> : vector<16x32xf32>
      %71 = tpu.matmul %68, %70, %cst_76 {dimension_numbers = #tpu.dot_dimension_numbers<[1], [0], [0], [1], [0, 0, 1, 1], [], []>} : vector<16x3xf32>, vector<3x32xf32>, vector<16x32xf32> -> vector<16x32xf32>
      %72 = arith.addf %67, %71 : vector<16x32xf32>
      %c0_77 = arith.constant 0 : index
      %c0_78 = arith.constant 0 : index
      %73 = vector.load %arg3[%c0_77, %c0_78] : memref<1x32xf32, #tpu.memory_space<vmem>>, vector<1x32xf32>
      %74 = vector.broadcast %73 : vector<1x32xf32> to vector<16x32xf32>
      %75 = arith.addf %72, %74 : vector<16x32xf32>
      %cst_79 = arith.constant 0.000000e+00 : f32
      %76 = vector.broadcast %cst_79 : f32 to vector<16x32xf32>
      %77 = arith.maximumf %75, %76 : vector<16x32xf32>
      %c0_80 = arith.constant 0 : index
      %c0_81 = arith.constant 0 : index
      %78 = vector.load %arg4[%c0_80, %c0_81] : memref<32x32xf32, #tpu.memory_space<vmem>>, vector<32x32xf32>
      %cst_82 = arith.constant dense<0.000000e+00> : vector<16x32xf32>
      %79 = tpu.matmul %77, %78, %cst_82 {dimension_numbers = #tpu.dot_dimension_numbers<[1], [0], [0], [1], [0, 0, 1, 1], [], []>} : vector<16x32xf32>, vector<32x32xf32>, vector<16x32xf32> -> vector<16x32xf32>
      %c0_83 = arith.constant 0 : index
      %c0_84 = arith.constant 0 : index
      %80 = vector.load %arg5[%c0_83, %c0_84] : memref<1x32xf32, #tpu.memory_space<vmem>>, vector<1x32xf32>
      %81 = vector.broadcast %80 : vector<1x32xf32> to vector<16x32xf32>
      %82 = arith.addf %79, %81 : vector<16x32xf32>
      %c1_i32_85 = arith.constant 1 : i32
      %83 = arith.addi %arg20, %c1_i32_85 : i32
      %84 = arith.index_cast %83 : i32 to index
      %c1_86 = arith.constant 1 : index
      %c0_87 = arith.constant 0 : index
      %85 = vector.load %arg17[%84, %c1_86, %c0_87] : memref<18x18x32xf32, #tpu.memory_space<vmem>>, vector<1x16x32xf32>
      %86 = vector.shape_cast %85 : vector<1x16x32xf32> to vector<16x32xf32>
      %87 = vector.shape_cast %82 : vector<16x32xf32> to vector<1x16x32xf32>
      tpu.vector_store %arg17[%84, %c1_86, %c0_87], %87 {strides = array<i32>} : memref<18x18x32xf32, #tpu.memory_space<vmem>>, vector<1x16x32xf32>,
    }
    %c16_i32_10 = arith.constant 16 : i32
    %7 = tpu.iota {dimensions = array<i32: 0>} : vector<8x16xi32>
    %8 = tpu.iota {dimensions = array<i32: 1>} : vector<8x16xi32>
    %c2_i32 = arith.constant 2 : i32
    %9 = vector.broadcast %c2_i32 : i32 to vector<8x16xi32>
    %10 = arith.muli %9, %7 : vector<8x16xi32>
    %11 = arith.cmpi eq, %8, %10 : vector<8x16xi32>
    %12 = arith.extui %11 : vector<8x16xi1> to vector<8x16xi32>
    %13 = arith.sitofp %12 : vector<8x16xi32> to vector<8x16xf32>
    %c0_i32_11 = arith.constant 0 : i32
    %c8_i32 = arith.constant 8 : i32
    %14 = arith.addi %c0_i32_11, %c8_i32 : i32
    %c1_i32_12 = arith.constant 1 : i32
    scf.for %arg20 = %c0_i32_11 to %14 step %c1_i32_12  : i32 {
      %c2_i32_22 = arith.constant 2 : i32
      %17 = arith.muli %c2_i32_22, %arg20 : i32
      %c0_i32_23 = arith.constant 0 : i32
      %18 = arith.addi %17, %c0_i32_23 : i32
      %19 = arith.index_cast %18 : i32 to index
      %c0_24 = arith.constant 0 : index
      %c0_25 = arith.constant 0 : index
      %20 = vector.load %arg17[%19, %c0_24, %c0_25] : memref<18x18x32xf32, #tpu.memory_space<vmem>>, vector<1x18x32xf32>
      %21 = vector.shape_cast %20 : vector<1x18x32xf32> to vector<18x32xf32>
      %22 = vector.extract_strided_slice %21 {offsets = [0, 0], sizes = [16, 32], strides = [1, 1]} : vector<18x32xf32> to vector<16x32xf32>
      %c0_26 = arith.constant 0 : index
      %c0_27 = arith.constant 0 : index
      %c0_28 = arith.constant 0 : index
      %c0_29 = arith.constant 0 : index
      %23 = vector.load %arg6[%c0_26, %c0_27, %c0_28, %c0_29] : memref<3x3x32x32xf32, #tpu.memory_space<vmem>>, vector<1x1x32x32xf32>
      %24 = vector.shape_cast %23 : vector<1x1x32x32xf32> to vector<32x32xf32>
      %cst_30 = arith.constant dense<0.000000e+00> : vector<16x32xf32>
      %25 = tpu.matmul %22, %24, %cst_30 {dimension_numbers = #tpu.dot_dimension_numbers<[1], [0], [0], [1], [0, 0, 1, 1], [], []>} : vector<16x32xf32>, vector<32x32xf32>, vector<16x32xf32> -> vector<16x32xf32>
      %26 = vector.extract_strided_slice %21 {offsets = [1, 0], sizes = [16, 32], strides = [1, 1]} : vector<18x32xf32> to vector<16x32xf32>
      %c0_31 = arith.constant 0 : index
      %c1 = arith.constant 1 : index
      %c0_32 = arith.constant 0 : index
      %c0_33 = arith.constant 0 : index
      %27 = vector.load %arg6[%c0_31, %c1, %c0_32, %c0_33] : memref<3x3x32x32xf32, #tpu.memory_space<vmem>>, vector<1x1x32x32xf32>
      %28 = vector.shape_cast %27 : vector<1x1x32x32xf32> to vector<32x32xf32>
      %cst_34 = arith.constant dense<0.000000e+00> : vector<16x32xf32>
      %29 = tpu.matmul %26, %28, %cst_34 {dimension_numbers = #tpu.dot_dimension_numbers<[1], [0], [0], [1], [0, 0, 1, 1], [], []>} : vector<16x32xf32>, vector<32x32xf32>, vector<16x32xf32> -> vector<16x32xf32>
      %30 = arith.addf %25, %29 : vector<16x32xf32>
      %31 = vector.extract_strided_slice %21 {offsets = [2, 0], sizes = [16, 32], strides = [1, 1]} : vector<18x32xf32> to vector<16x32xf32>
      %c0_35 = arith.constant 0 : index
      %c2 = arith.constant 2 : index
      %c0_36 = arith.constant 0 : index
      %c0_37 = arith.constant 0 : index
      %32 = vector.load %arg6[%c0_35, %c2, %c0_36, %c0_37] : memref<3x3x32x32xf32, #tpu.memory_space<vmem>>, vector<1x1x32x32xf32>
      %33 = vector.shape_cast %32 : vector<1x1x32x32xf32> to vector<32x32xf32>
      %cst_38 = arith.constant dense<0.000000e+00> : vector<16x32xf32>
      %34 = tpu.matmul %31, %33, %cst_38 {dimension_numbers = #tpu.dot_dimension_numbers<[1], [0], [0], [1], [0, 0, 1, 1], [], []>} : vector<16x32xf32>, vector<32x32xf32>, vector<16x32xf32> -> vector<16x32xf32>
      %35 = arith.addf %30, %34 : vector<16x32xf32>
      %c1_i32_39 = arith.constant 1 : i32
      %36 = arith.addi %17, %c1_i32_39 : i32
      %37 = arith.index_cast %36 : i32 to index
      %c0_40 = arith.constant 0 : index
      %c0_41 = arith.constant 0 : index
      %38 = vector.load %arg17[%37, %c0_40, %c0_41] : memref<18x18x32xf32, #tpu.memory_space<vmem>>, vector<1x18x32xf32>
      %39 = vector.shape_cast %38 : vector<1x18x32xf32> to vector<18x32xf32>
      %40 = vector.extract_strided_slice %39 {offsets = [0, 0], sizes = [16, 32], strides = [1, 1]} : vector<18x32xf32> to vector<16x32xf32>
      %c1_42 = arith.constant 1 : index
      %c0_43 = arith.constant 0 : index
      %c0_44 = arith.constant 0 : index
      %c0_45 = arith.constant 0 : index
      %41 = vector.load %arg6[%c1_42, %c0_43, %c0_44, %c0_45] : memref<3x3x32x32xf32, #tpu.memory_space<vmem>>, vector<1x1x32x32xf32>
      %42 = vector.shape_cast %41 : vector<1x1x32x32xf32> to vector<32x32xf32>
      %cst_46 = arith.constant dense<0.000000e+00> : vector<16x32xf32>
      %43 = tpu.matmul %40, %42, %cst_46 {dimension_numbers = #tpu.dot_dimension_numbers<[1], [0], [0], [1], [0, 0, 1, 1], [], []>} : vector<16x32xf32>, vector<32x32xf32>, vector<16x32xf32> -> vector<16x32xf32>
      %44 = arith.addf %35, %43 : vector<16x32xf32>
      %45 = vector.extract_strided_slice %39 {offsets = [1, 0], sizes = [16, 32], strides = [1, 1]} : vector<18x32xf32> to vector<16x32xf32>
      %c1_47 = arith.constant 1 : index
      %c1_48 = arith.constant 1 : index
      %c0_49 = arith.constant 0 : index
      %c0_50 = arith.constant 0 : index
      %46 = vector.load %arg6[%c1_47, %c1_48, %c0_49, %c0_50] : memref<3x3x32x32xf32, #tpu.memory_space<vmem>>, vector<1x1x32x32xf32>
      %47 = vector.shape_cast %46 : vector<1x1x32x32xf32> to vector<32x32xf32>
      %cst_51 = arith.constant dense<0.000000e+00> : vector<16x32xf32>
      %48 = tpu.matmul %45, %47, %cst_51 {dimension_numbers = #tpu.dot_dimension_numbers<[1], [0], [0], [1], [0, 0, 1, 1], [], []>} : vector<16x32xf32>, vector<32x32xf32>, vector<16x32xf32> -> vector<16x32xf32>
      %49 = arith.addf %44, %48 : vector<16x32xf32>
      %50 = vector.extract_strided_slice %39 {offsets = [2, 0], sizes = [16, 32], strides = [1, 1]} : vector<18x32xf32> to vector<16x32xf32>
      %c1_52 = arith.constant 1 : index
      %c2_53 = arith.constant 2 : index
      %c0_54 = arith.constant 0 : index
      %c0_55 = arith.constant 0 : index
      %51 = vector.load %arg6[%c1_52, %c2_53, %c0_54, %c0_55] : memref<3x3x32x32xf32, #tpu.memory_space<vmem>>, vector<1x1x32x32xf32>
      %52 = vector.shape_cast %51 : vector<1x1x32x32xf32> to vector<32x32xf32>
      %cst_56 = arith.constant dense<0.000000e+00> : vector<16x32xf32>
      %53 = tpu.matmul %50, %52, %cst_56 {dimension_numbers = #tpu.dot_dimension_numbers<[1], [0], [0], [1], [0, 0, 1, 1], [], []>} : vector<16x32xf32>, vector<32x32xf32>, vector<16x32xf32> -> vector<16x32xf32>
      %54 = arith.addf %49, %53 : vector<16x32xf32>
      %c2_i32_57 = arith.constant 2 : i32
      %55 = arith.addi %17, %c2_i32_57 : i32
      %56 = arith.index_cast %55 : i32 to index
      %c0_58 = arith.constant 0 : index
      %c0_59 = arith.constant 0 : index
      %57 = vector.load %arg17[%56, %c0_58, %c0_59] : memref<18x18x32xf32, #tpu.memory_space<vmem>>, vector<1x18x32xf32>
      %58 = vector.shape_cast %57 : vector<1x18x32xf32> to vector<18x32xf32>
      %59 = vector.extract_strided_slice %58 {offsets = [0, 0], sizes = [16, 32], strides = [1, 1]} : vector<18x32xf32> to vector<16x32xf32>
      %c2_60 = arith.constant 2 : index
      %c0_61 = arith.constant 0 : index
      %c0_62 = arith.constant 0 : index
      %c0_63 = arith.constant 0 : index
      %60 = vector.load %arg6[%c2_60, %c0_61, %c0_62, %c0_63] : memref<3x3x32x32xf32, #tpu.memory_space<vmem>>, vector<1x1x32x32xf32>
      %61 = vector.shape_cast %60 : vector<1x1x32x32xf32> to vector<32x32xf32>
      %cst_64 = arith.constant dense<0.000000e+00> : vector<16x32xf32>
      %62 = tpu.matmul %59, %61, %cst_64 {dimension_numbers = #tpu.dot_dimension_numbers<[1], [0], [0], [1], [0, 0, 1, 1], [], []>} : vector<16x32xf32>, vector<32x32xf32>, vector<16x32xf32> -> vector<16x32xf32>
      %63 = arith.addf %54, %62 : vector<16x32xf32>
      %64 = vector.extract_strided_slice %58 {offsets = [1, 0], sizes = [16, 32], strides = [1, 1]} : vector<18x32xf32> to vector<16x32xf32>
      %c2_65 = arith.constant 2 : index
      %c1_66 = arith.constant 1 : index
      %c0_67 = arith.constant 0 : index
      %c0_68 = arith.constant 0 : index
      %65 = vector.load %arg6[%c2_65, %c1_66, %c0_67, %c0_68] : memref<3x3x32x32xf32, #tpu.memory_space<vmem>>, vector<1x1x32x32xf32>
      %66 = vector.shape_cast %65 : vector<1x1x32x32xf32> to vector<32x32xf32>
      %cst_69 = arith.constant dense<0.000000e+00> : vector<16x32xf32>
      %67 = tpu.matmul %64, %66, %cst_69 {dimension_numbers = #tpu.dot_dimension_numbers<[1], [0], [0], [1], [0, 0, 1, 1], [], []>} : vector<16x32xf32>, vector<32x32xf32>, vector<16x32xf32> -> vector<16x32xf32>
      %68 = arith.addf %63, %67 : vector<16x32xf32>
      %69 = vector.extract_strided_slice %58 {offsets = [2, 0], sizes = [16, 32], strides = [1, 1]} : vector<18x32xf32> to vector<16x32xf32>
      %c2_70 = arith.constant 2 : index
      %c2_71 = arith.constant 2 : index
      %c0_72 = arith.constant 0 : index
      %c0_73 = arith.constant 0 : index
      %70 = vector.load %arg6[%c2_70, %c2_71, %c0_72, %c0_73] : memref<3x3x32x32xf32, #tpu.memory_space<vmem>>, vector<1x1x32x32xf32>
      %71 = vector.shape_cast %70 : vector<1x1x32x32xf32> to vector<32x32xf32>
      %cst_74 = arith.constant dense<0.000000e+00> : vector<16x32xf32>
      %72 = tpu.matmul %69, %71, %cst_74 {dimension_numbers = #tpu.dot_dimension_numbers<[1], [0], [0], [1], [0, 0, 1, 1], [], []>} : vector<16x32xf32>, vector<32x32xf32>, vector<16x32xf32> -> vector<16x32xf32>
      %73 = arith.addf %68, %72 : vector<16x32xf32>
      %cst_75 = arith.constant dense<0.000000e+00> : vector<8x32xf32>
      %74 = tpu.matmul %13, %73, %cst_75 {dimension_numbers = #tpu.dot_dimension_numbers<[1], [0], [0], [1], [0, 0, 1, 1], [], []>} : vector<8x16xf32>, vector<16x32xf32>, vector<8x32xf32> -> vector<8x32xf32>
      %c0_76 = arith.constant 0 : index
      %c0_77 = arith.constant 0 : index
      %75 = vector.load %arg7[%c0_76, %c0_77] : memref<1x32xf32, #tpu.memory_space<vmem>>, vector<1x32xf32>
      %76 = vector.broadcast %75 : vector<1x32xf32> to vector<8x32xf32>
      %77 = arith.addf %74, %76 : vector<8x32xf32>
      %c1_i32_78 = arith.constant 1 : i32
      %78 = arith.addi %arg20, %c1_i32_78 : i32
      %79 = arith.index_cast %78 : i32 to index
      %c1_79 = arith.constant 1 : index
      %c0_80 = arith.constant 0 : index
      %80 = vector.load %arg18[%79, %c1_79, %c0_80] : memref<10x10x32xf32, #tpu.memory_space<vmem>>, vector<1x8x32xf32>
      %81 = vector.shape_cast %80 : vector<1x8x32xf32> to vector<8x32xf32>
      %82 = vector.shape_cast %77 : vector<8x32xf32> to vector<1x8x32xf32>
      tpu.vector_store %arg18[%79, %c1_79, %c0_80], %82 {strides = array<i32>} : memref<10x10x32xf32, #tpu.memory_space<vmem>>, vector<1x8x32xf32>,
    }
    %c8_i32_13 = arith.constant 8 : i32
    %c0_i32_14 = arith.constant 0 : i32
    %c8_i32_15 = arith.constant 8 : i32
    %15 = arith.addi %c0_i32_14, %c8_i32_15 : i32
    %c1_i32_16 = arith.constant 1 : i32
    scf.for %arg20 = %c0_i32_14 to %15 step %c1_i32_16  : i32 {
      %c0_i32_22 = arith.constant 0 : i32
      %17 = arith.addi %arg20, %c0_i32_22 : i32
      %18 = arith.index_cast %17 : i32 to index
      %c0_23 = arith.constant 0 : index
      %c0_24 = arith.constant 0 : index
      %19 = vector.load %arg18[%18, %c0_23, %c0_24] : memref<10x10x32xf32, #tpu.memory_space<vmem>>, vector<1x10x32xf32>
      %20 = vector.shape_cast %19 : vector<1x10x32xf32> to vector<10x32xf32>
      %21 = vector.extract_strided_slice %20 {offsets = [0, 0], sizes = [8, 32], strides = [1, 1]} : vector<10x32xf32> to vector<8x32xf32>
      %c0_25 = arith.constant 0 : index
      %c0_26 = arith.constant 0 : index
      %c0_27 = arith.constant 0 : index
      %c0_28 = arith.constant 0 : index
      %22 = vector.load %arg8[%c0_25, %c0_26, %c0_27, %c0_28] : memref<3x3x32x32xf32, #tpu.memory_space<vmem>>, vector<1x1x32x32xf32>
      %23 = vector.shape_cast %22 : vector<1x1x32x32xf32> to vector<32x32xf32>
      %cst_29 = arith.constant dense<0.000000e+00> : vector<8x32xf32>
      %24 = tpu.matmul %21, %23, %cst_29 {dimension_numbers = #tpu.dot_dimension_numbers<[1], [0], [0], [1], [0, 0, 1, 1], [], []>} : vector<8x32xf32>, vector<32x32xf32>, vector<8x32xf32> -> vector<8x32xf32>
      %25 = vector.extract_strided_slice %20 {offsets = [1, 0], sizes = [8, 32], strides = [1, 1]} : vector<10x32xf32> to vector<8x32xf32>
      %c0_30 = arith.constant 0 : index
      %c1 = arith.constant 1 : index
      %c0_31 = arith.constant 0 : index
      %c0_32 = arith.constant 0 : index
      %26 = vector.load %arg8[%c0_30, %c1, %c0_31, %c0_32] : memref<3x3x32x32xf32, #tpu.memory_space<vmem>>, vector<1x1x32x32xf32>
      %27 = vector.shape_cast %26 : vector<1x1x32x32xf32> to vector<32x32xf32>
      %cst_33 = arith.constant dense<0.000000e+00> : vector<8x32xf32>
      %28 = tpu.matmul %25, %27, %cst_33 {dimension_numbers = #tpu.dot_dimension_numbers<[1], [0], [0], [1], [0, 0, 1, 1], [], []>} : vector<8x32xf32>, vector<32x32xf32>, vector<8x32xf32> -> vector<8x32xf32>
      %29 = arith.addf %24, %28 : vector<8x32xf32>
      %30 = vector.extract_strided_slice %20 {offsets = [2, 0], sizes = [8, 32], strides = [1, 1]} : vector<10x32xf32> to vector<8x32xf32>
      %c0_34 = arith.constant 0 : index
      %c2 = arith.constant 2 : index
      %c0_35 = arith.constant 0 : index
      %c0_36 = arith.constant 0 : index
      %31 = vector.load %arg8[%c0_34, %c2, %c0_35, %c0_36] : memref<3x3x32x32xf32, #tpu.memory_space<vmem>>, vector<1x1x32x32xf32>
      %32 = vector.shape_cast %31 : vector<1x1x32x32xf32> to vector<32x32xf32>
      %cst_37 = arith.constant dense<0.000000e+00> : vector<8x32xf32>
      %33 = tpu.matmul %30, %32, %cst_37 {dimension_numbers = #tpu.dot_dimension_numbers<[1], [0], [0], [1], [0, 0, 1, 1], [], []>} : vector<8x32xf32>, vector<32x32xf32>, vector<8x32xf32> -> vector<8x32xf32>
      %34 = arith.addf %29, %33 : vector<8x32xf32>
      %c1_i32_38 = arith.constant 1 : i32
      %35 = arith.addi %arg20, %c1_i32_38 : i32
      %36 = arith.index_cast %35 : i32 to index
      %c0_39 = arith.constant 0 : index
      %c0_40 = arith.constant 0 : index
      %37 = vector.load %arg18[%36, %c0_39, %c0_40] : memref<10x10x32xf32, #tpu.memory_space<vmem>>, vector<1x10x32xf32>
      %38 = vector.shape_cast %37 : vector<1x10x32xf32> to vector<10x32xf32>
      %39 = vector.extract_strided_slice %38 {offsets = [0, 0], sizes = [8, 32], strides = [1, 1]} : vector<10x32xf32> to vector<8x32xf32>
      %c1_41 = arith.constant 1 : index
      %c0_42 = arith.constant 0 : index
      %c0_43 = arith.constant 0 : index
      %c0_44 = arith.constant 0 : index
      %40 = vector.load %arg8[%c1_41, %c0_42, %c0_43, %c0_44] : memref<3x3x32x32xf32, #tpu.memory_space<vmem>>, vector<1x1x32x32xf32>
      %41 = vector.shape_cast %40 : vector<1x1x32x32xf32> to vector<32x32xf32>
      %cst_45 = arith.constant dense<0.000000e+00> : vector<8x32xf32>
      %42 = tpu.matmul %39, %41, %cst_45 {dimension_numbers = #tpu.dot_dimension_numbers<[1], [0], [0], [1], [0, 0, 1, 1], [], []>} : vector<8x32xf32>, vector<32x32xf32>, vector<8x32xf32> -> vector<8x32xf32>
      %43 = arith.addf %34, %42 : vector<8x32xf32>
      %44 = vector.extract_strided_slice %38 {offsets = [1, 0], sizes = [8, 32], strides = [1, 1]} : vector<10x32xf32> to vector<8x32xf32>
      %c1_46 = arith.constant 1 : index
      %c1_47 = arith.constant 1 : index
      %c0_48 = arith.constant 0 : index
      %c0_49 = arith.constant 0 : index
      %45 = vector.load %arg8[%c1_46, %c1_47, %c0_48, %c0_49] : memref<3x3x32x32xf32, #tpu.memory_space<vmem>>, vector<1x1x32x32xf32>
      %46 = vector.shape_cast %45 : vector<1x1x32x32xf32> to vector<32x32xf32>
      %cst_50 = arith.constant dense<0.000000e+00> : vector<8x32xf32>
      %47 = tpu.matmul %44, %46, %cst_50 {dimension_numbers = #tpu.dot_dimension_numbers<[1], [0], [0], [1], [0, 0, 1, 1], [], []>} : vector<8x32xf32>, vector<32x32xf32>, vector<8x32xf32> -> vector<8x32xf32>
      %48 = arith.addf %43, %47 : vector<8x32xf32>
      %49 = vector.extract_strided_slice %38 {offsets = [2, 0], sizes = [8, 32], strides = [1, 1]} : vector<10x32xf32> to vector<8x32xf32>
      %c1_51 = arith.constant 1 : index
      %c2_52 = arith.constant 2 : index
      %c0_53 = arith.constant 0 : index
      %c0_54 = arith.constant 0 : index
      %50 = vector.load %arg8[%c1_51, %c2_52, %c0_53, %c0_54] : memref<3x3x32x32xf32, #tpu.memory_space<vmem>>, vector<1x1x32x32xf32>
      %51 = vector.shape_cast %50 : vector<1x1x32x32xf32> to vector<32x32xf32>
      %cst_55 = arith.constant dense<0.000000e+00> : vector<8x32xf32>
      %52 = tpu.matmul %49, %51, %cst_55 {dimension_numbers = #tpu.dot_dimension_numbers<[1], [0], [0], [1], [0, 0, 1, 1], [], []>} : vector<8x32xf32>, vector<32x32xf32>, vector<8x32xf32> -> vector<8x32xf32>
      %53 = arith.addf %48, %52 : vector<8x32xf32>
      %c2_i32_56 = arith.constant 2 : i32
      %54 = arith.addi %arg20, %c2_i32_56 : i32
      %55 = arith.index_cast %54 : i32 to index
      %c0_57 = arith.constant 0 : index
      %c0_58 = arith.constant 0 : index
      %56 = vector.load %arg18[%55, %c0_57, %c0_58] : memref<10x10x32xf32, #tpu.memory_space<vmem>>, vector<1x10x32xf32>
      %57 = vector.shape_cast %56 : vector<1x10x32xf32> to vector<10x32xf32>
      %58 = vector.extract_strided_slice %57 {offsets = [0, 0], sizes = [8, 32], strides = [1, 1]} : vector<10x32xf32> to vector<8x32xf32>
      %c2_59 = arith.constant 2 : index
      %c0_60 = arith.constant 0 : index
      %c0_61 = arith.constant 0 : index
      %c0_62 = arith.constant 0 : index
      %59 = vector.load %arg8[%c2_59, %c0_60, %c0_61, %c0_62] : memref<3x3x32x32xf32, #tpu.memory_space<vmem>>, vector<1x1x32x32xf32>
      %60 = vector.shape_cast %59 : vector<1x1x32x32xf32> to vector<32x32xf32>
      %cst_63 = arith.constant dense<0.000000e+00> : vector<8x32xf32>
      %61 = tpu.matmul %58, %60, %cst_63 {dimension_numbers = #tpu.dot_dimension_numbers<[1], [0], [0], [1], [0, 0, 1, 1], [], []>} : vector<8x32xf32>, vector<32x32xf32>, vector<8x32xf32> -> vector<8x32xf32>
      %62 = arith.addf %53, %61 : vector<8x32xf32>
      %63 = vector.extract_strided_slice %57 {offsets = [1, 0], sizes = [8, 32], strides = [1, 1]} : vector<10x32xf32> to vector<8x32xf32>
      %c2_64 = arith.constant 2 : index
      %c1_65 = arith.constant 1 : index
      %c0_66 = arith.constant 0 : index
      %c0_67 = arith.constant 0 : index
      %64 = vector.load %arg8[%c2_64, %c1_65, %c0_66, %c0_67] : memref<3x3x32x32xf32, #tpu.memory_space<vmem>>, vector<1x1x32x32xf32>
      %65 = vector.shape_cast %64 : vector<1x1x32x32xf32> to vector<32x32xf32>
      %cst_68 = arith.constant dense<0.000000e+00> : vector<8x32xf32>
      %66 = tpu.matmul %63, %65, %cst_68 {dimension_numbers = #tpu.dot_dimension_numbers<[1], [0], [0], [1], [0, 0, 1, 1], [], []>} : vector<8x32xf32>, vector<32x32xf32>, vector<8x32xf32> -> vector<8x32xf32>
      %67 = arith.addf %62, %66 : vector<8x32xf32>
      %68 = vector.extract_strided_slice %57 {offsets = [2, 0], sizes = [8, 32], strides = [1, 1]} : vector<10x32xf32> to vector<8x32xf32>
      %c2_69 = arith.constant 2 : index
      %c2_70 = arith.constant 2 : index
      %c0_71 = arith.constant 0 : index
      %c0_72 = arith.constant 0 : index
      %69 = vector.load %arg8[%c2_69, %c2_70, %c0_71, %c0_72] : memref<3x3x32x32xf32, #tpu.memory_space<vmem>>, vector<1x1x32x32xf32>
      %70 = vector.shape_cast %69 : vector<1x1x32x32xf32> to vector<32x32xf32>
      %cst_73 = arith.constant dense<0.000000e+00> : vector<8x32xf32>
      %71 = tpu.matmul %68, %70, %cst_73 {dimension_numbers = #tpu.dot_dimension_numbers<[1], [0], [0], [1], [0, 0, 1, 1], [], []>} : vector<8x32xf32>, vector<32x32xf32>, vector<8x32xf32> -> vector<8x32xf32>
      %72 = arith.addf %67, %71 : vector<8x32xf32>
      %c0_74 = arith.constant 0 : index
      %c0_75 = arith.constant 0 : index
      %73 = vector.load %arg9[%c0_74, %c0_75] : memref<1x32xf32, #tpu.memory_space<vmem>>, vector<1x32xf32>
      %74 = vector.broadcast %73 : vector<1x32xf32> to vector<8x32xf32>
      %75 = arith.addf %72, %74 : vector<8x32xf32>
      %cst_76 = arith.constant 0.000000e+00 : f32
      %76 = vector.broadcast %cst_76 : f32 to vector<8x32xf32>
      %77 = arith.maximumf %75, %76 : vector<8x32xf32>
      %c0_77 = arith.constant 0 : index
      %c0_78 = arith.constant 0 : index
      %78 = vector.load %arg10[%c0_77, %c0_78] : memref<32x32xf32, #tpu.memory_space<vmem>>, vector<32x32xf32>
      %cst_79 = arith.constant dense<0.000000e+00> : vector<8x32xf32>
      %79 = tpu.matmul %77, %78, %cst_79 {dimension_numbers = #tpu.dot_dimension_numbers<[1], [0], [0], [1], [0, 0, 1, 1], [], []>} : vector<8x32xf32>, vector<32x32xf32>, vector<8x32xf32> -> vector<8x32xf32>
      %c0_80 = arith.constant 0 : index
      %c0_81 = arith.constant 0 : index
      %80 = vector.load %arg11[%c0_80, %c0_81] : memref<1x32xf32, #tpu.memory_space<vmem>>, vector<1x32xf32>
      %81 = vector.broadcast %80 : vector<1x32xf32> to vector<8x32xf32>
      %82 = arith.addf %79, %81 : vector<8x32xf32>
      %c1_i32_82 = arith.constant 1 : i32
      %83 = arith.addi %arg20, %c1_i32_82 : i32
      %84 = arith.index_cast %83 : i32 to index
      %c1_83 = arith.constant 1 : index
      %c0_84 = arith.constant 0 : index
      %85 = vector.load %arg19[%84, %c1_83, %c0_84] : memref<10x10x32xf32, #tpu.memory_space<vmem>>, vector<1x8x32xf32>
      %86 = vector.shape_cast %85 : vector<1x8x32xf32> to vector<8x32xf32>
      %87 = vector.shape_cast %82 : vector<8x32xf32> to vector<1x8x32xf32>
      tpu.vector_store %arg19[%84, %c1_83, %c0_84], %87 {strides = array<i32>} : memref<10x10x32xf32, #tpu.memory_space<vmem>>, vector<1x8x32xf32>,
    }
    %c8_i32_17 = arith.constant 8 : i32
    %c0_i32_18 = arith.constant 0 : i32
    %c8_i32_19 = arith.constant 8 : i32
    %16 = arith.addi %c0_i32_18, %c8_i32_19 : i32
    %c1_i32_20 = arith.constant 1 : i32
    scf.for %arg20 = %c0_i32_18 to %16 step %c1_i32_20  : i32 {
      %c0_i32_22 = arith.constant 0 : i32
      %17 = arith.addi %arg20, %c0_i32_22 : i32
      %18 = arith.index_cast %17 : i32 to index
      %c0_23 = arith.constant 0 : index
      %c0_24 = arith.constant 0 : index
      %19 = vector.load %arg19[%18, %c0_23, %c0_24] : memref<10x10x32xf32, #tpu.memory_space<vmem>>, vector<1x10x32xf32>
      %20 = vector.shape_cast %19 : vector<1x10x32xf32> to vector<10x32xf32>
      %21 = vector.extract_strided_slice %20 {offsets = [0, 0], sizes = [8, 32], strides = [1, 1]} : vector<10x32xf32> to vector<8x32xf32>
      %c0_25 = arith.constant 0 : index
      %c0_26 = arith.constant 0 : index
      %c0_27 = arith.constant 0 : index
      %c0_28 = arith.constant 0 : index
      %22 = vector.load %arg12[%c0_25, %c0_26, %c0_27, %c0_28] : memref<3x3x32x32xf32, #tpu.memory_space<vmem>>, vector<1x1x32x32xf32>
      %23 = vector.shape_cast %22 : vector<1x1x32x32xf32> to vector<32x32xf32>
      %cst_29 = arith.constant dense<0.000000e+00> : vector<8x32xf32>
      %24 = tpu.matmul %21, %23, %cst_29 {dimension_numbers = #tpu.dot_dimension_numbers<[1], [0], [0], [1], [0, 0, 1, 1], [], []>} : vector<8x32xf32>, vector<32x32xf32>, vector<8x32xf32> -> vector<8x32xf32>
      %25 = vector.extract_strided_slice %20 {offsets = [1, 0], sizes = [8, 32], strides = [1, 1]} : vector<10x32xf32> to vector<8x32xf32>
      %c0_30 = arith.constant 0 : index
      %c1 = arith.constant 1 : index
      %c0_31 = arith.constant 0 : index
      %c0_32 = arith.constant 0 : index
      %26 = vector.load %arg12[%c0_30, %c1, %c0_31, %c0_32] : memref<3x3x32x32xf32, #tpu.memory_space<vmem>>, vector<1x1x32x32xf32>
      %27 = vector.shape_cast %26 : vector<1x1x32x32xf32> to vector<32x32xf32>
      %cst_33 = arith.constant dense<0.000000e+00> : vector<8x32xf32>
      %28 = tpu.matmul %25, %27, %cst_33 {dimension_numbers = #tpu.dot_dimension_numbers<[1], [0], [0], [1], [0, 0, 1, 1], [], []>} : vector<8x32xf32>, vector<32x32xf32>, vector<8x32xf32> -> vector<8x32xf32>
      %29 = arith.addf %24, %28 : vector<8x32xf32>
      %30 = vector.extract_strided_slice %20 {offsets = [2, 0], sizes = [8, 32], strides = [1, 1]} : vector<10x32xf32> to vector<8x32xf32>
      %c0_34 = arith.constant 0 : index
      %c2 = arith.constant 2 : index
      %c0_35 = arith.constant 0 : index
      %c0_36 = arith.constant 0 : index
      %31 = vector.load %arg12[%c0_34, %c2, %c0_35, %c0_36] : memref<3x3x32x32xf32, #tpu.memory_space<vmem>>, vector<1x1x32x32xf32>
      %32 = vector.shape_cast %31 : vector<1x1x32x32xf32> to vector<32x32xf32>
      %cst_37 = arith.constant dense<0.000000e+00> : vector<8x32xf32>
      %33 = tpu.matmul %30, %32, %cst_37 {dimension_numbers = #tpu.dot_dimension_numbers<[1], [0], [0], [1], [0, 0, 1, 1], [], []>} : vector<8x32xf32>, vector<32x32xf32>, vector<8x32xf32> -> vector<8x32xf32>
      %34 = arith.addf %29, %33 : vector<8x32xf32>
      %c1_i32_38 = arith.constant 1 : i32
      %35 = arith.addi %arg20, %c1_i32_38 : i32
      %36 = arith.index_cast %35 : i32 to index
      %c0_39 = arith.constant 0 : index
      %c0_40 = arith.constant 0 : index
      %37 = vector.load %arg19[%36, %c0_39, %c0_40] : memref<10x10x32xf32, #tpu.memory_space<vmem>>, vector<1x10x32xf32>
      %38 = vector.shape_cast %37 : vector<1x10x32xf32> to vector<10x32xf32>
      %39 = vector.extract_strided_slice %38 {offsets = [0, 0], sizes = [8, 32], strides = [1, 1]} : vector<10x32xf32> to vector<8x32xf32>
      %c1_41 = arith.constant 1 : index
      %c0_42 = arith.constant 0 : index
      %c0_43 = arith.constant 0 : index
      %c0_44 = arith.constant 0 : index
      %40 = vector.load %arg12[%c1_41, %c0_42, %c0_43, %c0_44] : memref<3x3x32x32xf32, #tpu.memory_space<vmem>>, vector<1x1x32x32xf32>
      %41 = vector.shape_cast %40 : vector<1x1x32x32xf32> to vector<32x32xf32>
      %cst_45 = arith.constant dense<0.000000e+00> : vector<8x32xf32>
      %42 = tpu.matmul %39, %41, %cst_45 {dimension_numbers = #tpu.dot_dimension_numbers<[1], [0], [0], [1], [0, 0, 1, 1], [], []>} : vector<8x32xf32>, vector<32x32xf32>, vector<8x32xf32> -> vector<8x32xf32>
      %43 = arith.addf %34, %42 : vector<8x32xf32>
      %44 = vector.extract_strided_slice %38 {offsets = [1, 0], sizes = [8, 32], strides = [1, 1]} : vector<10x32xf32> to vector<8x32xf32>
      %c1_46 = arith.constant 1 : index
      %c1_47 = arith.constant 1 : index
      %c0_48 = arith.constant 0 : index
      %c0_49 = arith.constant 0 : index
      %45 = vector.load %arg12[%c1_46, %c1_47, %c0_48, %c0_49] : memref<3x3x32x32xf32, #tpu.memory_space<vmem>>, vector<1x1x32x32xf32>
      %46 = vector.shape_cast %45 : vector<1x1x32x32xf32> to vector<32x32xf32>
      %cst_50 = arith.constant dense<0.000000e+00> : vector<8x32xf32>
      %47 = tpu.matmul %44, %46, %cst_50 {dimension_numbers = #tpu.dot_dimension_numbers<[1], [0], [0], [1], [0, 0, 1, 1], [], []>} : vector<8x32xf32>, vector<32x32xf32>, vector<8x32xf32> -> vector<8x32xf32>
      %48 = arith.addf %43, %47 : vector<8x32xf32>
      %49 = vector.extract_strided_slice %38 {offsets = [2, 0], sizes = [8, 32], strides = [1, 1]} : vector<10x32xf32> to vector<8x32xf32>
      %c1_51 = arith.constant 1 : index
      %c2_52 = arith.constant 2 : index
      %c0_53 = arith.constant 0 : index
      %c0_54 = arith.constant 0 : index
      %50 = vector.load %arg12[%c1_51, %c2_52, %c0_53, %c0_54] : memref<3x3x32x32xf32, #tpu.memory_space<vmem>>, vector<1x1x32x32xf32>
      %51 = vector.shape_cast %50 : vector<1x1x32x32xf32> to vector<32x32xf32>
      %cst_55 = arith.constant dense<0.000000e+00> : vector<8x32xf32>
      %52 = tpu.matmul %49, %51, %cst_55 {dimension_numbers = #tpu.dot_dimension_numbers<[1], [0], [0], [1], [0, 0, 1, 1], [], []>} : vector<8x32xf32>, vector<32x32xf32>, vector<8x32xf32> -> vector<8x32xf32>
      %53 = arith.addf %48, %52 : vector<8x32xf32>
      %c2_i32_56 = arith.constant 2 : i32
      %54 = arith.addi %arg20, %c2_i32_56 : i32
      %55 = arith.index_cast %54 : i32 to index
      %c0_57 = arith.constant 0 : index
      %c0_58 = arith.constant 0 : index
      %56 = vector.load %arg19[%55, %c0_57, %c0_58] : memref<10x10x32xf32, #tpu.memory_space<vmem>>, vector<1x10x32xf32>
      %57 = vector.shape_cast %56 : vector<1x10x32xf32> to vector<10x32xf32>
      %58 = vector.extract_strided_slice %57 {offsets = [0, 0], sizes = [8, 32], strides = [1, 1]} : vector<10x32xf32> to vector<8x32xf32>
      %c2_59 = arith.constant 2 : index
      %c0_60 = arith.constant 0 : index
      %c0_61 = arith.constant 0 : index
      %c0_62 = arith.constant 0 : index
      %59 = vector.load %arg12[%c2_59, %c0_60, %c0_61, %c0_62] : memref<3x3x32x32xf32, #tpu.memory_space<vmem>>, vector<1x1x32x32xf32>
      %60 = vector.shape_cast %59 : vector<1x1x32x32xf32> to vector<32x32xf32>
      %cst_63 = arith.constant dense<0.000000e+00> : vector<8x32xf32>
      %61 = tpu.matmul %58, %60, %cst_63 {dimension_numbers = #tpu.dot_dimension_numbers<[1], [0], [0], [1], [0, 0, 1, 1], [], []>} : vector<8x32xf32>, vector<32x32xf32>, vector<8x32xf32> -> vector<8x32xf32>
      %62 = arith.addf %53, %61 : vector<8x32xf32>
      %63 = vector.extract_strided_slice %57 {offsets = [1, 0], sizes = [8, 32], strides = [1, 1]} : vector<10x32xf32> to vector<8x32xf32>
      %c2_64 = arith.constant 2 : index
      %c1_65 = arith.constant 1 : index
      %c0_66 = arith.constant 0 : index
      %c0_67 = arith.constant 0 : index
      %64 = vector.load %arg12[%c2_64, %c1_65, %c0_66, %c0_67] : memref<3x3x32x32xf32, #tpu.memory_space<vmem>>, vector<1x1x32x32xf32>
      %65 = vector.shape_cast %64 : vector<1x1x32x32xf32> to vector<32x32xf32>
      %cst_68 = arith.constant dense<0.000000e+00> : vector<8x32xf32>
      %66 = tpu.matmul %63, %65, %cst_68 {dimension_numbers = #tpu.dot_dimension_numbers<[1], [0], [0], [1], [0, 0, 1, 1], [], []>} : vector<8x32xf32>, vector<32x32xf32>, vector<8x32xf32> -> vector<8x32xf32>
      %67 = arith.addf %62, %66 : vector<8x32xf32>
      %68 = vector.extract_strided_slice %57 {offsets = [2, 0], sizes = [8, 32], strides = [1, 1]} : vector<10x32xf32> to vector<8x32xf32>
      %c2_69 = arith.constant 2 : index
      %c2_70 = arith.constant 2 : index
      %c0_71 = arith.constant 0 : index
      %c0_72 = arith.constant 0 : index
      %69 = vector.load %arg12[%c2_69, %c2_70, %c0_71, %c0_72] : memref<3x3x32x32xf32, #tpu.memory_space<vmem>>, vector<1x1x32x32xf32>
      %70 = vector.shape_cast %69 : vector<1x1x32x32xf32> to vector<32x32xf32>
      %cst_73 = arith.constant dense<0.000000e+00> : vector<8x32xf32>
      %71 = tpu.matmul %68, %70, %cst_73 {dimension_numbers = #tpu.dot_dimension_numbers<[1], [0], [0], [1], [0, 0, 1, 1], [], []>} : vector<8x32xf32>, vector<32x32xf32>, vector<8x32xf32> -> vector<8x32xf32>
      %72 = arith.addf %67, %71 : vector<8x32xf32>
      %c0_74 = arith.constant 0 : index
      %c0_75 = arith.constant 0 : index
      %73 = vector.load %arg13[%c0_74, %c0_75] : memref<1x32xf32, #tpu.memory_space<vmem>>, vector<1x32xf32>
      %74 = vector.broadcast %73 : vector<1x32xf32> to vector<8x32xf32>
      %75 = arith.addf %72, %74 : vector<8x32xf32>
      %cst_76 = arith.constant 0.000000e+00 : f32
      %76 = vector.broadcast %cst_76 : f32 to vector<8x32xf32>
      %77 = arith.maximumf %75, %76 : vector<8x32xf32>
      %c0_77 = arith.constant 0 : index
      %c0_78 = arith.constant 0 : index
      %78 = vector.load %arg14[%c0_77, %c0_78] : memref<32x3xf32, #tpu.memory_space<vmem>>, vector<32x3xf32>
      %cst_79 = arith.constant dense<0.000000e+00> : vector<8x3xf32>
      %79 = tpu.matmul %77, %78, %cst_79 {dimension_numbers = #tpu.dot_dimension_numbers<[1], [0], [0], [1], [0, 0, 1, 1], [], []>} : vector<8x32xf32>, vector<32x3xf32>, vector<8x3xf32> -> vector<8x3xf32>
      %c0_80 = arith.constant 0 : index
      %c0_81 = arith.constant 0 : index
      %80 = vector.load %arg15[%c0_80, %c0_81] : memref<1x3xf32, #tpu.memory_space<vmem>>, vector<1x3xf32>
      %81 = vector.broadcast %80 : vector<1x3xf32> to vector<8x3xf32>
      %82 = arith.addf %79, %81 : vector<8x3xf32>
      %c0_82 = arith.constant 0 : index
      %83 = arith.index_cast %arg20 : i32 to index
      %c0_83 = arith.constant 0 : index
      %c0_84 = arith.constant 0 : index
      %84 = vector.load %arg16[%c0_82, %83, %c0_83, %c0_84] : memref<1x8x8x3xf32, #tpu.memory_space<vmem>>, vector<1x1x8x3xf32>
      %85 = vector.shape_cast %84 : vector<1x1x8x3xf32> to vector<8x3xf32>
      %86 = vector.shape_cast %82 : vector<8x3xf32> to vector<1x1x8x3xf32>
      tpu.vector_store %arg16[%c0_82, %83, %c0_83, %c0_84], %86 {strides = array<i32>} : memref<1x8x8x3xf32, #tpu.memory_space<vmem>>, vector<1x1x8x3xf32>,
    }
    %c8_i32_21 = arith.constant 8 : i32
    return
  }
  func.func @transform_0(%arg0: i32) -> (i32, i32, i32, i32) {
    %c0_i32 = arith.constant 0 : i32
    %c0_i32_0 = arith.constant 0 : i32
    %c0_i32_1 = arith.constant 0 : i32
    %c0_i32_2 = arith.constant 0 : i32
    return %arg0, %c0_i32, %c0_i32_0, %c0_i32_1 : i32, i32, i32, i32
  }
  func.func @transform_1(%arg0: i32) -> (i32, i32, i32, i32) {
    %c0_i32 = arith.constant 0 : i32
    %c0_i32_0 = arith.constant 0 : i32
    %c0_i32_1 = arith.constant 0 : i32
    %c0_i32_2 = arith.constant 0 : i32
    %c0_i32_3 = arith.constant 0 : i32
    return %c0_i32, %c0_i32_0, %c0_i32_1, %c0_i32_2 : i32, i32, i32, i32
  }
  func.func @transform_2(%arg0: i32) -> (i32, i32) {
    %c0_i32 = arith.constant 0 : i32
    %c0_i32_0 = arith.constant 0 : i32
    %c0_i32_1 = arith.constant 0 : i32
    return %c0_i32, %c0_i32_0 : i32, i32
  }
  func.func @transform_3(%arg0: i32) -> (i32, i32) {
    %c0_i32 = arith.constant 0 : i32
    %c0_i32_0 = arith.constant 0 : i32
    %c0_i32_1 = arith.constant 0 : i32
    return %c0_i32, %c0_i32_0 : i32, i32
  }
  func.func @transform_4(%arg0: i32) -> (i32, i32) {
    %c0_i32 = arith.constant 0 : i32
    %c0_i32_0 = arith.constant 0 : i32
    %c0_i32_1 = arith.constant 0 : i32
    return %c0_i32, %c0_i32_0 : i32, i32
  }
  func.func @transform_5(%arg0: i32) -> (i32, i32, i32, i32) {
    %c0_i32 = arith.constant 0 : i32
    %c0_i32_0 = arith.constant 0 : i32
    %c0_i32_1 = arith.constant 0 : i32
    %c0_i32_2 = arith.constant 0 : i32
    %c0_i32_3 = arith.constant 0 : i32
    return %c0_i32, %c0_i32_0, %c0_i32_1, %c0_i32_2 : i32, i32, i32, i32
  }
  func.func @transform_6(%arg0: i32) -> (i32, i32) {
    %c0_i32 = arith.constant 0 : i32
    %c0_i32_0 = arith.constant 0 : i32
    %c0_i32_1 = arith.constant 0 : i32
    return %c0_i32, %c0_i32_0 : i32, i32
  }
  func.func @transform_7(%arg0: i32) -> (i32, i32, i32, i32) {
    %c0_i32 = arith.constant 0 : i32
    %c0_i32_0 = arith.constant 0 : i32
    %c0_i32_1 = arith.constant 0 : i32
    %c0_i32_2 = arith.constant 0 : i32
    %c0_i32_3 = arith.constant 0 : i32
    return %c0_i32, %c0_i32_0, %c0_i32_1, %c0_i32_2 : i32, i32, i32, i32
  }
  func.func @transform_8(%arg0: i32) -> (i32, i32) {
    %c0_i32 = arith.constant 0 : i32
    %c0_i32_0 = arith.constant 0 : i32
    %c0_i32_1 = arith.constant 0 : i32
    return %c0_i32, %c0_i32_0 : i32, i32
  }
  func.func @transform_9(%arg0: i32) -> (i32, i32) {
    %c0_i32 = arith.constant 0 : i32
    %c0_i32_0 = arith.constant 0 : i32
    %c0_i32_1 = arith.constant 0 : i32
    return %c0_i32, %c0_i32_0 : i32, i32
  }
  func.func @transform_10(%arg0: i32) -> (i32, i32) {
    %c0_i32 = arith.constant 0 : i32
    %c0_i32_0 = arith.constant 0 : i32
    %c0_i32_1 = arith.constant 0 : i32
    return %c0_i32, %c0_i32_0 : i32, i32
  }
  func.func @transform_11(%arg0: i32) -> (i32, i32, i32, i32) {
    %c0_i32 = arith.constant 0 : i32
    %c0_i32_0 = arith.constant 0 : i32
    %c0_i32_1 = arith.constant 0 : i32
    %c0_i32_2 = arith.constant 0 : i32
    %c0_i32_3 = arith.constant 0 : i32
    return %c0_i32, %c0_i32_0, %c0_i32_1, %c0_i32_2 : i32, i32, i32, i32
  }
  func.func @transform_12(%arg0: i32) -> (i32, i32) {
    %c0_i32 = arith.constant 0 : i32
    %c0_i32_0 = arith.constant 0 : i32
    %c0_i32_1 = arith.constant 0 : i32
    return %c0_i32, %c0_i32_0 : i32, i32
  }
  func.func @transform_13(%arg0: i32) -> (i32, i32) {
    %c0_i32 = arith.constant 0 : i32
    %c0_i32_0 = arith.constant 0 : i32
    %c0_i32_1 = arith.constant 0 : i32
    return %c0_i32, %c0_i32_0 : i32, i32
  }
  func.func @transform_14(%arg0: i32) -> (i32, i32) {
    %c0_i32 = arith.constant 0 : i32
    %c0_i32_0 = arith.constant 0 : i32
    %c0_i32_1 = arith.constant 0 : i32
    return %c0_i32, %c0_i32_0 : i32, i32
  }
  func.func @transform_15(%arg0: i32) -> (i32, i32, i32, i32) {
    %c0_i32 = arith.constant 0 : i32
    %c0_i32_0 = arith.constant 0 : i32
    %c0_i32_1 = arith.constant 0 : i32
    %c0_i32_2 = arith.constant 0 : i32
    return %arg0, %c0_i32, %c0_i32_0, %c0_i32_1 : i32, i32, i32, i32
  }
}

</mosaic_0001>

<llo_original>
// kernel: model_forward.1
$region0: #{model_forward.1}
  #allocation0 [shape = 'u32[]', space=smem, size = 0x4, offset = 0x4, fixed_abs, tag = 'smem constant byte address 0x4 - core index']
  #allocation1 [shape = 'u32[144,128]{1,0:T(1,128)}', space=vmem, size = 0x12000, scoped, tag = 'internal scratch']
  #allocation2 [shape = 'f32[18,18,32]{2,1,0:T(8,128)}', space=vmem, size = 0x36000, scoped, tag = 'scratch operand']
  #allocation3 [shape = 'f32[10,10,32]{2,1,0:T(8,128)}', space=vmem, size = 0x14000, scoped, tag = 'scratch operand']
  #allocation4 [shape = 'f32[10,10,32]{2,1,0:T(8,128)}', space=vmem, size = 0x14000, scoped, tag = 'scratch operand']
  %s0 = inlined_call_operand.vmem [shape: f32[1,18,18,3], index: 0, kind: input, shape index: {}]
  %s1 = inlined_call_operand.vmem [shape: f32[3,3,3,32], index: 1, kind: input, shape index: {}]
  %s2 = inlined_call_operand.vmem [shape: f32[1,32], index: 2, kind: input, shape index: {}]
  %s3 = inlined_call_operand.vmem [shape: f32[32,32], index: 3, kind: input, shape index: {}]
  %s4 = inlined_call_operand.vmem [shape: f32[1,32], index: 4, kind: input, shape index: {}]
  %s5 = inlined_call_operand.vmem [shape: f32[3,3,32,32], index: 5, kind: input, shape index: {}]
  %s6 = inlined_call_operand.vmem [shape: f32[1,32], index: 6, kind: input, shape index: {}]
  %s7 = inlined_call_operand.vmem [shape: f32[3,3,32,32], index: 7, kind: input, shape index: {}]
  %s8 = inlined_call_operand.vmem [shape: f32[1,32], index: 8, kind: input, shape index: {}]
  %s9 = inlined_call_operand.vmem [shape: f32[32,32], index: 9, kind: input, shape index: {}]
  %s10 = inlined_call_operand.vmem [shape: f32[1,32], index: 10, kind: input, shape index: {}]
  %s11 = inlined_call_operand.vmem [shape: f32[3,3,32,32], index: 11, kind: input, shape index: {}]
  %s12 = inlined_call_operand.vmem [shape: f32[1,32], index: 12, kind: input, shape index: {}]
  %s13 = inlined_call_operand.vmem [shape: f32[32,3], index: 13, kind: input, shape index: {}]
  %s14 = inlined_call_operand.vmem [shape: f32[1,3], index: 14, kind: input, shape index: {}]
  %s15 = inlined_call_operand.vmem [shape: f32[1,8,8,3], index: 15, kind: output, shape index: {}]
  %s16 = sld [smem:[#allocation0]]
  $region98: #{model_forward.1} parent=0
    _
  %s18 = ssub.s32 1, %s16
  %s19 = scalar_select 0, %s18, %s16
  // Predicated region
  $region2: #{model_forward.1} parent=0 // pred_check
    _
  $region3: #{model_forward.1} parent=0 // pred_check_branch
    %21 = sbr.rel (0) target = $region5
  $region4: #{model_forward.1} parent=0 // pred_region
    _
  $region5: #{model_forward.1} parent=0 // pred_fallthru
    _
  // Predicated region
  $region6: #{model_forward.1} parent=0 // pred_check
    _
  $region7: #{model_forward.1} parent=0 // pred_check_branch
    %23 = sbr.rel (0) target = $region9
  $region8: #{model_forward.1} parent=0 // pred_region
    _
  $region9: #{model_forward.1} parent=0 // pred_fallthru
    _
  // Predicated region
  $region10: #{model_forward.1} parent=0 // pred_check
    _
  $region11: #{model_forward.1} parent=0 // pred_check_branch
    %25 = sbr.rel (0) target = $region13
  $region12: #{model_forward.1} parent=0 // pred_region
    _
  $region13: #{model_forward.1} parent=0 // pred_fallthru
    _
  // Predicated region
  $region14: #{model_forward.1} parent=0 // pred_check
    _
  $region15: #{model_forward.1} parent=0 // pred_check_branch
    %27 = sbr.rel (0) target = $region17
  $region16: #{model_forward.1} parent=0 // pred_region
    _
  $region17: #{model_forward.1} parent=0 // pred_fallthru
    _
  // Predicated region
  $region18: #{model_forward.1} parent=0 // pred_check
    _
  $region19: #{model_forward.1} parent=0 // pred_check_branch
    %29 = sbr.rel (0) target = $region21
  $region20: #{model_forward.1} parent=0 // pred_region
    _
  $region21: #{model_forward.1} parent=0 // pred_fallthru
    _
  // Predicated region
  $region22: #{model_forward.1} parent=0 // pred_check
    _
  $region23: #{model_forward.1} parent=0 // pred_check_branch
    %31 = sbr.rel (0) target = $region25
  $region24: #{model_forward.1} parent=0 // pred_region
    _
  $region25: #{model_forward.1} parent=0 // pred_fallthru
    _
  // Predicated region
  $region26: #{model_forward.1} parent=0 // pred_check
    _
  $region27: #{model_forward.1} parent=0 // pred_check_branch
    %33 = sbr.rel (0) target = $region29
  $region28: #{model_forward.1} parent=0 // pred_region
    _
  $region29: #{model_forward.1} parent=0 // pred_fallthru
    _
  // Predicated region
  $region30: #{model_forward.1} parent=0 // pred_check
    _
  $region31: #{model_forward.1} parent=0 // pred_check_branch
    %35 = sbr.rel (0) target = $region33
  $region32: #{model_forward.1} parent=0 // pred_region
    _
  $region33: #{model_forward.1} parent=0 // pred_fallthru
    _
  // Predicated region
  $region34: #{model_forward.1} parent=0 // pred_check
    _
  $region35: #{model_forward.1} parent=0 // pred_check_branch
    %37 = sbr.rel (0) target = $region37
  $region36: #{model_forward.1} parent=0 // pred_region
    _
  $region37: #{model_forward.1} parent=0 // pred_fallthru
    _
  // Predicated region
  $region38: #{model_forward.1} parent=0 // pred_check
    _
  $region39: #{model_forward.1} parent=0 // pred_check_branch
    %39 = sbr.rel (0) target = $region41
  $region40: #{model_forward.1} parent=0 // pred_region
    _
  $region41: #{model_forward.1} parent=0 // pred_fallthru
    _
  // Predicated region
  $region42: #{model_forward.1} parent=0 // pred_check
    _
  $region43: #{model_forward.1} parent=0 // pred_check_branch
    %41 = sbr.rel (0) target = $region45
  $region44: #{model_forward.1} parent=0 // pred_region
    _
  $region45: #{model_forward.1} parent=0 // pred_fallthru
    _
  // Predicated region
  $region46: #{model_forward.1} parent=0 // pred_check
    _
  $region47: #{model_forward.1} parent=0 // pred_check_branch
    %43 = sbr.rel (0) target = $region49
  $region48: #{model_forward.1} parent=0 // pred_region
    _
  $region49: #{model_forward.1} parent=0 // pred_fallthru
    _
  // Predicated region
  $region50: #{model_forward.1} parent=0 // pred_check
    _
  $region51: #{model_forward.1} parent=0 // pred_check_branch
    %45 = sbr.rel (0) target = $region53
  $region52: #{model_forward.1} parent=0 // pred_region
    _
  $region53: #{model_forward.1} parent=0 // pred_fallthru
    _
  // Predicated region
  $region54: #{model_forward.1} parent=0 // pred_check
    _
  $region55: #{model_forward.1} parent=0 // pred_check_branch
    %47 = sbr.rel (0) target = $region57
  $region56: #{model_forward.1} parent=0 // pred_region
    _
  $region57: #{model_forward.1} parent=0 // pred_fallthru
    _
  // Predicated region
  $region58: #{model_forward.1} parent=0 // pred_check
    _
  $region59: #{model_forward.1} parent=0 // pred_check_branch
    %49 = sbr.rel (0) target = $region61
  $region60: #{model_forward.1} parent=0 // pred_region
    _
  $region61: #{model_forward.1} parent=0 // pred_fallthru
    _
  %vm50 = vcmask 261120
  %51 = vst.msk [vmem:[#allocation2] sm:$0xff] %vm50, 0.0
  %52 = vst.msk [vmem:[#allocation2 + $0x8] sm:$0xff] %vm50, 0.0
  %vm53 = vcmask 254976
  %54 = vst.msk [vmem:[#allocation2 + $0x10] sm:$0x3] %vm53, 0.0
  %55 = vst.msk [vmem:[#allocation2 + $0x18] sm:$0xff] %vm50, 0.0
  %56 = vst.msk [vmem:[#allocation2 + $0x20] sm:$0xff] %vm50, 0.0
  %57 = vst.msk [vmem:[#allocation2 + $0x28] sm:$0x3] %vm53, 0.0
  %58 = vst.msk [vmem:[#allocation2 + $0x30] sm:$0xff] %vm50, 0.0
  %59 = vst.msk [vmem:[#allocation2 + $0x38] sm:$0xff] %vm50, 0.0
  %60 = vst.msk [vmem:[#allocation2 + $0x40] sm:$0x3] %vm53, 0.0
  %61 = vst.msk [vmem:[#allocation2 + $0x48] sm:$0xff] %vm50, 0.0
  %62 = vst.msk [vmem:[#allocation2 + $0x50] sm:$0xff] %vm50, 0.0
  %63 = vst.msk [vmem:[#allocation2 + $0x58] sm:$0x3] %vm53, 0.0
  %64 = vst.msk [vmem:[#allocation2 + $0x60] sm:$0xff] %vm50, 0.0
  %65 = vst.msk [vmem:[#allocation2 + $0x68] sm:$0xff] %vm50, 0.0
  %66 = vst.msk [vmem:[#allocation2 + $0x70] sm:$0x3] %vm53, 0.0
  %67 = vst.msk [vmem:[#allocation2 + $0x78] sm:$0xff] %vm50, 0.0
  %68 = vst.msk [vmem:[#allocation2 + $0x80] sm:$0xff] %vm50, 0.0
  %69 = vst.msk [vmem:[#allocation2 + $0x88] sm:$0x3] %vm53, 0.0
  %70 = vst.msk [vmem:[#allocation2 + $0x90] sm:$0xff] %vm50, 0.0
  %71 = vst.msk [vmem:[#allocation2 + $0x98] sm:$0xff] %vm50, 0.0
  %72 = vst.msk [vmem:[#allocation2 + $0xa0] sm:$0x3] %vm53, 0.0
  %73 = vst.msk [vmem:[#allocation2 + $0xa8] sm:$0xff] %vm50, 0.0
  %74 = vst.msk [vmem:[#allocation2 + $0xb0] sm:$0xff] %vm50, 0.0
  %75 = vst.msk [vmem:[#allocation2 + $0xb8] sm:$0x3] %vm53, 0.0
  %76 = vst.msk [vmem:[#allocation2 + $0xc0] sm:$0xff] %vm50, 0.0
  %77 = vst.msk [vmem:[#allocation2 + $0xc8] sm:$0xff] %vm50, 0.0
  %78 = vst.msk [vmem:[#allocation2 + $0xd0] sm:$0x3] %vm53, 0.0
  %79 = vst.msk [vmem:[#allocation2 + $0xd8] sm:$0xff] %vm50, 0.0
  %80 = vst.msk [vmem:[#allocation2 + $0xe0] sm:$0xff] %vm50, 0.0
  %81 = vst.msk [vmem:[#allocation2 + $0xe8] sm:$0x3] %vm53, 0.0
  %82 = vst.msk [vmem:[#allocation2 + $0xf0] sm:$0xff] %vm50, 0.0
  %83 = vst.msk [vmem:[#allocation2 + $0xf8] sm:$0xff] %vm50, 0.0
  %84 = vst.msk [vmem:[#allocation2 + $0x100] sm:$0x3] %vm53, 0.0
  %85 = vst.msk [vmem:[#allocation2 + $0x108] sm:$0xff] %vm50, 0.0
  %86 = vst.msk [vmem:[#allocation2 + $0x110] sm:$0xff] %vm50, 0.0
  %87 = vst.msk [vmem:[#allocation2 + $0x118] sm:$0x3] %vm53, 0.0
  %88 = vst.msk [vmem:[#allocation2 + $0x120] sm:$0xff] %vm50, 0.0
  %89 = vst.msk [vmem:[#allocation2 + $0x128] sm:$0xff] %vm50, 0.0
  %90 = vst.msk [vmem:[#allocation2 + $0x130] sm:$0x3] %vm53, 0.0
  %91 = vst.msk [vmem:[#allocation2 + $0x138] sm:$0xff] %vm50, 0.0
  %92 = vst.msk [vmem:[#allocation2 + $0x140] sm:$0xff] %vm50, 0.0
  %93 = vst.msk [vmem:[#allocation2 + $0x148] sm:$0x3] %vm53, 0.0
  %94 = vst.msk [vmem:[#allocation2 + $0x150] sm:$0xff] %vm50, 0.0
  %95 = vst.msk [vmem:[#allocation2 + $0x158] sm:$0xff] %vm50, 0.0
  %96 = vst.msk [vmem:[#allocation2 + $0x160] sm:$0x3] %vm53, 0.0
  %97 = vst.msk [vmem:[#allocation2 + $0x168] sm:$0xff] %vm50, 0.0
  %98 = vst.msk [vmem:[#allocation2 + $0x170] sm:$0xff] %vm50, 0.0
  %99 = vst.msk [vmem:[#allocation2 + $0x178] sm:$0x3] %vm53, 0.0
  %100 = vst.msk [vmem:[#allocation2 + $0x180] sm:$0xff] %vm50, 0.0
  %101 = vst.msk [vmem:[#allocation2 + $0x188] sm:$0xff] %vm50, 0.0
  %102 = vst.msk [vmem:[#allocation2 + $0x190] sm:$0x3] %vm53, 0.0
  %103 = vst.msk [vmem:[#allocation2 + $0x198] sm:$0xff] %vm50, 0.0
  %104 = vst.msk [vmem:[#allocation2 + $0x1a0] sm:$0xff] %vm50, 0.0
  %105 = vst.msk [vmem:[#allocation2 + $0x1a8] sm:$0x3] %vm53, 0.0
  %106 = vst.msk [vmem:[#allocation3] sm:$0xff] %vm50, 0.0
  %107 = vst.msk [vmem:[#allocation3 + $0x8] sm:$0x3] %vm53, 0.0
  %108 = vst.msk [vmem:[#allocation3 + $0x10] sm:$0xff] %vm50, 0.0
  %109 = vst.msk [vmem:[#allocation3 + $0x18] sm:$0x3] %vm53, 0.0
  %110 = vst.msk [vmem:[#allocation3 + $0x20] sm:$0xff] %vm50, 0.0
  %111 = vst.msk [vmem:[#allocation3 + $0x28] sm:$0x3] %vm53, 0.0
  %112 = vst.msk [vmem:[#allocation3 + $0x30] sm:$0xff] %vm50, 0.0
  %113 = vst.msk [vmem:[#allocation3 + $0x38] sm:$0x3] %vm53, 0.0
  %114 = vst.msk [vmem:[#allocation3 + $0x40] sm:$0xff] %vm50, 0.0
  %115 = vst.msk [vmem:[#allocation3 + $0x48] sm:$0x3] %vm53, 0.0
  %116 = vst.msk [vmem:[#allocation3 + $0x50] sm:$0xff] %vm50, 0.0
  %117 = vst.msk [vmem:[#allocation3 + $0x58] sm:$0x3] %vm53, 0.0
  %118 = vst.msk [vmem:[#allocation3 + $0x60] sm:$0xff] %vm50, 0.0
  %119 = vst.msk [vmem:[#allocation3 + $0x68] sm:$0x3] %vm53, 0.0
  %120 = vst.msk [vmem:[#allocation3 + $0x70] sm:$0xff] %vm50, 0.0
  %121 = vst.msk [vmem:[#allocation3 + $0x78] sm:$0x3] %vm53, 0.0
  %122 = vst.msk [vmem:[#allocation3 + $0x80] sm:$0xff] %vm50, 0.0
  %123 = vst.msk [vmem:[#allocation3 + $0x88] sm:$0x3] %vm53, 0.0
  %124 = vst.msk [vmem:[#allocation3 + $0x90] sm:$0xff] %vm50, 0.0
  %125 = vst.msk [vmem:[#allocation3 + $0x98] sm:$0x3] %vm53, 0.0
  %126 = vst.msk [vmem:[#allocation4] sm:$0xff] %vm50, 0.0
  %127 = vst.msk [vmem:[#allocation4 + $0x8] sm:$0x3] %vm53, 0.0
  %128 = vst.msk [vmem:[#allocation4 + $0x10] sm:$0xff] %vm50, 0.0
  %129 = vst.msk [vmem:[#allocation4 + $0x18] sm:$0x3] %vm53, 0.0
  %130 = vst.msk [vmem:[#allocation4 + $0x20] sm:$0xff] %vm50, 0.0
  %131 = vst.msk [vmem:[#allocation4 + $0x28] sm:$0x3] %vm53, 0.0
  %132 = vst.msk [vmem:[#allocation4 + $0x30] sm:$0xff] %vm50, 0.0
  %133 = vst.msk [vmem:[#allocation4 + $0x38] sm:$0x3] %vm53, 0.0
  %134 = vst.msk [vmem:[#allocation4 + $0x40] sm:$0xff] %vm50, 0.0
  %135 = vst.msk [vmem:[#allocation4 + $0x48] sm:$0x3] %vm53, 0.0
  %136 = vst.msk [vmem:[#allocation4 + $0x50] sm:$0xff] %vm50, 0.0
  %137 = vst.msk [vmem:[#allocation4 + $0x58] sm:$0x3] %vm53, 0.0
  %138 = vst.msk [vmem:[#allocation4 + $0x60] sm:$0xff] %vm50, 0.0
  %139 = vst.msk [vmem:[#allocation4 + $0x68] sm:$0x3] %vm53, 0.0
  %140 = vst.msk [vmem:[#allocation4 + $0x70] sm:$0xff] %vm50, 0.0
  %141 = vst.msk [vmem:[#allocation4 + $0x78] sm:$0x3] %vm53, 0.0
  %142 = vst.msk [vmem:[#allocation4 + $0x80] sm:$0xff] %vm50, 0.0
  %143 = vst.msk [vmem:[#allocation4 + $0x88] sm:$0x3] %vm53, 0.0
  %144 = vst.msk [vmem:[#allocation4 + $0x90] sm:$0xff] %vm50, 0.0
  %145 = vst.msk [vmem:[#allocation4 + $0x98] sm:$0x3] %vm53, 0.0
  loop: start=0, step=1, limit=16
  $region62: #{model_forward.1} parent=0 // loop_pre_header
    _
  $region63: #{model_forward.1} parent=0 // loop_header
    %s147 = sphi 0, %s151
    %p148 = scmp.ge.s32.totalorder %s147, 16
  $region64: #{model_forward.1} parent=0 // loop_header_branch
    %150 = sbr.rel (%p148) target = $region68
  $region65: #{model_forward.1} parent=0 // loop_body
    %s152 = smul.u32 %s147, 24
    %s153 = scalar_lea.vmem %s0, %s152
    %v154 = vld [vmem:[%s153] sm:$0xff]
    %v155 = vld [vmem:[%s153 + $0x8] sm:$0xff]
    %v156 = vld [vmem:[%s153 + $0x10] sm:$0x3]
    %v157 = vld [vmem:[%s1] sm:$0x7]
    %s158 = scalar_lea.vmem %s1, 4
    %v159 = vld [vmem:[%s158] sm:$0x7]
    %vm163 = vcmask 1046528
    %v164 = vrot.slane %v154, 1
    %v165 = vrot.slane %v155, 1
    %v166 = vsel %vm163, %v164, %v165
    %v167 = vrot.slane %v156, 1
    %v168 = vsel %vm163, %v165, %v167
    %vm169 = vcmask 23552
    %v170 = vsel %vm169, %v166, 0
    %v172 = vsel %vm169, %v168, 0
    %vm174 = vcmask 1042432
    %v176 = vsel %vm174, %v159, 0
    %178 = vmatprep.subr.mxu0 0.0
    %179 = vmatpush1.msra.mxu0 0.0
    %180 = vmatprep.subr.mxu0 0.0
    %181 = vmatpush1.msra.mxu0 0.0
    %182 = vmatprep.subr.mxu0 0.0
    %183 = vmatpush1.msra.mxu0 0.0
    %184 = vmatprep.subr.mxu0 0.0
    %185 = vmatpush1.msra.mxu0 0.0
    %186 = vmatprep.subr.mxu0 0.0
    %187 = vmatpush1.msra.mxu0 0.0
    %188 = vmatprep.subr.mxu0 0.0
    %189 = vmatpush1.msra.mxu0 0.0
    %190 = vmatprep.subr.mxu0 0.0
    %191 = vmatpush1.msra.mxu0 0.0
    %192 = vmatprep.subr.mxu0 0.0
    %193 = vmatpush1.msra.mxu0 0.0
    %194 = vmatprep.subr.mxu0 0.0
    %195 = vmatpush1.msra.mxu0 0.0
    %196 = vmatprep.subr.mxu0 0.0
    %197 = vmatpush1.msra.mxu0 0.0
    %198 = vmatprep.subr.mxu0 0.0
    %199 = vmatpush1.msra.mxu0 0.0
    %200 = vmatprep.subr.mxu0 0.0
    %201 = vmatpush1.msra.mxu0 0.0
    %202 = vmatprep.subr.mxu0 0.0
    %203 = vmatpush1.msra.mxu0 0.0
    %204 = vmatprep.subr.mxu0 0.0
    %205 = vmatpush1.msra.mxu0 0.0
    %206 = vmatprep.subr.mxu0 0.0
    %207 = vmatpush1.msra.mxu0 0.0
    %208 = vmatprep.subr.mxu0 0.0
    %209 = vmatpush1.msra.mxu0 %v176
    %210 = vmatprep.subr.mxu0 0.0
    %211 = vmatpush2.msra.mxu0 0.0
    %212 = vmatprep.subr.mxu0 0.0
    %213 = vmatpush2.msra.mxu0 0.0
    %214 = vmatprep.subr.mxu0 0.0
    %215 = vmatpush2.msra.mxu0 0.0
    %216 = vmatprep.subr.mxu0 0.0
    %217 = vmatpush2.msra.mxu0 0.0
    %218 = vmatprep.subr.mxu0 0.0
    %219 = vmatpush2.msra.mxu0 0.0
    %220 = vmatprep.subr.mxu0 0.0
    %221 = vmatpush2.msra.mxu0 0.0
    %222 = vmatprep.subr.mxu0 0.0
    %223 = vmatpush2.msra.mxu0 0.0
    %224 = vmatprep.subr.mxu0 0.0
    %225 = vmatpush2.msra.mxu0 0.0
    %226 = vmatprep.subr.mxu0 0.0
    %227 = vmatpush2.msra.mxu0 0.0
    %228 = vmatprep.subr.mxu0 0.0
    %229 = vmatpush2.msra.mxu0 0.0
    %230 = vmatprep.subr.mxu0 0.0
    %231 = vmatpush2.msra.mxu0 0.0
    %232 = vmatprep.subr.mxu0 0.0
    %233 = vmatpush2.msra.mxu0 0.0
    %234 = vmatprep.subr.mxu0 0.0
    %235 = vmatpush2.msra.mxu0 0.0
    %236 = vmatprep.subr.mxu0 0.0
    %237 = vmatpush2.msra.mxu0 0.0
    %238 = vmatprep.subr.mxu0 0.0
    %239 = vmatpush2.msra.mxu0 0.0
    %240 = vmatprep.subr.mxu0 0.0
    %241 = vmatpush2.msra.mxu0 0.0
    %242 = vmatprep.mubr.f32.mxu0 0.0
    %243 = vmatmul.mubr.f32.gmra.mxu0 %v170
    %v244 = vpop.f32.mrf.mxu0
    %v245 = vadd.f32 0.0, %v244
    %v246 = vpop.f32.mrf.mxu0
    %247 = vmatprep.mubr.f32.mxu0 0.0
    %248 = vmatmul.mubr.f32.gmra.mxu0 %v172
    %v249 = vpop.f32.mrf.mxu0
    %v250 = vadd.f32 0.0, %v249
    %v251 = vpop.f32.mrf.mxu0
    %252 = vdwg.mxu0
    %v253 = vsel %vm169, %v154, 0
    %v255 = vsel %vm169, %v155, 0
    %v258 = vsel %vm174, %v157, 0
    %260 = vmatprep.subr.mxu0 0.0
    %261 = vmatpush1.msra.mxu0 0.0
    %262 = vmatprep.subr.mxu0 0.0
    %263 = vmatpush1.msra.mxu0 0.0
    %264 = vmatprep.subr.mxu0 0.0
    %265 = vmatpush1.msra.mxu0 0.0
    %266 = vmatprep.subr.mxu0 0.0
    %267 = vmatpush1.msra.mxu0 0.0
    %268 = vmatprep.subr.mxu0 0.0
    %269 = vmatpush1.msra.mxu0 0.0
    %270 = vmatprep.subr.mxu0 0.0
    %271 = vmatpush1.msra.mxu0 0.0
    %272 = vmatprep.subr.mxu0 0.0
    %273 = vmatpush1.msra.mxu0 0.0
    %274 = vmatprep.subr.mxu0 0.0
    %275 = vmatpush1.msra.mxu0 0.0
    %276 = vmatprep.subr.mxu0 0.0
    %277 = vmatpush1.msra.mxu0 0.0
    %278 = vmatprep.subr.mxu0 0.0
    %279 = vmatpush1.msra.mxu0 0.0
    %280 = vmatprep.subr.mxu0 0.0
    %281 = vmatpush1.msra.mxu0 0.0
    %282 = vmatprep.subr.mxu0 0.0
    %283 = vmatpush1.msra.mxu0 0.0
    %284 = vmatprep.subr.mxu0 0.0
    %285 = vmatpush1.msra.mxu0 0.0
    %286 = vmatprep.subr.mxu0 0.0
    %287 = vmatpush1.msra.mxu0 0.0
    %288 = vmatprep.subr.mxu0 0.0
    %289 = vmatpush1.msra.mxu0 0.0
    %290 = vmatprep.subr.mxu0 0.0
    %291 = vmatpush1.msra.mxu0 %v258
    %292 = vmatprep.subr.mxu0 0.0
    %293 = vmatpush2.msra.mxu0 0.0
    %294 = vmatprep.subr.mxu0 0.0
    %295 = vmatpush2.msra.mxu0 0.0
    %296 = vmatprep.subr.mxu0 0.0
    %297 = vmatpush2.msra.mxu0 0.0
    %298 = vmatprep.subr.mxu0 0.0
    %299 = vmatpush2.msra.mxu0 0.0
    %300 = vmatprep.subr.mxu0 0.0
    %301 = vmatpush2.msra.mxu0 0.0
    %302 = vmatprep.subr.mxu0 0.0
    %303 = vmatpush2.msra.mxu0 0.0
    %304 = vmatprep.subr.mxu0 0.0
    %305 = vmatpush2.msra.mxu0 0.0
    %306 = vmatprep.subr.mxu0 0.0
    %307 = vmatpush2.msra.mxu0 0.0
    %308 = vmatprep.subr.mxu0 0.0
    %309 = vmatpush2.msra.mxu0 0.0
    %310 = vmatprep.subr.mxu0 0.0
    %311 = vmatpush2.msra.mxu0 0.0
    %312 = vmatprep.subr.mxu0 0.0
    %313 = vmatpush2.msra.mxu0 0.0
    %314 = vmatprep.subr.mxu0 0.0
    %315 = vmatpush2.msra.mxu0 0.0
    %316 = vmatprep.subr.mxu0 0.0
    %317 = vmatpush2.msra.mxu0 0.0
    %318 = vmatprep.subr.mxu0 0.0
    %319 = vmatpush2.msra.mxu0 0.0
    %320 = vmatprep.subr.mxu0 0.0
    %321 = vmatpush2.msra.mxu0 0.0
    %322 = vmatprep.subr.mxu0 0.0
    %323 = vmatpush2.msra.mxu0 0.0
    %324 = vmatprep.mubr.f32.mxu0 0.0
    %325 = vmatmul.mubr.f32.gmra.mxu0 %v253
    %v326 = vpop.f32.mrf.mxu0
    %v327 = vadd.f32 %v245, %v326
    %v328 = vpop.f32.mrf.mxu0
    %329 = vmatprep.mubr.f32.mxu0 0.0
    %330 = vmatmul.mubr.f32.gmra.mxu0 %v255
    %v331 = vpop.f32.mrf.mxu0
    %v332 = vadd.f32 %v250, %v331
    %v333 = vpop.f32.mrf.mxu0
    %334 = vdwg.mxu0
    %s335 = scalar_lea.vmem %s1, 8
    %v336 = vld [vmem:[%s335] sm:$0x7]
    %vm337 = vcmask 1045504
    %v338 = vrot.slane %v154, 2
    %v339 = vrot.slane %v155, 2
    %v340 = vsel %vm337, %v338, %v339
    %v341 = vrot.slane %v156, 2
    %v342 = vsel %vm337, %v339, %v341
    %v343 = vsel %vm169, %v340, 0
    %v345 = vsel %vm169, %v342, 0
    %v348 = vsel %vm174, %v336, 0
    %350 = vmatprep.subr.mxu0 0.0
    %351 = vmatpush1.msra.mxu0 0.0
    %352 = vmatprep.subr.mxu0 0.0
    %353 = vmatpush1.msra.mxu0 0.0
    %354 = vmatprep.subr.mxu0 0.0
    %355 = vmatpush1.msra.mxu0 0.0
    %356 = vmatprep.subr.mxu0 0.0
    %357 = vmatpush1.msra.mxu0 0.0
    %358 = vmatprep.subr.mxu0 0.0
    %359 = vmatpush1.msra.mxu0 0.0
    %360 = vmatprep.subr.mxu0 0.0
    %361 = vmatpush1.msra.mxu0 0.0
    %362 = vmatprep.subr.mxu0 0.0
    %363 = vmatpush1.msra.mxu0 0.0
    %364 = vmatprep.subr.mxu0 0.0
    %365 = vmatpush1.msra.mxu0 0.0
    %366 = vmatprep.subr.mxu0 0.0
    %367 = vmatpush1.msra.mxu0 0.0
    %368 = vmatprep.subr.mxu0 0.0
    %369 = vmatpush1.msra.mxu0 0.0
    %370 = vmatprep.subr.mxu0 0.0
    %371 = vmatpush1.msra.mxu0 0.0
    %372 = vmatprep.subr.mxu0 0.0
    %373 = vmatpush1.msra.mxu0 0.0
    %374 = vmatprep.subr.mxu0 0.0
    %375 = vmatpush1.msra.mxu0 0.0
    %376 = vmatprep.subr.mxu0 0.0
    %377 = vmatpush1.msra.mxu0 0.0
    %378 = vmatprep.subr.mxu0 0.0
    %379 = vmatpush1.msra.mxu0 0.0
    %380 = vmatprep.subr.mxu0 0.0
    %381 = vmatpush1.msra.mxu0 %v348
    %382 = vmatprep.subr.mxu0 0.0
    %383 = vmatpush2.msra.mxu0 0.0
    %384 = vmatprep.subr.mxu0 0.0
    %385 = vmatpush2.msra.mxu0 0.0
    %386 = vmatprep.subr.mxu0 0.0
    %387 = vmatpush2.msra.mxu0 0.0
    %388 = vmatprep.subr.mxu0 0.0
    %389 = vmatpush2.msra.mxu0 0.0
    %390 = vmatprep.subr.mxu0 0.0
    %391 = vmatpush2.msra.mxu0 0.0
    %392 = vmatprep.subr.mxu0 0.0
    %393 = vmatpush2.msra.mxu0 0.0
    %394 = vmatprep.subr.mxu0 0.0
    %395 = vmatpush2.msra.mxu0 0.0
    %396 = vmatprep.subr.mxu0 0.0
    %397 = vmatpush2.msra.mxu0 0.0
    %398 = vmatprep.subr.mxu0 0.0
    %399 = vmatpush2.msra.mxu0 0.0
    %400 = vmatprep.subr.mxu0 0.0
    %401 = vmatpush2.msra.mxu0 0.0
    %402 = vmatprep.subr.mxu0 0.0
    %403 = vmatpush2.msra.mxu0 0.0
    %404 = vmatprep.subr.mxu0 0.0
    %405 = vmatpush2.msra.mxu0 0.0
    %406 = vmatprep.subr.mxu0 0.0
    %407 = vmatpush2.msra.mxu0 0.0
    %408 = vmatprep.subr.mxu0 0.0
    %409 = vmatpush2.msra.mxu0 0.0
    %410 = vmatprep.subr.mxu0 0.0
    %411 = vmatpush2.msra.mxu0 0.0
    %412 = vmatprep.subr.mxu0 0.0
    %413 = vmatpush2.msra.mxu0 0.0
    %414 = vmatprep.mubr.f32.mxu0 0.0
    %415 = vmatmul.mubr.f32.gmra.mxu0 %v343
    %v416 = vpop.f32.mrf.mxu0
    %v417 = vadd.f32 0.0, %v416
    %v418 = vpop.f32.mrf.mxu0
    %419 = vmatprep.mubr.f32.mxu0 0.0
    %420 = vmatmul.mubr.f32.gmra.mxu0 %v345
    %v421 = vpop.f32.mrf.mxu0
    %v422 = vadd.f32 0.0, %v421
    %v423 = vpop.f32.mrf.mxu0
    %424 = vdwg.mxu0
    %v425 = vadd.f32 %v327, %v417
    %v426 = vadd.f32 %v332, %v422
    %s427 = sadd.s32 %s147, 1
    %s428 = smul.u32 %s427, 24
    %s429 = scalar_lea.vmem %s0, %s428
    %v430 = vld [vmem:[%s429] sm:$0xff]
    %v431 = vld [vmem:[%s429 + $0x8] sm:$0xff]
    %v432 = vld [vmem:[%s429 + $0x10] sm:$0x3]
    %s433 = scalar_lea.vmem %s1, 12
    %v434 = vld [vmem:[%s433] sm:$0x7]
    %v436 = vsel %vm169, %v430, 0
    %v439 = vsel %vm169, %v431, 0
    %v442 = vsel %vm174, %v434, 0
    %444 = vmatprep.subr.mxu0 0.0
    %445 = vmatpush1.msra.mxu0 0.0
    %446 = vmatprep.subr.mxu0 0.0
    %447 = vmatpush1.msra.mxu0 0.0
    %448 = vmatprep.subr.mxu0 0.0
    %449 = vmatpush1.msra.mxu0 0.0
    %450 = vmatprep.subr.mxu0 0.0
    %451 = vmatpush1.msra.mxu0 0.0
    %452 = vmatprep.subr.mxu0 0.0
    %453 = vmatpush1.msra.mxu0 0.0
    %454 = vmatprep.subr.mxu0 0.0
    %455 = vmatpush1.msra.mxu0 0.0
    %456 = vmatprep.subr.mxu0 0.0
    %457 = vmatpush1.msra.mxu0 0.0
    %458 = vmatprep.subr.mxu0 0.0
    %459 = vmatpush1.msra.mxu0 0.0
    %460 = vmatprep.subr.mxu0 0.0
    %461 = vmatpush1.msra.mxu0 0.0
    %462 = vmatprep.subr.mxu0 0.0
    %463 = vmatpush1.msra.mxu0 0.0
    %464 = vmatprep.subr.mxu0 0.0
    %465 = vmatpush1.msra.mxu0 0.0
    %466 = vmatprep.subr.mxu0 0.0
    %467 = vmatpush1.msra.mxu0 0.0
    %468 = vmatprep.subr.mxu0 0.0
    %469 = vmatpush1.msra.mxu0 0.0
    %470 = vmatprep.subr.mxu0 0.0
    %471 = vmatpush1.msra.mxu0 0.0
    %472 = vmatprep.subr.mxu0 0.0
    %473 = vmatpush1.msra.mxu0 0.0
    %474 = vmatprep.subr.mxu0 0.0
    %475 = vmatpush1.msra.mxu0 %v442
    %476 = vmatprep.subr.mxu0 0.0
    %477 = vmatpush2.msra.mxu0 0.0
    %478 = vmatprep.subr.mxu0 0.0
    %479 = vmatpush2.msra.mxu0 0.0
    %480 = vmatprep.subr.mxu0 0.0
    %481 = vmatpush2.msra.mxu0 0.0
    %482 = vmatprep.subr.mxu0 0.0
    %483 = vmatpush2.msra.mxu0 0.0
    %484 = vmatprep.subr.mxu0 0.0
    %485 = vmatpush2.msra.mxu0 0.0
    %486 = vmatprep.subr.mxu0 0.0
    %487 = vmatpush2.msra.mxu0 0.0
    %488 = vmatprep.subr.mxu0 0.0
    %489 = vmatpush2.msra.mxu0 0.0
    %490 = vmatprep.subr.mxu0 0.0
    %491 = vmatpush2.msra.mxu0 0.0
    %492 = vmatprep.subr.mxu0 0.0
    %493 = vmatpush2.msra.mxu0 0.0
    %494 = vmatprep.subr.mxu0 0.0
    %495 = vmatpush2.msra.mxu0 0.0
    %496 = vmatprep.subr.mxu0 0.0
    %497 = vmatpush2.msra.mxu0 0.0
    %498 = vmatprep.subr.mxu0 0.0
    %499 = vmatpush2.msra.mxu0 0.0
    %500 = vmatprep.subr.mxu0 0.0
    %501 = vmatpush2.msra.mxu0 0.0
    %502 = vmatprep.subr.mxu0 0.0
    %503 = vmatpush2.msra.mxu0 0.0
    %504 = vmatprep.subr.mxu0 0.0
    %505 = vmatpush2.msra.mxu0 0.0
    %506 = vmatprep.subr.mxu0 0.0
    %507 = vmatpush2.msra.mxu0 0.0
    %508 = vmatprep.mubr.f32.mxu0 0.0
    %509 = vmatmul.mubr.f32.gmra.mxu0 %v436
    %v510 = vpop.f32.mrf.mxu0
    %v511 = vadd.f32 0.0, %v510
    %v512 = vpop.f32.mrf.mxu0
    %513 = vmatprep.mubr.f32.mxu0 0.0
    %514 = vmatmul.mubr.f32.gmra.mxu0 %v439
    %v515 = vpop.f32.mrf.mxu0
    %v516 = vadd.f32 0.0, %v515
    %v517 = vpop.f32.mrf.mxu0
    %518 = vdwg.mxu0
    %v519 = vadd.f32 %v425, %v511
    %v520 = vadd.f32 %v426, %v516
    %s521 = scalar_lea.vmem %s1, 16
    %v522 = vld [vmem:[%s521] sm:$0x7]
    %v524 = vrot.slane %v430, 1
    %v525 = vrot.slane %v431, 1
    %v526 = vsel %vm163, %v524, %v525
    %v527 = vrot.slane %v432, 1
    %v528 = vsel %vm163, %v525, %v527
    %v529 = vsel %vm169, %v526, 0
    %v531 = vsel %vm169, %v528, 0
    %v534 = vsel %vm174, %v522, 0
    %536 = vmatprep.subr.mxu0 0.0
    %537 = vmatpush1.msra.mxu0 0.0
    %538 = vmatprep.subr.mxu0 0.0
    %539 = vmatpush1.msra.mxu0 0.0
    %540 = vmatprep.subr.mxu0 0.0
    %541 = vmatpush1.msra.mxu0 0.0
    %542 = vmatprep.subr.mxu0 0.0
    %543 = vmatpush1.msra.mxu0 0.0
    %544 = vmatprep.subr.mxu0 0.0
    %545 = vmatpush1.msra.mxu0 0.0
    %546 = vmatprep.subr.mxu0 0.0
    %547 = vmatpush1.msra.mxu0 0.0
    %548 = vmatprep.subr.mxu0 0.0
    %549 = vmatpush1.msra.mxu0 0.0
    %550 = vmatprep.subr.mxu0 0.0
    %551 = vmatpush1.msra.mxu0 0.0
    %552 = vmatprep.subr.mxu0 0.0
    %553 = vmatpush1.msra.mxu0 0.0
    %554 = vmatprep.subr.mxu0 0.0
    %555 = vmatpush1.msra.mxu0 0.0
    %556 = vmatprep.subr.mxu0 0.0
    %557 = vmatpush1.msra.mxu0 0.0
    %558 = vmatprep.subr.mxu0 0.0
    %559 = vmatpush1.msra.mxu0 0.0
    %560 = vmatprep.subr.mxu0 0.0
    %561 = vmatpush1.msra.mxu0 0.0
    %562 = vmatprep.subr.mxu0 0.0
    %563 = vmatpush1.msra.mxu0 0.0
    %564 = vmatprep.subr.mxu0 0.0
    %565 = vmatpush1.msra.mxu0 0.0
    %566 = vmatprep.subr.mxu0 0.0
    %567 = vmatpush1.msra.mxu0 %v534
    %568 = vmatprep.subr.mxu0 0.0
    %569 = vmatpush2.msra.mxu0 0.0
    %570 = vmatprep.subr.mxu0 0.0
    %571 = vmatpush2.msra.mxu0 0.0
    %572 = vmatprep.subr.mxu0 0.0
    %573 = vmatpush2.msra.mxu0 0.0
    %574 = vmatprep.subr.mxu0 0.0
    %575 = vmatpush2.msra.mxu0 0.0
    %576 = vmatprep.subr.mxu0 0.0
    %577 = vmatpush2.msra.mxu0 0.0
    %578 = vmatprep.subr.mxu0 0.0
    %579 = vmatpush2.msra.mxu0 0.0
    %580 = vmatprep.subr.mxu0 0.0
    %581 = vmatpush2.msra.mxu0 0.0
    %582 = vmatprep.subr.mxu0 0.0
    %583 = vmatpush2.msra.mxu0 0.0
    %584 = vmatprep.subr.mxu0 0.0
    %585 = vmatpush2.msra.mxu0 0.0
    %586 = vmatprep.subr.mxu0 0.0
    %587 = vmatpush2.msra.mxu0 0.0
    %588 = vmatprep.subr.mxu0 0.0
    %589 = vmatpush2.msra.mxu0 0.0
    %590 = vmatprep.subr.mxu0 0.0
    %591 = vmatpush2.msra.mxu0 0.0
    %592 = vmatprep.subr.mxu0 0.0
    %593 = vmatpush2.msra.mxu0 0.0
    %594 = vmatprep.subr.mxu0 0.0
    %595 = vmatpush2.msra.mxu0 0.0
    %596 = vmatprep.subr.mxu0 0.0
    %597 = vmatpush2.msra.mxu0 0.0
    %598 = vmatprep.subr.mxu0 0.0
    %599 = vmatpush2.msra.mxu0 0.0
    %600 = vmatprep.mubr.f32.mxu0 0.0
    %601 = vmatmul.mubr.f32.gmra.mxu0 %v529
    %v602 = vpop.f32.mrf.mxu0
    %v603 = vadd.f32 0.0, %v602
    %v604 = vpop.f32.mrf.mxu0
    %605 = vmatprep.mubr.f32.mxu0 0.0
    %606 = vmatmul.mubr.f32.gmra.mxu0 %v531
    %v607 = vpop.f32.mrf.mxu0
    %v608 = vadd.f32 0.0, %v607
    %v609 = vpop.f32.mrf.mxu0
    %610 = vdwg.mxu0
    %v611 = vadd.f32 %v519, %v603
    %v612 = vadd.f32 %v520, %v608
    %s613 = scalar_lea.vmem %s1, 20
    %v614 = vld [vmem:[%s613] sm:$0x7]
    %v615 = vrot.slane %v430, 2
    %v616 = vrot.slane %v431, 2
    %v617 = vsel %vm337, %v615, %v616
    %v618 = vrot.slane %v432, 2
    %v619 = vsel %vm337, %v616, %v618
    %v620 = vsel %vm169, %v617, 0
    %v622 = vsel %vm169, %v619, 0
    %v625 = vsel %vm174, %v614, 0
    %627 = vmatprep.subr.mxu0 0.0
    %628 = vmatpush1.msra.mxu0 0.0
    %629 = vmatprep.subr.mxu0 0.0
    %630 = vmatpush1.msra.mxu0 0.0
    %631 = vmatprep.subr.mxu0 0.0
    %632 = vmatpush1.msra.mxu0 0.0
    %633 = vmatprep.subr.mxu0 0.0
    %634 = vmatpush1.msra.mxu0 0.0
    %635 = vmatprep.subr.mxu0 0.0
    %636 = vmatpush1.msra.mxu0 0.0
    %637 = vmatprep.subr.mxu0 0.0
    %638 = vmatpush1.msra.mxu0 0.0
    %639 = vmatprep.subr.mxu0 0.0
    %640 = vmatpush1.msra.mxu0 0.0
    %641 = vmatprep.subr.mxu0 0.0
    %642 = vmatpush1.msra.mxu0 0.0
    %643 = vmatprep.subr.mxu0 0.0
    %644 = vmatpush1.msra.mxu0 0.0
    %645 = vmatprep.subr.mxu0 0.0
    %646 = vmatpush1.msra.mxu0 0.0
    %647 = vmatprep.subr.mxu0 0.0
    %648 = vmatpush1.msra.mxu0 0.0
    %649 = vmatprep.subr.mxu0 0.0
    %650 = vmatpush1.msra.mxu0 0.0
    %651 = vmatprep.subr.mxu0 0.0
    %652 = vmatpush1.msra.mxu0 0.0
    %653 = vmatprep.subr.mxu0 0.0
    %654 = vmatpush1.msra.mxu0 0.0
    %655 = vmatprep.subr.mxu0 0.0
    %656 = vmatpush1.msra.mxu0 0.0
    %657 = vmatprep.subr.mxu0 0.0
    %658 = vmatpush1.msra.mxu0 %v625
    %659 = vmatprep.subr.mxu0 0.0
    %660 = vmatpush2.msra.mxu0 0.0
    %661 = vmatprep.subr.mxu0 0.0
    %662 = vmatpush2.msra.mxu0 0.0
    %663 = vmatprep.subr.mxu0 0.0
    %664 = vmatpush2.msra.mxu0 0.0
    %665 = vmatprep.subr.mxu0 0.0
    %666 = vmatpush2.msra.mxu0 0.0
    %667 = vmatprep.subr.mxu0 0.0
    %668 = vmatpush2.msra.mxu0 0.0
    %669 = vmatprep.subr.mxu0 0.0
    %670 = vmatpush2.msra.mxu0 0.0
    %671 = vmatprep.subr.mxu0 0.0
    %672 = vmatpush2.msra.mxu0 0.0
    %673 = vmatprep.subr.mxu0 0.0
    %674 = vmatpush2.msra.mxu0 0.0
    %675 = vmatprep.subr.mxu0 0.0
    %676 = vmatpush2.msra.mxu0 0.0
    %677 = vmatprep.subr.mxu0 0.0
    %678 = vmatpush2.msra.mxu0 0.0
    %679 = vmatprep.subr.mxu0 0.0
    %680 = vmatpush2.msra.mxu0 0.0
    %681 = vmatprep.subr.mxu0 0.0
    %682 = vmatpush2.msra.mxu0 0.0
    %683 = vmatprep.subr.mxu0 0.0
    %684 = vmatpush2.msra.mxu0 0.0
    %685 = vmatprep.subr.mxu0 0.0
    %686 = vmatpush2.msra.mxu0 0.0
    %687 = vmatprep.subr.mxu0 0.0
    %688 = vmatpush2.msra.mxu0 0.0
    %689 = vmatprep.subr.mxu0 0.0
    %690 = vmatpush2.msra.mxu0 0.0
    %691 = vmatprep.mubr.f32.mxu0 0.0
    %692 = vmatmul.mubr.f32.gmra.mxu0 %v620
    %v693 = vpop.f32.mrf.mxu0
    %v694 = vadd.f32 0.0, %v693
    %v695 = vpop.f32.mrf.mxu0
    %696 = vmatprep.mubr.f32.mxu0 0.0
    %697 = vmatmul.mubr.f32.gmra.mxu0 %v622
    %v698 = vpop.f32.mrf.mxu0
    %v699 = vadd.f32 0.0, %v698
    %v700 = vpop.f32.mrf.mxu0
    %701 = vdwg.mxu0
    %v702 = vadd.f32 %v611, %v694
    %v703 = vadd.f32 %v612, %v699
    %s704 = sadd.s32 %s147, 2
    %s705 = smul.u32 %s704, 24
    %s706 = scalar_lea.vmem %s0, %s705
    %v707 = vld [vmem:[%s706] sm:$0xff]
    %v708 = vld [vmem:[%s706 + $0x8] sm:$0xff]
    %v709 = vld [vmem:[%s706 + $0x10] sm:$0x3]
    %s710 = scalar_lea.vmem %s1, 24
    %v711 = vld [vmem:[%s710] sm:$0x7]
    %v713 = vsel %vm169, %v707, 0
    %v716 = vsel %vm169, %v708, 0
    %v719 = vsel %vm174, %v711, 0
    %721 = vmatprep.subr.mxu0 0.0
    %722 = vmatpush1.msra.mxu0 0.0
    %723 = vmatprep.subr.mxu0 0.0
    %724 = vmatpush1.msra.mxu0 0.0
    %725 = vmatprep.subr.mxu0 0.0
    %726 = vmatpush1.msra.mxu0 0.0
    %727 = vmatprep.subr.mxu0 0.0
    %728 = vmatpush1.msra.mxu0 0.0
    %729 = vmatprep.subr.mxu0 0.0
    %730 = vmatpush1.msra.mxu0 0.0
    %731 = vmatprep.subr.mxu0 0.0
    %732 = vmatpush1.msra.mxu0 0.0
    %733 = vmatprep.subr.mxu0 0.0
    %734 = vmatpush1.msra.mxu0 0.0
    %735 = vmatprep.subr.mxu0 0.0
    %736 = vmatpush1.msra.mxu0 0.0
    %737 = vmatprep.subr.mxu0 0.0
    %738 = vmatpush1.msra.mxu0 0.0
    %739 = vmatprep.subr.mxu0 0.0
    %740 = vmatpush1.msra.mxu0 0.0
    %741 = vmatprep.subr.mxu0 0.0
    %742 = vmatpush1.msra.mxu0 0.0
    %743 = vmatprep.subr.mxu0 0.0
    %744 = vmatpush1.msra.mxu0 0.0
    %745 = vmatprep.subr.mxu0 0.0
    %746 = vmatpush1.msra.mxu0 0.0
    %747 = vmatprep.subr.mxu0 0.0
    %748 = vmatpush1.msra.mxu0 0.0
    %749 = vmatprep.subr.mxu0 0.0
    %750 = vmatpush1.msra.mxu0 0.0
    %751 = vmatprep.subr.mxu0 0.0
    %752 = vmatpush1.msra.mxu0 %v719
    %753 = vmatprep.subr.mxu0 0.0
    %754 = vmatpush2.msra.mxu0 0.0
    %755 = vmatprep.subr.mxu0 0.0
    %756 = vmatpush2.msra.mxu0 0.0
    %757 = vmatprep.subr.mxu0 0.0
    %758 = vmatpush2.msra.mxu0 0.0
    %759 = vmatprep.subr.mxu0 0.0
    %760 = vmatpush2.msra.mxu0 0.0
    %761 = vmatprep.subr.mxu0 0.0
    %762 = vmatpush2.msra.mxu0 0.0
    %763 = vmatprep.subr.mxu0 0.0
    %764 = vmatpush2.msra.mxu0 0.0
    %765 = vmatprep.subr.mxu0 0.0
    %766 = vmatpush2.msra.mxu0 0.0
    %767 = vmatprep.subr.mxu0 0.0
    %768 = vmatpush2.msra.mxu0 0.0
    %769 = vmatprep.subr.mxu0 0.0
    %770 = vmatpush2.msra.mxu0 0.0
    %771 = vmatprep.subr.mxu0 0.0
    %772 = vmatpush2.msra.mxu0 0.0
    %773 = vmatprep.subr.mxu0 0.0
    %774 = vmatpush2.msra.mxu0 0.0
    %775 = vmatprep.subr.mxu0 0.0
    %776 = vmatpush2.msra.mxu0 0.0
    %777 = vmatprep.subr.mxu0 0.0
    %778 = vmatpush2.msra.mxu0 0.0
    %779 = vmatprep.subr.mxu0 0.0
    %780 = vmatpush2.msra.mxu0 0.0
    %781 = vmatprep.subr.mxu0 0.0
    %782 = vmatpush2.msra.mxu0 0.0
    %783 = vmatprep.subr.mxu0 0.0
    %784 = vmatpush2.msra.mxu0 0.0
    %785 = vmatprep.mubr.f32.mxu0 0.0
    %786 = vmatmul.mubr.f32.gmra.mxu0 %v713
    %v787 = vpop.f32.mrf.mxu0
    %v788 = vadd.f32 0.0, %v787
    %v789 = vpop.f32.mrf.mxu0
    %790 = vmatprep.mubr.f32.mxu0 0.0
    %791 = vmatmul.mubr.f32.gmra.mxu0 %v716
    %v792 = vpop.f32.mrf.mxu0
    %v793 = vadd.f32 0.0, %v792
    %v794 = vpop.f32.mrf.mxu0
    %795 = vdwg.mxu0
    %v796 = vadd.f32 %v702, %v788
    %v797 = vadd.f32 %v703, %v793
    %s798 = scalar_lea.vmem %s1, 28
    %v799 = vld [vmem:[%s798] sm:$0x7]
    %v801 = vrot.slane %v707, 1
    %v802 = vrot.slane %v708, 1
    %v803 = vsel %vm163, %v801, %v802
    %v804 = vrot.slane %v709, 1
    %v805 = vsel %vm163, %v802, %v804
    %v806 = vsel %vm169, %v803, 0
    %v808 = vsel %vm169, %v805, 0
    %v811 = vsel %vm174, %v799, 0
    %813 = vmatprep.subr.mxu0 0.0
    %814 = vmatpush1.msra.mxu0 0.0
    %815 = vmatprep.subr.mxu0 0.0
    %816 = vmatpush1.msra.mxu0 0.0
    %817 = vmatprep.subr.mxu0 0.0
    %818 = vmatpush1.msra.mxu0 0.0
    %819 = vmatprep.subr.mxu0 0.0
    %820 = vmatpush1.msra.mxu0 0.0
    %821 = vmatprep.subr.mxu0 0.0
    %822 = vmatpush1.msra.mxu0 0.0
    %823 = vmatprep.subr.mxu0 0.0
    %824 = vmatpush1.msra.mxu0 0.0
    %825 = vmatprep.subr.mxu0 0.0
    %826 = vmatpush1.msra.mxu0 0.0
    %827 = vmatprep.subr.mxu0 0.0
    %828 = vmatpush1.msra.mxu0 0.0
    %829 = vmatprep.subr.mxu0 0.0
    %830 = vmatpush1.msra.mxu0 0.0
    %831 = vmatprep.subr.mxu0 0.0
    %832 = vmatpush1.msra.mxu0 0.0
    %833 = vmatprep.subr.mxu0 0.0
    %834 = vmatpush1.msra.mxu0 0.0
    %835 = vmatprep.subr.mxu0 0.0
    %836 = vmatpush1.msra.mxu0 0.0
    %837 = vmatprep.subr.mxu0 0.0
    %838 = vmatpush1.msra.mxu0 0.0
    %839 = vmatprep.subr.mxu0 0.0
    %840 = vmatpush1.msra.mxu0 0.0
    %841 = vmatprep.subr.mxu0 0.0
    %842 = vmatpush1.msra.mxu0 0.0
    %843 = vmatprep.subr.mxu0 0.0
    %844 = vmatpush1.msra.mxu0 %v811
    %845 = vmatprep.subr.mxu0 0.0
    %846 = vmatpush2.msra.mxu0 0.0
    %847 = vmatprep.subr.mxu0 0.0
    %848 = vmatpush2.msra.mxu0 0.0
    %849 = vmatprep.subr.mxu0 0.0
    %850 = vmatpush2.msra.mxu0 0.0
    %851 = vmatprep.subr.mxu0 0.0
    %852 = vmatpush2.msra.mxu0 0.0
    %853 = vmatprep.subr.mxu0 0.0
    %854 = vmatpush2.msra.mxu0 0.0
    %855 = vmatprep.subr.mxu0 0.0
    %856 = vmatpush2.msra.mxu0 0.0
    %857 = vmatprep.subr.mxu0 0.0
    %858 = vmatpush2.msra.mxu0 0.0
    %859 = vmatprep.subr.mxu0 0.0
    %860 = vmatpush2.msra.mxu0 0.0
    %861 = vmatprep.subr.mxu0 0.0
    %862 = vmatpush2.msra.mxu0 0.0
    %863 = vmatprep.subr.mxu0 0.0
    %864 = vmatpush2.msra.mxu0 0.0
    %865 = vmatprep.subr.mxu0 0.0
    %866 = vmatpush2.msra.mxu0 0.0
    %867 = vmatprep.subr.mxu0 0.0
    %868 = vmatpush2.msra.mxu0 0.0
    %869 = vmatprep.subr.mxu0 0.0
    %870 = vmatpush2.msra.mxu0 0.0
    %871 = vmatprep.subr.mxu0 0.0
    %872 = vmatpush2.msra.mxu0 0.0
    %873 = vmatprep.subr.mxu0 0.0
    %874 = vmatpush2.msra.mxu0 0.0
    %875 = vmatprep.subr.mxu0 0.0
    %876 = vmatpush2.msra.mxu0 0.0
    %877 = vmatprep.mubr.f32.mxu0 0.0
    %878 = vmatmul.mubr.f32.gmra.mxu0 %v806
    %v879 = vpop.f32.mrf.mxu0
    %v880 = vadd.f32 0.0, %v879
    %v881 = vpop.f32.mrf.mxu0
    %882 = vmatprep.mubr.f32.mxu0 0.0
    %883 = vmatmul.mubr.f32.gmra.mxu0 %v808
    %v884 = vpop.f32.mrf.mxu0
    %v885 = vadd.f32 0.0, %v884
    %v886 = vpop.f32.mrf.mxu0
    %887 = vdwg.mxu0
    %v888 = vadd.f32 %v796, %v880
    %v889 = vadd.f32 %v797, %v885
    %s890 = scalar_lea.vmem %s1, 32
    %v891 = vld [vmem:[%s890] sm:$0x7]
    %v892 = vrot.slane %v707, 2
    %v893 = vrot.slane %v708, 2
    %v894 = vsel %vm337, %v892, %v893
    %v895 = vrot.slane %v709, 2
    %v896 = vsel %vm337, %v893, %v895
    %v897 = vsel %vm169, %v894, 0
    %v899 = vsel %vm169, %v896, 0
    %v902 = vsel %vm174, %v891, 0
    %904 = vmatprep.subr.mxu0 0.0
    %905 = vmatpush1.msra.mxu0 0.0
    %906 = vmatprep.subr.mxu0 0.0
    %907 = vmatpush1.msra.mxu0 0.0
    %908 = vmatprep.subr.mxu0 0.0
    %909 = vmatpush1.msra.mxu0 0.0
    %910 = vmatprep.subr.mxu0 0.0
    %911 = vmatpush1.msra.mxu0 0.0
    %912 = vmatprep.subr.mxu0 0.0
    %913 = vmatpush1.msra.mxu0 0.0
    %914 = vmatprep.subr.mxu0 0.0
    %915 = vmatpush1.msra.mxu0 0.0
    %916 = vmatprep.subr.mxu0 0.0
    %917 = vmatpush1.msra.mxu0 0.0
    %918 = vmatprep.subr.mxu0 0.0
    %919 = vmatpush1.msra.mxu0 0.0
    %920 = vmatprep.subr.mxu0 0.0
    %921 = vmatpush1.msra.mxu0 0.0
    %922 = vmatprep.subr.mxu0 0.0
    %923 = vmatpush1.msra.mxu0 0.0
    %924 = vmatprep.subr.mxu0 0.0
    %925 = vmatpush1.msra.mxu0 0.0
    %926 = vmatprep.subr.mxu0 0.0
    %927 = vmatpush1.msra.mxu0 0.0
    %928 = vmatprep.subr.mxu0 0.0
    %929 = vmatpush1.msra.mxu0 0.0
    %930 = vmatprep.subr.mxu0 0.0
    %931 = vmatpush1.msra.mxu0 0.0
    %932 = vmatprep.subr.mxu0 0.0
    %933 = vmatpush1.msra.mxu0 0.0
    %934 = vmatprep.subr.mxu0 0.0
    %935 = vmatpush1.msra.mxu0 %v902
    %936 = vmatprep.subr.mxu0 0.0
    %937 = vmatpush2.msra.mxu0 0.0
    %938 = vmatprep.subr.mxu0 0.0
    %939 = vmatpush2.msra.mxu0 0.0
    %940 = vmatprep.subr.mxu0 0.0
    %941 = vmatpush2.msra.mxu0 0.0
    %942 = vmatprep.subr.mxu0 0.0
    %943 = vmatpush2.msra.mxu0 0.0
    %944 = vmatprep.subr.mxu0 0.0
    %945 = vmatpush2.msra.mxu0 0.0
    %946 = vmatprep.subr.mxu0 0.0
    %947 = vmatpush2.msra.mxu0 0.0
    %948 = vmatprep.subr.mxu0 0.0
    %949 = vmatpush2.msra.mxu0 0.0
    %950 = vmatprep.subr.mxu0 0.0
    %951 = vmatpush2.msra.mxu0 0.0
    %952 = vmatprep.subr.mxu0 0.0
    %953 = vmatpush2.msra.mxu0 0.0
    %954 = vmatprep.subr.mxu0 0.0
    %955 = vmatpush2.msra.mxu0 0.0
    %956 = vmatprep.subr.mxu0 0.0
    %957 = vmatpush2.msra.mxu0 0.0
    %958 = vmatprep.subr.mxu0 0.0
    %959 = vmatpush2.msra.mxu0 0.0
    %960 = vmatprep.subr.mxu0 0.0
    %961 = vmatpush2.msra.mxu0 0.0
    %962 = vmatprep.subr.mxu0 0.0
    %963 = vmatpush2.msra.mxu0 0.0
    %964 = vmatprep.subr.mxu0 0.0
    %965 = vmatpush2.msra.mxu0 0.0
    %966 = vmatprep.subr.mxu0 0.0
    %967 = vmatpush2.msra.mxu0 0.0
    %968 = vmatprep.mubr.f32.mxu0 0.0
    %969 = vmatmul.mubr.f32.gmra.mxu0 %v897
    %v970 = vpop.f32.mrf.mxu0
    %v971 = vadd.f32 0.0, %v970
    %v972 = vpop.f32.mrf.mxu0
    %973 = vmatprep.mubr.f32.mxu0 0.0
    %974 = vmatmul.mubr.f32.gmra.mxu0 %v899
    %v975 = vpop.f32.mrf.mxu0
    %v976 = vadd.f32 0.0, %v975
    %v977 = vpop.f32.mrf.mxu0
    %978 = vdwg.mxu0
    %v979 = vadd.f32 %v888, %v971
    %v980 = vadd.f32 %v889, %v976
    %v981 = vld [vmem:[%s2] sm:$0x1]
    %v983 = vlaneseq
    %v984 = vshrl.u32 %v983, 7
    %v985 = vsub.s32 0, %v984
    %v986 = vrot.slane %v981, %v985
    %v988 = vadd.f32 %v979, %v986
    %v989 = vadd.f32 %v980, %v986
    %v990 = vmax.f32 %v988, 0.0
    %v991 = vmax.f32 %v989, 0.0
    %v992 = vld [vmem:[%s3] sm:$0xff]
    %v993 = vld [vmem:[%s3 + $0x8] sm:$0xff]
    %v994 = vld [vmem:[%s3 + $0x10] sm:$0xff]
    %v995 = vld [vmem:[%s3 + $0x18] sm:$0xff]
    %v996 = vld [vmem:[%s4] sm:$0x1]
    %v998 = vlaneseq
    %v999 = vshrl.u32 %v998, 7
    %v1000 = vsub.s32 0, %v999
    %v1001 = vrot.slane %v996, %v1000
    %v1004 = vsel %vm50, %v990, 0
    %v1007 = vsel %vm50, %v991, 0
    %1009 = vmatprep.subr.mxu0 0.0
    %1010 = vmatpush1.msra.mxu0 0.0
    %1011 = vmatprep.subr.mxu0 0.0
    %1012 = vmatpush1.msra.mxu0 0.0
    %1013 = vmatprep.subr.mxu0 0.0
    %1014 = vmatpush1.msra.mxu0 0.0
    %1015 = vmatprep.subr.mxu0 0.0
    %1016 = vmatpush1.msra.mxu0 0.0
    %1017 = vmatprep.subr.mxu0 0.0
    %1018 = vmatpush1.msra.mxu0 0.0
    %1019 = vmatprep.subr.mxu0 0.0
    %1020 = vmatpush1.msra.mxu0 0.0
    %1021 = vmatprep.subr.mxu0 0.0
    %1022 = vmatpush1.msra.mxu0 0.0
    %1023 = vmatprep.subr.mxu0 0.0
    %1024 = vmatpush1.msra.mxu0 0.0
    %1025 = vmatprep.subr.mxu0 0.0
    %1026 = vmatpush1.msra.mxu0 0.0
    %1027 = vmatprep.subr.mxu0 0.0
    %1028 = vmatpush1.msra.mxu0 0.0
    %1029 = vmatprep.subr.mxu0 0.0
    %1030 = vmatpush1.msra.mxu0 0.0
    %1031 = vmatprep.subr.mxu0 0.0
    %1032 = vmatpush1.msra.mxu0 0.0
    %1033 = vmatprep.subr.mxu0 0.0
    %1034 = vmatpush1.msra.mxu0 %v995
    %1035 = vmatprep.subr.mxu0 0.0
    %1036 = vmatpush1.msra.mxu0 %v994
    %1037 = vmatprep.subr.mxu0 0.0
    %1038 = vmatpush1.msra.mxu0 %v993
    %1039 = vmatprep.subr.mxu0 0.0
    %1040 = vmatpush1.msra.mxu0 %v992
    %1041 = vmatprep.subr.mxu0 0.0
    %1042 = vmatpush2.msra.mxu0 0.0
    %1043 = vmatprep.subr.mxu0 0.0
    %1044 = vmatpush2.msra.mxu0 0.0
    %1045 = vmatprep.subr.mxu0 0.0
    %1046 = vmatpush2.msra.mxu0 0.0
    %1047 = vmatprep.subr.mxu0 0.0
    %1048 = vmatpush2.msra.mxu0 0.0
    %1049 = vmatprep.subr.mxu0 0.0
    %1050 = vmatpush2.msra.mxu0 0.0
    %1051 = vmatprep.subr.mxu0 0.0
    %1052 = vmatpush2.msra.mxu0 0.0
    %1053 = vmatprep.subr.mxu0 0.0
    %1054 = vmatpush2.msra.mxu0 0.0
    %1055 = vmatprep.subr.mxu0 0.0
    %1056 = vmatpush2.msra.mxu0 0.0
    %1057 = vmatprep.subr.mxu0 0.0
    %1058 = vmatpush2.msra.mxu0 0.0
    %1059 = vmatprep.subr.mxu0 0.0
    %1060 = vmatpush2.msra.mxu0 0.0
    %1061 = vmatprep.subr.mxu0 0.0
    %1062 = vmatpush2.msra.mxu0 0.0
    %1063 = vmatprep.subr.mxu0 0.0
    %1064 = vmatpush2.msra.mxu0 0.0
    %1065 = vmatprep.subr.mxu0 0.0
    %1066 = vmatpush2.msra.mxu0 0.0
    %1067 = vmatprep.subr.mxu0 0.0
    %1068 = vmatpush2.msra.mxu0 0.0
    %1069 = vmatprep.subr.mxu0 0.0
    %1070 = vmatpush2.msra.mxu0 0.0
    %1071 = vmatprep.subr.mxu0 0.0
    %1072 = vmatpush2.msra.mxu0 0.0
    %1073 = vmatprep.mubr.f32.mxu0 0.0
    %1074 = vmatmul.mubr.f32.gmra.mxu0 %v1004
    %v1075 = vpop.f32.mrf.mxu0
    %v1076 = vadd.f32 %v1001, %v1075
    %v1077 = vpop.f32.mrf.mxu0
    %1078 = vmatprep.mubr.f32.mxu0 0.0
    %1079 = vmatmul.mubr.f32.gmra.mxu0 %v1007
    %v1080 = vpop.f32.mrf.mxu0
    %v1081 = vadd.f32 %v1001, %v1080
    %v1082 = vpop.f32.mrf.mxu0
    %1083 = vdwg.mxu0
    %s1084 = scalar_lea.vmem [#allocation2], %s428
    %1085 = vst.msk [vmem:[%s1084 + $0x1] sm:$0xff] %vm50, %v1076
    %1086 = vst.msk [vmem:[%s1084 + $0x9] sm:$0xff] %vm50, %v1081
  $region66: #{model_forward.1} parent=0 // loop_footer
    %s151 = sadd.s32 1, %s147
  $region67: #{model_forward.1} parent=0 // loop_footer_branch
    %146 = sbr.rel target = $region63
  $region68: #{model_forward.1} parent=0 // loop_exit
    _
  %v1087 = vlaneseq
  %v1088 = vshrl.u32 %v1087, 7
  %v1089 = vlaneseq
  %v1090 = vand.u32 %v1089, 127
  %v1091 = vmul.u32 %v1088, 2
  %vm1092 = vcmp.eq.s32.totalorder %v1090, %v1091
  %v1093 = vsel %vm1092, 1, 0
  %v1094 = vcvt.s32.f32 %v1093
  loop: start=0, step=1, limit=8
  $region69: #{model_forward.1} parent=0 // loop_pre_header
    _
  $region70: #{model_forward.1} parent=0 // loop_header
    %s1096 = sphi 0, %s1100
    %p1097 = scmp.ge.s32.totalorder %s1096, 8
  $region71: #{model_forward.1} parent=0 // loop_header_branch
    %1099 = sbr.rel (%p1097) target = $region75
  $region72: #{model_forward.1} parent=0 // loop_body
    %s1101 = smul.u32 %s1096, 2
    %s1102 = smul.u32 %s1101, 24
    %s1103 = scalar_lea.vmem [#allocation2], %s1102
    %v1104 = vld [vmem:[%s1103] sm:$0xff]
    %v1105 = vld [vmem:[%s1103 + $0x8] sm:$0xff]
    %v1106 = vld [vmem:[%s1103 + $0x10] sm:$0x3]
    %v1107 = vld [vmem:[%s5] sm:$0xff]
    %v1108 = vld [vmem:[%s5 + $0x8] sm:$0xff]
    %v1109 = vld [vmem:[%s5 + $0x10] sm:$0xff]
    %v1110 = vld [vmem:[%s5 + $0x18] sm:$0xff]
    %s1111 = scalar_lea.vmem %s5, 32
    %v1112 = vld [vmem:[%s1111] sm:$0xff]
    %v1113 = vld [vmem:[%s1111 + $0x8] sm:$0xff]
    %v1114 = vld [vmem:[%s1111 + $0x10] sm:$0xff]
    %v1115 = vld [vmem:[%s1111 + $0x18] sm:$0xff]
    %vm1119 = vcmask 1046528
    %v1120 = vrot.slane %v1104, 1
    %v1121 = vrot.slane %v1105, 1
    %v1122 = vsel %vm1119, %v1120, %v1121
    %v1123 = vrot.slane %v1106, 1
    %v1124 = vsel %vm1119, %v1121, %v1123
    %v1125 = vsel %vm50, %v1122, 0
    %v1127 = vsel %vm50, %v1124, 0
    %1129 = vmatprep.subr.mxu0 0.0
    %1130 = vmatpush1.msra.mxu0 0.0
    %1131 = vmatprep.subr.mxu0 0.0
    %1132 = vmatpush1.msra.mxu0 0.0
    %1133 = vmatprep.subr.mxu0 0.0
    %1134 = vmatpush1.msra.mxu0 0.0
    %1135 = vmatprep.subr.mxu0 0.0
    %1136 = vmatpush1.msra.mxu0 0.0
    %1137 = vmatprep.subr.mxu0 0.0
    %1138 = vmatpush1.msra.mxu0 0.0
    %1139 = vmatprep.subr.mxu0 0.0
    %1140 = vmatpush1.msra.mxu0 0.0
    %1141 = vmatprep.subr.mxu0 0.0
    %1142 = vmatpush1.msra.mxu0 0.0
    %1143 = vmatprep.subr.mxu0 0.0
    %1144 = vmatpush1.msra.mxu0 0.0
    %1145 = vmatprep.subr.mxu0 0.0
    %1146 = vmatpush1.msra.mxu0 0.0
    %1147 = vmatprep.subr.mxu0 0.0
    %1148 = vmatpush1.msra.mxu0 0.0
    %1149 = vmatprep.subr.mxu0 0.0
    %1150 = vmatpush1.msra.mxu0 0.0
    %1151 = vmatprep.subr.mxu0 0.0
    %1152 = vmatpush1.msra.mxu0 0.0
    %1153 = vmatprep.subr.mxu0 0.0
    %1154 = vmatpush1.msra.mxu0 %v1115
    %1155 = vmatprep.subr.mxu0 0.0
    %1156 = vmatpush1.msra.mxu0 %v1114
    %1157 = vmatprep.subr.mxu0 0.0
    %1158 = vmatpush1.msra.mxu0 %v1113
    %1159 = vmatprep.subr.mxu0 0.0
    %1160 = vmatpush1.msra.mxu0 %v1112
    %1161 = vmatprep.subr.mxu0 0.0
    %1162 = vmatpush2.msra.mxu0 0.0
    %1163 = vmatprep.subr.mxu0 0.0
    %1164 = vmatpush2.msra.mxu0 0.0
    %1165 = vmatprep.subr.mxu0 0.0
    %1166 = vmatpush2.msra.mxu0 0.0
    %1167 = vmatprep.subr.mxu0 0.0
    %1168 = vmatpush2.msra.mxu0 0.0
    %1169 = vmatprep.subr.mxu0 0.0
    %1170 = vmatpush2.msra.mxu0 0.0
    %1171 = vmatprep.subr.mxu0 0.0
    %1172 = vmatpush2.msra.mxu0 0.0
    %1173 = vmatprep.subr.mxu0 0.0
    %1174 = vmatpush2.msra.mxu0 0.0
    %1175 = vmatprep.subr.mxu0 0.0
    %1176 = vmatpush2.msra.mxu0 0.0
    %1177 = vmatprep.subr.mxu0 0.0
    %1178 = vmatpush2.msra.mxu0 0.0
    %1179 = vmatprep.subr.mxu0 0.0
    %1180 = vmatpush2.msra.mxu0 0.0
    %1181 = vmatprep.subr.mxu0 0.0
    %1182 = vmatpush2.msra.mxu0 0.0
    %1183 = vmatprep.subr.mxu0 0.0
    %1184 = vmatpush2.msra.mxu0 0.0
    %1185 = vmatprep.subr.mxu0 0.0
    %1186 = vmatpush2.msra.mxu0 0.0
    %1187 = vmatprep.subr.mxu0 0.0
    %1188 = vmatpush2.msra.mxu0 0.0
    %1189 = vmatprep.subr.mxu0 0.0
    %1190 = vmatpush2.msra.mxu0 0.0
    %1191 = vmatprep.subr.mxu0 0.0
    %1192 = vmatpush2.msra.mxu0 0.0
    %1193 = vmatprep.mubr.f32.mxu0 0.0
    %1194 = vmatmul.mubr.f32.gmra.mxu0 %v1125
    %v1195 = vpop.f32.mrf.mxu0
    %v1196 = vadd.f32 0.0, %v1195
    %v1197 = vpop.f32.mrf.mxu0
    %1198 = vmatprep.mubr.f32.mxu0 0.0
    %1199 = vmatmul.mubr.f32.gmra.mxu0 %v1127
    %v1200 = vpop.f32.mrf.mxu0
    %v1201 = vadd.f32 0.0, %v1200
    %v1202 = vpop.f32.mrf.mxu0
    %1203 = vdwg.mxu0
    %v1204 = vsel %vm50, %v1104, 0
    %v1206 = vsel %vm50, %v1105, 0
    %1208 = vmatprep.subr.mxu0 0.0
    %1209 = vmatpush1.msra.mxu0 0.0
    %1210 = vmatprep.subr.mxu0 0.0
    %1211 = vmatpush1.msra.mxu0 0.0
    %1212 = vmatprep.subr.mxu0 0.0
    %1213 = vmatpush1.msra.mxu0 0.0
    %1214 = vmatprep.subr.mxu0 0.0
    %1215 = vmatpush1.msra.mxu0 0.0
    %1216 = vmatprep.subr.mxu0 0.0
    %1217 = vmatpush1.msra.mxu0 0.0
    %1218 = vmatprep.subr.mxu0 0.0
    %1219 = vmatpush1.msra.mxu0 0.0
    %1220 = vmatprep.subr.mxu0 0.0
    %1221 = vmatpush1.msra.mxu0 0.0
    %1222 = vmatprep.subr.mxu0 0.0
    %1223 = vmatpush1.msra.mxu0 0.0
    %1224 = vmatprep.subr.mxu0 0.0
    %1225 = vmatpush1.msra.mxu0 0.0
    %1226 = vmatprep.subr.mxu0 0.0
    %1227 = vmatpush1.msra.mxu0 0.0
    %1228 = vmatprep.subr.mxu0 0.0
    %1229 = vmatpush1.msra.mxu0 0.0
    %1230 = vmatprep.subr.mxu0 0.0
    %1231 = vmatpush1.msra.mxu0 0.0
    %1232 = vmatprep.subr.mxu0 0.0
    %1233 = vmatpush1.msra.mxu0 %v1110
    %1234 = vmatprep.subr.mxu0 0.0
    %1235 = vmatpush1.msra.mxu0 %v1109
    %1236 = vmatprep.subr.mxu0 0.0
    %1237 = vmatpush1.msra.mxu0 %v1108
    %1238 = vmatprep.subr.mxu0 0.0
    %1239 = vmatpush1.msra.mxu0 %v1107
    %1240 = vmatprep.subr.mxu0 0.0
    %1241 = vmatpush2.msra.mxu0 0.0
    %1242 = vmatprep.subr.mxu0 0.0
    %1243 = vmatpush2.msra.mxu0 0.0
    %1244 = vmatprep.subr.mxu0 0.0
    %1245 = vmatpush2.msra.mxu0 0.0
    %1246 = vmatprep.subr.mxu0 0.0
    %1247 = vmatpush2.msra.mxu0 0.0
    %1248 = vmatprep.subr.mxu0 0.0
    %1249 = vmatpush2.msra.mxu0 0.0
    %1250 = vmatprep.subr.mxu0 0.0
    %1251 = vmatpush2.msra.mxu0 0.0
    %1252 = vmatprep.subr.mxu0 0.0
    %1253 = vmatpush2.msra.mxu0 0.0
    %1254 = vmatprep.subr.mxu0 0.0
    %1255 = vmatpush2.msra.mxu0 0.0
    %1256 = vmatprep.subr.mxu0 0.0
    %1257 = vmatpush2.msra.mxu0 0.0
    %1258 = vmatprep.subr.mxu0 0.0
    %1259 = vmatpush2.msra.mxu0 0.0
    %1260 = vmatprep.subr.mxu0 0.0
    %1261 = vmatpush2.msra.mxu0 0.0
    %1262 = vmatprep.subr.mxu0 0.0
    %1263 = vmatpush2.msra.mxu0 0.0
    %1264 = vmatprep.subr.mxu0 0.0
    %1265 = vmatpush2.msra.mxu0 0.0
    %1266 = vmatprep.subr.mxu0 0.0
    %1267 = vmatpush2.msra.mxu0 0.0
    %1268 = vmatprep.subr.mxu0 0.0
    %1269 = vmatpush2.msra.mxu0 0.0
    %1270 = vmatprep.subr.mxu0 0.0
    %1271 = vmatpush2.msra.mxu0 0.0
    %1272 = vmatprep.mubr.f32.mxu0 0.0
    %1273 = vmatmul.mubr.f32.gmra.mxu0 %v1204
    %v1274 = vpop.f32.mrf.mxu0
    %v1275 = vadd.f32 %v1196, %v1274
    %v1276 = vpop.f32.mrf.mxu0
    %1277 = vmatprep.mubr.f32.mxu0 0.0
    %1278 = vmatmul.mubr.f32.gmra.mxu0 %v1206
    %v1279 = vpop.f32.mrf.mxu0
    %v1280 = vadd.f32 %v1201, %v1279
    %v1281 = vpop.f32.mrf.mxu0
    %1282 = vdwg.mxu0
    %s1283 = scalar_lea.vmem %s5, 64
    %v1284 = vld [vmem:[%s1283] sm:$0xff]
    %v1285 = vld [vmem:[%s1283 + $0x8] sm:$0xff]
    %v1286 = vld [vmem:[%s1283 + $0x10] sm:$0xff]
    %v1287 = vld [vmem:[%s1283 + $0x18] sm:$0xff]
    %vm1288 = vcmask 1045504
    %v1289 = vrot.slane %v1104, 2
    %v1290 = vrot.slane %v1105, 2
    %v1291 = vsel %vm1288, %v1289, %v1290
    %v1292 = vrot.slane %v1106, 2
    %v1293 = vsel %vm1288, %v1290, %v1292
    %v1294 = vsel %vm50, %v1291, 0
    %v1296 = vsel %vm50, %v1293, 0
    %1298 = vmatprep.subr.mxu0 0.0
    %1299 = vmatpush1.msra.mxu0 0.0
    %1300 = vmatprep.subr.mxu0 0.0
    %1301 = vmatpush1.msra.mxu0 0.0
    %1302 = vmatprep.subr.mxu0 0.0
    %1303 = vmatpush1.msra.mxu0 0.0
    %1304 = vmatprep.subr.mxu0 0.0
    %1305 = vmatpush1.msra.mxu0 0.0
    %1306 = vmatprep.subr.mxu0 0.0
    %1307 = vmatpush1.msra.mxu0 0.0
    %1308 = vmatprep.subr.mxu0 0.0
    %1309 = vmatpush1.msra.mxu0 0.0
    %1310 = vmatprep.subr.mxu0 0.0
    %1311 = vmatpush1.msra.mxu0 0.0
    %1312 = vmatprep.subr.mxu0 0.0
    %1313 = vmatpush1.msra.mxu0 0.0
    %1314 = vmatprep.subr.mxu0 0.0
    %1315 = vmatpush1.msra.mxu0 0.0
    %1316 = vmatprep.subr.mxu0 0.0
    %1317 = vmatpush1.msra.mxu0 0.0
    %1318 = vmatprep.subr.mxu0 0.0
    %1319 = vmatpush1.msra.mxu0 0.0
    %1320 = vmatprep.subr.mxu0 0.0
    %1321 = vmatpush1.msra.mxu0 0.0
    %1322 = vmatprep.subr.mxu0 0.0
    %1323 = vmatpush1.msra.mxu0 %v1287
    %1324 = vmatprep.subr.mxu0 0.0
    %1325 = vmatpush1.msra.mxu0 %v1286
    %1326 = vmatprep.subr.mxu0 0.0
    %1327 = vmatpush1.msra.mxu0 %v1285
    %1328 = vmatprep.subr.mxu0 0.0
    %1329 = vmatpush1.msra.mxu0 %v1284
    %1330 = vmatprep.subr.mxu0 0.0
    %1331 = vmatpush2.msra.mxu0 0.0
    %1332 = vmatprep.subr.mxu0 0.0
    %1333 = vmatpush2.msra.mxu0 0.0
    %1334 = vmatprep.subr.mxu0 0.0
    %1335 = vmatpush2.msra.mxu0 0.0
    %1336 = vmatprep.subr.mxu0 0.0
    %1337 = vmatpush2.msra.mxu0 0.0
    %1338 = vmatprep.subr.mxu0 0.0
    %1339 = vmatpush2.msra.mxu0 0.0
    %1340 = vmatprep.subr.mxu0 0.0
    %1341 = vmatpush2.msra.mxu0 0.0
    %1342 = vmatprep.subr.mxu0 0.0
    %1343 = vmatpush2.msra.mxu0 0.0
    %1344 = vmatprep.subr.mxu0 0.0
    %1345 = vmatpush2.msra.mxu0 0.0
    %1346 = vmatprep.subr.mxu0 0.0
    %1347 = vmatpush2.msra.mxu0 0.0
    %1348 = vmatprep.subr.mxu0 0.0
    %1349 = vmatpush2.msra.mxu0 0.0
    %1350 = vmatprep.subr.mxu0 0.0
    %1351 = vmatpush2.msra.mxu0 0.0
    %1352 = vmatprep.subr.mxu0 0.0
    %1353 = vmatpush2.msra.mxu0 0.0
    %1354 = vmatprep.subr.mxu0 0.0
    %1355 = vmatpush2.msra.mxu0 0.0
    %1356 = vmatprep.subr.mxu0 0.0
    %1357 = vmatpush2.msra.mxu0 0.0
    %1358 = vmatprep.subr.mxu0 0.0
    %1359 = vmatpush2.msra.mxu0 0.0
    %1360 = vmatprep.subr.mxu0 0.0
    %1361 = vmatpush2.msra.mxu0 0.0
    %1362 = vmatprep.mubr.f32.mxu0 0.0
    %1363 = vmatmul.mubr.f32.gmra.mxu0 %v1294
    %v1364 = vpop.f32.mrf.mxu0
    %v1365 = vadd.f32 0.0, %v1364
    %v1366 = vpop.f32.mrf.mxu0
    %1367 = vmatprep.mubr.f32.mxu0 0.0
    %1368 = vmatmul.mubr.f32.gmra.mxu0 %v1296
    %v1369 = vpop.f32.mrf.mxu0
    %v1370 = vadd.f32 0.0, %v1369
    %v1371 = vpop.f32.mrf.mxu0
    %1372 = vdwg.mxu0
    %v1373 = vadd.f32 %v1275, %v1365
    %v1374 = vadd.f32 %v1280, %v1370
    %s1375 = sadd.s32 %s1101, 1
    %s1376 = smul.u32 %s1375, 24
    %s1377 = scalar_lea.vmem [#allocation2], %s1376
    %v1378 = vld [vmem:[%s1377] sm:$0xff]
    %v1379 = vld [vmem:[%s1377 + $0x8] sm:$0xff]
    %v1380 = vld [vmem:[%s1377 + $0x10] sm:$0x3]
    %s1381 = scalar_lea.vmem %s5, 96
    %v1382 = vld [vmem:[%s1381] sm:$0xff]
    %v1383 = vld [vmem:[%s1381 + $0x8] sm:$0xff]
    %v1384 = vld [vmem:[%s1381 + $0x10] sm:$0xff]
    %v1385 = vld [vmem:[%s1381 + $0x18] sm:$0xff]
    %v1387 = vsel %vm50, %v1378, 0
    %v1390 = vsel %vm50, %v1379, 0
    %1392 = vmatprep.subr.mxu0 0.0
    %1393 = vmatpush1.msra.mxu0 0.0
    %1394 = vmatprep.subr.mxu0 0.0
    %1395 = vmatpush1.msra.mxu0 0.0
    %1396 = vmatprep.subr.mxu0 0.0
    %1397 = vmatpush1.msra.mxu0 0.0
    %1398 = vmatprep.subr.mxu0 0.0
    %1399 = vmatpush1.msra.mxu0 0.0
    %1400 = vmatprep.subr.mxu0 0.0
    %1401 = vmatpush1.msra.mxu0 0.0
    %1402 = vmatprep.subr.mxu0 0.0
    %1403 = vmatpush1.msra.mxu0 0.0
    %1404 = vmatprep.subr.mxu0 0.0
    %1405 = vmatpush1.msra.mxu0 0.0
    %1406 = vmatprep.subr.mxu0 0.0
    %1407 = vmatpush1.msra.mxu0 0.0
    %1408 = vmatprep.subr.mxu0 0.0
    %1409 = vmatpush1.msra.mxu0 0.0
    %1410 = vmatprep.subr.mxu0 0.0
    %1411 = vmatpush1.msra.mxu0 0.0
    %1412 = vmatprep.subr.mxu0 0.0
    %1413 = vmatpush1.msra.mxu0 0.0
    %1414 = vmatprep.subr.mxu0 0.0
    %1415 = vmatpush1.msra.mxu0 0.0
    %1416 = vmatprep.subr.mxu0 0.0
    %1417 = vmatpush1.msra.mxu0 %v1385
    %1418 = vmatprep.subr.mxu0 0.0
    %1419 = vmatpush1.msra.mxu0 %v1384
    %1420 = vmatprep.subr.mxu0 0.0
    %1421 = vmatpush1.msra.mxu0 %v1383
    %1422 = vmatprep.subr.mxu0 0.0
    %1423 = vmatpush1.msra.mxu0 %v1382
    %1424 = vmatprep.subr.mxu0 0.0
    %1425 = vmatpush2.msra.mxu0 0.0
    %1426 = vmatprep.subr.mxu0 0.0
    %1427 = vmatpush2.msra.mxu0 0.0
    %1428 = vmatprep.subr.mxu0 0.0
    %1429 = vmatpush2.msra.mxu0 0.0
    %1430 = vmatprep.subr.mxu0 0.0
    %1431 = vmatpush2.msra.mxu0 0.0
    %1432 = vmatprep.subr.mxu0 0.0
    %1433 = vmatpush2.msra.mxu0 0.0
    %1434 = vmatprep.subr.mxu0 0.0
    %1435 = vmatpush2.msra.mxu0 0.0
    %1436 = vmatprep.subr.mxu0 0.0
    %1437 = vmatpush2.msra.mxu0 0.0
    %1438 = vmatprep.subr.mxu0 0.0
    %1439 = vmatpush2.msra.mxu0 0.0
    %1440 = vmatprep.subr.mxu0 0.0
    %1441 = vmatpush2.msra.mxu0 0.0
    %1442 = vmatprep.subr.mxu0 0.0
    %1443 = vmatpush2.msra.mxu0 0.0
    %1444 = vmatprep.subr.mxu0 0.0
    %1445 = vmatpush2.msra.mxu0 0.0
    %1446 = vmatprep.subr.mxu0 0.0
    %1447 = vmatpush2.msra.mxu0 0.0
    %1448 = vmatprep.subr.mxu0 0.0
    %1449 = vmatpush2.msra.mxu0 0.0
    %1450 = vmatprep.subr.mxu0 0.0
    %1451 = vmatpush2.msra.mxu0 0.0
    %1452 = vmatprep.subr.mxu0 0.0
    %1453 = vmatpush2.msra.mxu0 0.0
    %1454 = vmatprep.subr.mxu0 0.0
    %1455 = vmatpush2.msra.mxu0 0.0
    %1456 = vmatprep.mubr.f32.mxu0 0.0
    %1457 = vmatmul.mubr.f32.gmra.mxu0 %v1387
    %v1458 = vpop.f32.mrf.mxu0
    %v1459 = vadd.f32 0.0, %v1458
    %v1460 = vpop.f32.mrf.mxu0
    %1461 = vmatprep.mubr.f32.mxu0 0.0
    %1462 = vmatmul.mubr.f32.gmra.mxu0 %v1390
    %v1463 = vpop.f32.mrf.mxu0
    %v1464 = vadd.f32 0.0, %v1463
    %v1465 = vpop.f32.mrf.mxu0
    %1466 = vdwg.mxu0
    %v1467 = vadd.f32 %v1373, %v1459
    %v1468 = vadd.f32 %v1374, %v1464
    %s1469 = scalar_lea.vmem %s5, 128
    %v1470 = vld [vmem:[%s1469] sm:$0xff]
    %v1471 = vld [vmem:[%s1469 + $0x8] sm:$0xff]
    %v1472 = vld [vmem:[%s1469 + $0x10] sm:$0xff]
    %v1473 = vld [vmem:[%s1469 + $0x18] sm:$0xff]
    %v1475 = vrot.slane %v1378, 1
    %v1476 = vrot.slane %v1379, 1
    %v1477 = vsel %vm1119, %v1475, %v1476
    %v1478 = vrot.slane %v1380, 1
    %v1479 = vsel %vm1119, %v1476, %v1478
    %v1480 = vsel %vm50, %v1477, 0
    %v1482 = vsel %vm50, %v1479, 0
    %1484 = vmatprep.subr.mxu0 0.0
    %1485 = vmatpush1.msra.mxu0 0.0
    %1486 = vmatprep.subr.mxu0 0.0
    %1487 = vmatpush1.msra.mxu0 0.0
    %1488 = vmatprep.subr.mxu0 0.0
    %1489 = vmatpush1.msra.mxu0 0.0
    %1490 = vmatprep.subr.mxu0 0.0
    %1491 = vmatpush1.msra.mxu0 0.0
    %1492 = vmatprep.subr.mxu0 0.0
    %1493 = vmatpush1.msra.mxu0 0.0
    %1494 = vmatprep.subr.mxu0 0.0
    %1495 = vmatpush1.msra.mxu0 0.0
    %1496 = vmatprep.subr.mxu0 0.0
    %1497 = vmatpush1.msra.mxu0 0.0
    %1498 = vmatprep.subr.mxu0 0.0
    %1499 = vmatpush1.msra.mxu0 0.0
    %1500 = vmatprep.subr.mxu0 0.0
    %1501 = vmatpush1.msra.mxu0 0.0
    %1502 = vmatprep.subr.mxu0 0.0
    %1503 = vmatpush1.msra.mxu0 0.0
    %1504 = vmatprep.subr.mxu0 0.0
    %1505 = vmatpush1.msra.mxu0 0.0
    %1506 = vmatprep.subr.mxu0 0.0
    %1507 = vmatpush1.msra.mxu0 0.0
    %1508 = vmatprep.subr.mxu0 0.0
    %1509 = vmatpush1.msra.mxu0 %v1473
    %1510 = vmatprep.subr.mxu0 0.0
    %1511 = vmatpush1.msra.mxu0 %v1472
    %1512 = vmatprep.subr.mxu0 0.0
    %1513 = vmatpush1.msra.mxu0 %v1471
    %1514 = vmatprep.subr.mxu0 0.0
    %1515 = vmatpush1.msra.mxu0 %v1470
    %1516 = vmatprep.subr.mxu0 0.0
    %1517 = vmatpush2.msra.mxu0 0.0
    %1518 = vmatprep.subr.mxu0 0.0
    %1519 = vmatpush2.msra.mxu0 0.0
    %1520 = vmatprep.subr.mxu0 0.0
    %1521 = vmatpush2.msra.mxu0 0.0
    %1522 = vmatprep.subr.mxu0 0.0
    %1523 = vmatpush2.msra.mxu0 0.0
    %1524 = vmatprep.subr.mxu0 0.0
    %1525 = vmatpush2.msra.mxu0 0.0
    %1526 = vmatprep.subr.mxu0 0.0
    %1527 = vmatpush2.msra.mxu0 0.0
    %1528 = vmatprep.subr.mxu0 0.0
    %1529 = vmatpush2.msra.mxu0 0.0
    %1530 = vmatprep.subr.mxu0 0.0
    %1531 = vmatpush2.msra.mxu0 0.0
    %1532 = vmatprep.subr.mxu0 0.0
    %1533 = vmatpush2.msra.mxu0 0.0
    %1534 = vmatprep.subr.mxu0 0.0
    %1535 = vmatpush2.msra.mxu0 0.0
    %1536 = vmatprep.subr.mxu0 0.0
    %1537 = vmatpush2.msra.mxu0 0.0
    %1538 = vmatprep.subr.mxu0 0.0
    %1539 = vmatpush2.msra.mxu0 0.0
    %1540 = vmatprep.subr.mxu0 0.0
    %1541 = vmatpush2.msra.mxu0 0.0
    %1542 = vmatprep.subr.mxu0 0.0
    %1543 = vmatpush2.msra.mxu0 0.0
    %1544 = vmatprep.subr.mxu0 0.0
    %1545 = vmatpush2.msra.mxu0 0.0
    %1546 = vmatprep.subr.mxu0 0.0
    %1547 = vmatpush2.msra.mxu0 0.0
    %1548 = vmatprep.mubr.f32.mxu0 0.0
    %1549 = vmatmul.mubr.f32.gmra.mxu0 %v1480
    %v1550 = vpop.f32.mrf.mxu0
    %v1551 = vadd.f32 0.0, %v1550
    %v1552 = vpop.f32.mrf.mxu0
    %1553 = vmatprep.mubr.f32.mxu0 0.0
    %1554 = vmatmul.mubr.f32.gmra.mxu0 %v1482
    %v1555 = vpop.f32.mrf.mxu0
    %v1556 = vadd.f32 0.0, %v1555
    %v1557 = vpop.f32.mrf.mxu0
    %1558 = vdwg.mxu0
    %v1559 = vadd.f32 %v1467, %v1551
    %v1560 = vadd.f32 %v1468, %v1556
    %s1561 = scalar_lea.vmem %s5, 160
    %v1562 = vld [vmem:[%s1561] sm:$0xff]
    %v1563 = vld [vmem:[%s1561 + $0x8] sm:$0xff]
    %v1564 = vld [vmem:[%s1561 + $0x10] sm:$0xff]
    %v1565 = vld [vmem:[%s1561 + $0x18] sm:$0xff]
    %v1566 = vrot.slane %v1378, 2
    %v1567 = vrot.slane %v1379, 2
    %v1568 = vsel %vm1288, %v1566, %v1567
    %v1569 = vrot.slane %v1380, 2
    %v1570 = vsel %vm1288, %v1567, %v1569
    %v1571 = vsel %vm50, %v1568, 0
    %v1573 = vsel %vm50, %v1570, 0
    %1575 = vmatprep.subr.mxu0 0.0
    %1576 = vmatpush1.msra.mxu0 0.0
    %1577 = vmatprep.subr.mxu0 0.0
    %1578 = vmatpush1.msra.mxu0 0.0
    %1579 = vmatprep.subr.mxu0 0.0
    %1580 = vmatpush1.msra.mxu0 0.0
    %1581 = vmatprep.subr.mxu0 0.0
    %1582 = vmatpush1.msra.mxu0 0.0
    %1583 = vmatprep.subr.mxu0 0.0
    %1584 = vmatpush1.msra.mxu0 0.0
    %1585 = vmatprep.subr.mxu0 0.0
    %1586 = vmatpush1.msra.mxu0 0.0
    %1587 = vmatprep.subr.mxu0 0.0
    %1588 = vmatpush1.msra.mxu0 0.0
    %1589 = vmatprep.subr.mxu0 0.0
    %1590 = vmatpush1.msra.mxu0 0.0
    %1591 = vmatprep.subr.mxu0 0.0
    %1592 = vmatpush1.msra.mxu0 0.0
    %1593 = vmatprep.subr.mxu0 0.0
    %1594 = vmatpush1.msra.mxu0 0.0
    %1595 = vmatprep.subr.mxu0 0.0
    %1596 = vmatpush1.msra.mxu0 0.0
    %1597 = vmatprep.subr.mxu0 0.0
    %1598 = vmatpush1.msra.mxu0 0.0
    %1599 = vmatprep.subr.mxu0 0.0
    %1600 = vmatpush1.msra.mxu0 %v1565
    %1601 = vmatprep.subr.mxu0 0.0
    %1602 = vmatpush1.msra.mxu0 %v1564
    %1603 = vmatprep.subr.mxu0 0.0
    %1604 = vmatpush1.msra.mxu0 %v1563
    %1605 = vmatprep.subr.mxu0 0.0
    %1606 = vmatpush1.msra.mxu0 %v1562
    %1607 = vmatprep.subr.mxu0 0.0
    %1608 = vmatpush2.msra.mxu0 0.0
    %1609 = vmatprep.subr.mxu0 0.0
    %1610 = vmatpush2.msra.mxu0 0.0
    %1611 = vmatprep.subr.mxu0 0.0
    %1612 = vmatpush2.msra.mxu0 0.0
    %1613 = vmatprep.subr.mxu0 0.0
    %1614 = vmatpush2.msra.mxu0 0.0
    %1615 = vmatprep.subr.mxu0 0.0
    %1616 = vmatpush2.msra.mxu0 0.0
    %1617 = vmatprep.subr.mxu0 0.0
    %1618 = vmatpush2.msra.mxu0 0.0
    %1619 = vmatprep.subr.mxu0 0.0
    %1620 = vmatpush2.msra.mxu0 0.0
    %1621 = vmatprep.subr.mxu0 0.0
    %1622 = vmatpush2.msra.mxu0 0.0
    %1623 = vmatprep.subr.mxu0 0.0
    %1624 = vmatpush2.msra.mxu0 0.0
    %1625 = vmatprep.subr.mxu0 0.0
    %1626 = vmatpush2.msra.mxu0 0.0
    %1627 = vmatprep.subr.mxu0 0.0
    %1628 = vmatpush2.msra.mxu0 0.0
    %1629 = vmatprep.subr.mxu0 0.0
    %1630 = vmatpush2.msra.mxu0 0.0
    %1631 = vmatprep.subr.mxu0 0.0
    %1632 = vmatpush2.msra.mxu0 0.0
    %1633 = vmatprep.subr.mxu0 0.0
    %1634 = vmatpush2.msra.mxu0 0.0
    %1635 = vmatprep.subr.mxu0 0.0
    %1636 = vmatpush2.msra.mxu0 0.0
    %1637 = vmatprep.subr.mxu0 0.0
    %1638 = vmatpush2.msra.mxu0 0.0
    %1639 = vmatprep.mubr.f32.mxu0 0.0
    %1640 = vmatmul.mubr.f32.gmra.mxu0 %v1571
    %v1641 = vpop.f32.mrf.mxu0
    %v1642 = vadd.f32 0.0, %v1641
    %v1643 = vpop.f32.mrf.mxu0
    %1644 = vmatprep.mubr.f32.mxu0 0.0
    %1645 = vmatmul.mubr.f32.gmra.mxu0 %v1573
    %v1646 = vpop.f32.mrf.mxu0
    %v1647 = vadd.f32 0.0, %v1646
    %v1648 = vpop.f32.mrf.mxu0
    %1649 = vdwg.mxu0
    %v1650 = vadd.f32 %v1559, %v1642
    %v1651 = vadd.f32 %v1560, %v1647
    %s1652 = sadd.s32 %s1101, 2
    %s1653 = smul.u32 %s1652, 24
    %s1654 = scalar_lea.vmem [#allocation2], %s1653
    %v1655 = vld [vmem:[%s1654] sm:$0xff]
    %v1656 = vld [vmem:[%s1654 + $0x8] sm:$0xff]
    %v1657 = vld [vmem:[%s1654 + $0x10] sm:$0x3]
    %s1658 = scalar_lea.vmem %s5, 192
    %v1659 = vld [vmem:[%s1658] sm:$0xff]
    %v1660 = vld [vmem:[%s1658 + $0x8] sm:$0xff]
    %v1661 = vld [vmem:[%s1658 + $0x10] sm:$0xff]
    %v1662 = vld [vmem:[%s1658 + $0x18] sm:$0xff]
    %v1664 = vsel %vm50, %v1655, 0
    %v1667 = vsel %vm50, %v1656, 0
    %1669 = vmatprep.subr.mxu0 0.0
    %1670 = vmatpush1.msra.mxu0 0.0
    %1671 = vmatprep.subr.mxu0 0.0
    %1672 = vmatpush1.msra.mxu0 0.0
    %1673 = vmatprep.subr.mxu0 0.0
    %1674 = vmatpush1.msra.mxu0 0.0
    %1675 = vmatprep.subr.mxu0 0.0
    %1676 = vmatpush1.msra.mxu0 0.0
    %1677 = vmatprep.subr.mxu0 0.0
    %1678 = vmatpush1.msra.mxu0 0.0
    %1679 = vmatprep.subr.mxu0 0.0
    %1680 = vmatpush1.msra.mxu0 0.0
    %1681 = vmatprep.subr.mxu0 0.0
    %1682 = vmatpush1.msra.mxu0 0.0
    %1683 = vmatprep.subr.mxu0 0.0
    %1684 = vmatpush1.msra.mxu0 0.0
    %1685 = vmatprep.subr.mxu0 0.0
    %1686 = vmatpush1.msra.mxu0 0.0
    %1687 = vmatprep.subr.mxu0 0.0
    %1688 = vmatpush1.msra.mxu0 0.0
    %1689 = vmatprep.subr.mxu0 0.0
    %1690 = vmatpush1.msra.mxu0 0.0
    %1691 = vmatprep.subr.mxu0 0.0
    %1692 = vmatpush1.msra.mxu0 0.0
    %1693 = vmatprep.subr.mxu0 0.0
    %1694 = vmatpush1.msra.mxu0 %v1662
    %1695 = vmatprep.subr.mxu0 0.0
    %1696 = vmatpush1.msra.mxu0 %v1661
    %1697 = vmatprep.subr.mxu0 0.0
    %1698 = vmatpush1.msra.mxu0 %v1660
    %1699 = vmatprep.subr.mxu0 0.0
    %1700 = vmatpush1.msra.mxu0 %v1659
    %1701 = vmatprep.subr.mxu0 0.0
    %1702 = vmatpush2.msra.mxu0 0.0
    %1703 = vmatprep.subr.mxu0 0.0
    %1704 = vmatpush2.msra.mxu0 0.0
    %1705 = vmatprep.subr.mxu0 0.0
    %1706 = vmatpush2.msra.mxu0 0.0
    %1707 = vmatprep.subr.mxu0 0.0
    %1708 = vmatpush2.msra.mxu0 0.0
    %1709 = vmatprep.subr.mxu0 0.0
    %1710 = vmatpush2.msra.mxu0 0.0
    %1711 = vmatprep.subr.mxu0 0.0
    %1712 = vmatpush2.msra.mxu0 0.0
    %1713 = vmatprep.subr.mxu0 0.0
    %1714 = vmatpush2.msra.mxu0 0.0
    %1715 = vmatprep.subr.mxu0 0.0
    %1716 = vmatpush2.msra.mxu0 0.0
    %1717 = vmatprep.subr.mxu0 0.0
    %1718 = vmatpush2.msra.mxu0 0.0
    %1719 = vmatprep.subr.mxu0 0.0
    %1720 = vmatpush2.msra.mxu0 0.0
    %1721 = vmatprep.subr.mxu0 0.0
    %1722 = vmatpush2.msra.mxu0 0.0
    %1723 = vmatprep.subr.mxu0 0.0
    %1724 = vmatpush2.msra.mxu0 0.0
    %1725 = vmatprep.subr.mxu0 0.0
    %1726 = vmatpush2.msra.mxu0 0.0
    %1727 = vmatprep.subr.mxu0 0.0
    %1728 = vmatpush2.msra.mxu0 0.0
    %1729 = vmatprep.subr.mxu0 0.0
    %1730 = vmatpush2.msra.mxu0 0.0
    %1731 = vmatprep.subr.mxu0 0.0
    %1732 = vmatpush2.msra.mxu0 0.0
    %1733 = vmatprep.mubr.f32.mxu0 0.0
    %1734 = vmatmul.mubr.f32.gmra.mxu0 %v1664
    %v1735 = vpop.f32.mrf.mxu0
    %v1736 = vadd.f32 0.0, %v1735
    %v1737 = vpop.f32.mrf.mxu0
    %1738 = vmatprep.mubr.f32.mxu0 0.0
    %1739 = vmatmul.mubr.f32.gmra.mxu0 %v1667
    %v1740 = vpop.f32.mrf.mxu0
    %v1741 = vadd.f32 0.0, %v1740
    %v1742 = vpop.f32.mrf.mxu0
    %1743 = vdwg.mxu0
    %v1744 = vadd.f32 %v1650, %v1736
    %v1745 = vadd.f32 %v1651, %v1741
    %s1746 = scalar_lea.vmem %s5, 224
    %v1747 = vld [vmem:[%s1746] sm:$0xff]
    %v1748 = vld [vmem:[%s1746 + $0x8] sm:$0xff]
    %v1749 = vld [vmem:[%s1746 + $0x10] sm:$0xff]
    %v1750 = vld [vmem:[%s1746 + $0x18] sm:$0xff]
    %v1752 = vrot.slane %v1655, 1
    %v1753 = vrot.slane %v1656, 1
    %v1754 = vsel %vm1119, %v1752, %v1753
    %v1755 = vrot.slane %v1657, 1
    %v1756 = vsel %vm1119, %v1753, %v1755
    %v1757 = vsel %vm50, %v1754, 0
    %v1759 = vsel %vm50, %v1756, 0
    %1761 = vmatprep.subr.mxu0 0.0
    %1762 = vmatpush1.msra.mxu0 0.0
    %1763 = vmatprep.subr.mxu0 0.0
    %1764 = vmatpush1.msra.mxu0 0.0
    %1765 = vmatprep.subr.mxu0 0.0
    %1766 = vmatpush1.msra.mxu0 0.0
    %1767 = vmatprep.subr.mxu0 0.0
    %1768 = vmatpush1.msra.mxu0 0.0
    %1769 = vmatprep.subr.mxu0 0.0
    %1770 = vmatpush1.msra.mxu0 0.0
    %1771 = vmatprep.subr.mxu0 0.0
    %1772 = vmatpush1.msra.mxu0 0.0
    %1773 = vmatprep.subr.mxu0 0.0
    %1774 = vmatpush1.msra.mxu0 0.0
    %1775 = vmatprep.subr.mxu0 0.0
    %1776 = vmatpush1.msra.mxu0 0.0
    %1777 = vmatprep.subr.mxu0 0.0
    %1778 = vmatpush1.msra.mxu0 0.0
    %1779 = vmatprep.subr.mxu0 0.0
    %1780 = vmatpush1.msra.mxu0 0.0
    %1781 = vmatprep.subr.mxu0 0.0
    %1782 = vmatpush1.msra.mxu0 0.0
    %1783 = vmatprep.subr.mxu0 0.0
    %1784 = vmatpush1.msra.mxu0 0.0
    %1785 = vmatprep.subr.mxu0 0.0
    %1786 = vmatpush1.msra.mxu0 %v1750
    %1787 = vmatprep.subr.mxu0 0.0
    %1788 = vmatpush1.msra.mxu0 %v1749
    %1789 = vmatprep.subr.mxu0 0.0
    %1790 = vmatpush1.msra.mxu0 %v1748
    %1791 = vmatprep.subr.mxu0 0.0
    %1792 = vmatpush1.msra.mxu0 %v1747
    %1793 = vmatprep.subr.mxu0 0.0
    %1794 = vmatpush2.msra.mxu0 0.0
    %1795 = vmatprep.subr.mxu0 0.0
    %1796 = vmatpush2.msra.mxu0 0.0
    %1797 = vmatprep.subr.mxu0 0.0
    %1798 = vmatpush2.msra.mxu0 0.0
    %1799 = vmatprep.subr.mxu0 0.0
    %1800 = vmatpush2.msra.mxu0 0.0
    %1801 = vmatprep.subr.mxu0 0.0
    %1802 = vmatpush2.msra.mxu0 0.0
    %1803 = vmatprep.subr.mxu0 0.0
    %1804 = vmatpush2.msra.mxu0 0.0
    %1805 = vmatprep.subr.mxu0 0.0
    %1806 = vmatpush2.msra.mxu0 0.0
    %1807 = vmatprep.subr.mxu0 0.0
    %1808 = vmatpush2.msra.mxu0 0.0
    %1809 = vmatprep.subr.mxu0 0.0
    %1810 = vmatpush2.msra.mxu0 0.0
    %1811 = vmatprep.subr.mxu0 0.0
    %1812 = vmatpush2.msra.mxu0 0.0
    %1813 = vmatprep.subr.mxu0 0.0
    %1814 = vmatpush2.msra.mxu0 0.0
    %1815 = vmatprep.subr.mxu0 0.0
    %1816 = vmatpush2.msra.mxu0 0.0
    %1817 = vmatprep.subr.mxu0 0.0
    %1818 = vmatpush2.msra.mxu0 0.0
    %1819 = vmatprep.subr.mxu0 0.0
    %1820 = vmatpush2.msra.mxu0 0.0
    %1821 = vmatprep.subr.mxu0 0.0
    %1822 = vmatpush2.msra.mxu0 0.0
    %1823 = vmatprep.subr.mxu0 0.0
    %1824 = vmatpush2.msra.mxu0 0.0
    %1825 = vmatprep.mubr.f32.mxu0 0.0
    %1826 = vmatmul.mubr.f32.gmra.mxu0 %v1757
    %v1827 = vpop.f32.mrf.mxu0
    %v1828 = vadd.f32 0.0, %v1827
    %v1829 = vpop.f32.mrf.mxu0
    %1830 = vmatprep.mubr.f32.mxu0 0.0
    %1831 = vmatmul.mubr.f32.gmra.mxu0 %v1759
    %v1832 = vpop.f32.mrf.mxu0
    %v1833 = vadd.f32 0.0, %v1832
    %v1834 = vpop.f32.mrf.mxu0
    %1835 = vdwg.mxu0
    %v1836 = vadd.f32 %v1744, %v1828
    %v1837 = vadd.f32 %v1745, %v1833
    %s1838 = scalar_lea.vmem %s5, 256
    %v1839 = vld [vmem:[%s1838] sm:$0xff]
    %v1840 = vld [vmem:[%s1838 + $0x8] sm:$0xff]
    %v1841 = vld [vmem:[%s1838 + $0x10] sm:$0xff]
    %v1842 = vld [vmem:[%s1838 + $0x18] sm:$0xff]
    %v1843 = vrot.slane %v1655, 2
    %v1844 = vrot.slane %v1656, 2
    %v1845 = vsel %vm1288, %v1843, %v1844
    %v1846 = vrot.slane %v1657, 2
    %v1847 = vsel %vm1288, %v1844, %v1846
    %v1848 = vsel %vm50, %v1845, 0
    %v1850 = vsel %vm50, %v1847, 0
    %1852 = vmatprep.subr.mxu0 0.0
    %1853 = vmatpush1.msra.mxu0 0.0
    %1854 = vmatprep.subr.mxu0 0.0
    %1855 = vmatpush1.msra.mxu0 0.0
    %1856 = vmatprep.subr.mxu0 0.0
    %1857 = vmatpush1.msra.mxu0 0.0
    %1858 = vmatprep.subr.mxu0 0.0
    %1859 = vmatpush1.msra.mxu0 0.0
    %1860 = vmatprep.subr.mxu0 0.0
    %1861 = vmatpush1.msra.mxu0 0.0
    %1862 = vmatprep.subr.mxu0 0.0
    %1863 = vmatpush1.msra.mxu0 0.0
    %1864 = vmatprep.subr.mxu0 0.0
    %1865 = vmatpush1.msra.mxu0 0.0
    %1866 = vmatprep.subr.mxu0 0.0
    %1867 = vmatpush1.msra.mxu0 0.0
    %1868 = vmatprep.subr.mxu0 0.0
    %1869 = vmatpush1.msra.mxu0 0.0
    %1870 = vmatprep.subr.mxu0 0.0
    %1871 = vmatpush1.msra.mxu0 0.0
    %1872 = vmatprep.subr.mxu0 0.0
    %1873 = vmatpush1.msra.mxu0 0.0
    %1874 = vmatprep.subr.mxu0 0.0
    %1875 = vmatpush1.msra.mxu0 0.0
    %1876 = vmatprep.subr.mxu0 0.0
    %1877 = vmatpush1.msra.mxu0 %v1842
    %1878 = vmatprep.subr.mxu0 0.0
    %1879 = vmatpush1.msra.mxu0 %v1841
    %1880 = vmatprep.subr.mxu0 0.0
    %1881 = vmatpush1.msra.mxu0 %v1840
    %1882 = vmatprep.subr.mxu0 0.0
    %1883 = vmatpush1.msra.mxu0 %v1839
    %1884 = vmatprep.subr.mxu0 0.0
    %1885 = vmatpush2.msra.mxu0 0.0
    %1886 = vmatprep.subr.mxu0 0.0
    %1887 = vmatpush2.msra.mxu0 0.0
    %1888 = vmatprep.subr.mxu0 0.0
    %1889 = vmatpush2.msra.mxu0 0.0
    %1890 = vmatprep.subr.mxu0 0.0
    %1891 = vmatpush2.msra.mxu0 0.0
    %1892 = vmatprep.subr.mxu0 0.0
    %1893 = vmatpush2.msra.mxu0 0.0
    %1894 = vmatprep.subr.mxu0 0.0
    %1895 = vmatpush2.msra.mxu0 0.0
    %1896 = vmatprep.subr.mxu0 0.0
    %1897 = vmatpush2.msra.mxu0 0.0
    %1898 = vmatprep.subr.mxu0 0.0
    %1899 = vmatpush2.msra.mxu0 0.0
    %1900 = vmatprep.subr.mxu0 0.0
    %1901 = vmatpush2.msra.mxu0 0.0
    %1902 = vmatprep.subr.mxu0 0.0
    %1903 = vmatpush2.msra.mxu0 0.0
    %1904 = vmatprep.subr.mxu0 0.0
    %1905 = vmatpush2.msra.mxu0 0.0
    %1906 = vmatprep.subr.mxu0 0.0
    %1907 = vmatpush2.msra.mxu0 0.0
    %1908 = vmatprep.subr.mxu0 0.0
    %1909 = vmatpush2.msra.mxu0 0.0
    %1910 = vmatprep.subr.mxu0 0.0
    %1911 = vmatpush2.msra.mxu0 0.0
    %1912 = vmatprep.subr.mxu0 0.0
    %1913 = vmatpush2.msra.mxu0 0.0
    %1914 = vmatprep.subr.mxu0 0.0
    %1915 = vmatpush2.msra.mxu0 0.0
    %1916 = vmatprep.mubr.f32.mxu0 0.0
    %1917 = vmatmul.mubr.f32.gmra.mxu0 %v1848
    %v1918 = vpop.f32.mrf.mxu0
    %v1919 = vadd.f32 0.0, %v1918
    %v1920 = vpop.f32.mrf.mxu0
    %1921 = vmatprep.mubr.f32.mxu0 0.0
    %1922 = vmatmul.mubr.f32.gmra.mxu0 %v1850
    %v1923 = vpop.f32.mrf.mxu0
    %v1924 = vadd.f32 0.0, %v1923
    %v1925 = vpop.f32.mrf.mxu0
    %1926 = vdwg.mxu0
    %v1927 = vadd.f32 %v1836, %v1919
    %v1928 = vadd.f32 %v1837, %v1924
    %v1929 = vld [vmem:[%s6] sm:$0x1]
    %v1931 = vlaneseq
    %v1932 = vshrl.u32 %v1931, 7
    %v1933 = vsub.s32 0, %v1932
    %v1934 = vrot.slane %v1929, %v1933
    %vm1936 = vcmask 130048
    %v1938 = vsel %vm1936, %v1094, 0
    %1940 = vmatprep.subr.mxu0 0.0
    %1941 = vmatpush1.msra.mxu0 0.0
    %1942 = vmatprep.subr.mxu0 0.0
    %1943 = vmatpush1.msra.mxu0 0.0
    %1944 = vmatprep.subr.mxu0 0.0
    %1945 = vmatpush1.msra.mxu0 0.0
    %1946 = vmatprep.subr.mxu0 0.0
    %1947 = vmatpush1.msra.mxu0 0.0
    %1948 = vmatprep.subr.mxu0 0.0
    %1949 = vmatpush1.msra.mxu0 0.0
    %1950 = vmatprep.subr.mxu0 0.0
    %1951 = vmatpush1.msra.mxu0 0.0
    %1952 = vmatprep.subr.mxu0 0.0
    %1953 = vmatpush1.msra.mxu0 0.0
    %1954 = vmatprep.subr.mxu0 0.0
    %1955 = vmatpush1.msra.mxu0 0.0
    %1956 = vmatprep.subr.mxu0 0.0
    %1957 = vmatpush1.msra.mxu0 0.0
    %1958 = vmatprep.subr.mxu0 0.0
    %1959 = vmatpush1.msra.mxu0 0.0
    %1960 = vmatprep.subr.mxu0 0.0
    %1961 = vmatpush1.msra.mxu0 0.0
    %1962 = vmatprep.subr.mxu0 0.0
    %1963 = vmatpush1.msra.mxu0 0.0
    %1964 = vmatprep.subr.mxu0 0.0
    %1965 = vmatpush1.msra.mxu0 0.0
    %1966 = vmatprep.subr.mxu0 0.0
    %1967 = vmatpush1.msra.mxu0 0.0
    %1968 = vmatprep.subr.mxu0 0.0
    %1969 = vmatpush1.msra.mxu0 %v1928
    %1970 = vmatprep.subr.mxu0 0.0
    %1971 = vmatpush1.msra.mxu0 %v1927
    %1972 = vmatprep.subr.mxu0 0.0
    %1973 = vmatpush2.msra.mxu0 0.0
    %1974 = vmatprep.subr.mxu0 0.0
    %1975 = vmatpush2.msra.mxu0 0.0
    %1976 = vmatprep.subr.mxu0 0.0
    %1977 = vmatpush2.msra.mxu0 0.0
    %1978 = vmatprep.subr.mxu0 0.0
    %1979 = vmatpush2.msra.mxu0 0.0
    %1980 = vmatprep.subr.mxu0 0.0
    %1981 = vmatpush2.msra.mxu0 0.0
    %1982 = vmatprep.subr.mxu0 0.0
    %1983 = vmatpush2.msra.mxu0 0.0
    %1984 = vmatprep.subr.mxu0 0.0
    %1985 = vmatpush2.msra.mxu0 0.0
    %1986 = vmatprep.subr.mxu0 0.0
    %1987 = vmatpush2.msra.mxu0 0.0
    %1988 = vmatprep.subr.mxu0 0.0
    %1989 = vmatpush2.msra.mxu0 0.0
    %1990 = vmatprep.subr.mxu0 0.0
    %1991 = vmatpush2.msra.mxu0 0.0
    %1992 = vmatprep.subr.mxu0 0.0
    %1993 = vmatpush2.msra.mxu0 0.0
    %1994 = vmatprep.subr.mxu0 0.0
    %1995 = vmatpush2.msra.mxu0 0.0
    %1996 = vmatprep.subr.mxu0 0.0
    %1997 = vmatpush2.msra.mxu0 0.0
    %1998 = vmatprep.subr.mxu0 0.0
    %1999 = vmatpush2.msra.mxu0 0.0
    %2000 = vmatprep.subr.mxu0 0.0
    %2001 = vmatpush2.msra.mxu0 0.0
    %2002 = vmatprep.subr.mxu0 0.0
    %2003 = vmatpush2.msra.mxu0 0.0
    %2004 = vmatprep.mubr.f32.mxu0 0.0
    %2005 = vmatmul.mubr.f32.gmra.mxu0 %v1938
    %v2006 = vpop.f32.mrf.mxu0
    %v2007 = vadd.f32 %v1934, %v2006
    %v2008 = vpop.f32.mrf.mxu0
    %2009 = vdwg.mxu0
    %s2010 = sadd.s32 %s1096, 1
    %s2011 = smul.u32 %s2010, 16
    %s2012 = scalar_lea.vmem [#allocation3], %s2011
    %2013 = vst.msk [vmem:[%s2012 + $0x1] sm:$0xff] %vm50, %v2007
  $region73: #{model_forward.1} parent=0 // loop_footer
    %s1100 = sadd.s32 1, %s1096
  $region74: #{model_forward.1} parent=0 // loop_footer_branch
    %1095 = sbr.rel target = $region70
  $region75: #{model_forward.1} parent=0 // loop_exit
    _
  loop: start=0, step=1, limit=8
  $region76: #{model_forward.1} parent=0 // loop_pre_header
    _
  $region77: #{model_forward.1} parent=0 // loop_header
    %s2015 = sphi 0, %s2019
    %p2016 = scmp.ge.s32.totalorder %s2015, 8
  $region78: #{model_forward.1} parent=0 // loop_header_branch
    %2018 = sbr.rel (%p2016) target = $region82
  $region79: #{model_forward.1} parent=0 // loop_body
    %s2020 = smul.u32 %s2015, 16
    %s2021 = scalar_lea.vmem [#allocation3], %s2020
    %v2022 = vld [vmem:[%s2021] sm:$0xff]
    %v2023 = vld [vmem:[%s2021 + $0x8] sm:$0x3]
    %v2024 = vld [vmem:[%s7] sm:$0xff]
    %v2025 = vld [vmem:[%s7 + $0x8] sm:$0xff]
    %v2026 = vld [vmem:[%s7 + $0x10] sm:$0xff]
    %v2027 = vld [vmem:[%s7 + $0x18] sm:$0xff]
    %s2028 = scalar_lea.vmem %s7, 32
    %v2029 = vld [vmem:[%s2028] sm:$0xff]
    %v2030 = vld [vmem:[%s2028 + $0x8] sm:$0xff]
    %v2031 = vld [vmem:[%s2028 + $0x10] sm:$0xff]
    %v2032 = vld [vmem:[%s2028 + $0x18] sm:$0xff]
    %vm2035 = vcmask 1046528
    %v2036 = vrot.slane %v2022, 1
    %v2037 = vrot.slane %v2023, 1
    %v2038 = vsel %vm2035, %v2036, %v2037
    %v2039 = vsel %vm50, %v2038, 0
    %2041 = vmatprep.subr.mxu0 0.0
    %2042 = vmatpush1.msra.mxu0 0.0
    %2043 = vmatprep.subr.mxu0 0.0
    %2044 = vmatpush1.msra.mxu0 0.0
    %2045 = vmatprep.subr.mxu0 0.0
    %2046 = vmatpush1.msra.mxu0 0.0
    %2047 = vmatprep.subr.mxu0 0.0
    %2048 = vmatpush1.msra.mxu0 0.0
    %2049 = vmatprep.subr.mxu0 0.0
    %2050 = vmatpush1.msra.mxu0 0.0
    %2051 = vmatprep.subr.mxu0 0.0
    %2052 = vmatpush1.msra.mxu0 0.0
    %2053 = vmatprep.subr.mxu0 0.0
    %2054 = vmatpush1.msra.mxu0 0.0
    %2055 = vmatprep.subr.mxu0 0.0
    %2056 = vmatpush1.msra.mxu0 0.0
    %2057 = vmatprep.subr.mxu0 0.0
    %2058 = vmatpush1.msra.mxu0 0.0
    %2059 = vmatprep.subr.mxu0 0.0
    %2060 = vmatpush1.msra.mxu0 0.0
    %2061 = vmatprep.subr.mxu0 0.0
    %2062 = vmatpush1.msra.mxu0 0.0
    %2063 = vmatprep.subr.mxu0 0.0
    %2064 = vmatpush1.msra.mxu0 0.0
    %2065 = vmatprep.subr.mxu0 0.0
    %2066 = vmatpush1.msra.mxu0 %v2032
    %2067 = vmatprep.subr.mxu0 0.0
    %2068 = vmatpush1.msra.mxu0 %v2031
    %2069 = vmatprep.subr.mxu0 0.0
    %2070 = vmatpush1.msra.mxu0 %v2030
    %2071 = vmatprep.subr.mxu0 0.0
    %2072 = vmatpush1.msra.mxu0 %v2029
    %2073 = vmatprep.subr.mxu0 0.0
    %2074 = vmatpush2.msra.mxu0 0.0
    %2075 = vmatprep.subr.mxu0 0.0
    %2076 = vmatpush2.msra.mxu0 0.0
    %2077 = vmatprep.subr.mxu0 0.0
    %2078 = vmatpush2.msra.mxu0 0.0
    %2079 = vmatprep.subr.mxu0 0.0
    %2080 = vmatpush2.msra.mxu0 0.0
    %2081 = vmatprep.subr.mxu0 0.0
    %2082 = vmatpush2.msra.mxu0 0.0
    %2083 = vmatprep.subr.mxu0 0.0
    %2084 = vmatpush2.msra.mxu0 0.0
    %2085 = vmatprep.subr.mxu0 0.0
    %2086 = vmatpush2.msra.mxu0 0.0
    %2087 = vmatprep.subr.mxu0 0.0
    %2088 = vmatpush2.msra.mxu0 0.0
    %2089 = vmatprep.subr.mxu0 0.0
    %2090 = vmatpush2.msra.mxu0 0.0
    %2091 = vmatprep.subr.mxu0 0.0
    %2092 = vmatpush2.msra.mxu0 0.0
    %2093 = vmatprep.subr.mxu0 0.0
    %2094 = vmatpush2.msra.mxu0 0.0
    %2095 = vmatprep.subr.mxu0 0.0
    %2096 = vmatpush2.msra.mxu0 0.0
    %2097 = vmatprep.subr.mxu0 0.0
    %2098 = vmatpush2.msra.mxu0 0.0
    %2099 = vmatprep.subr.mxu0 0.0
    %2100 = vmatpush2.msra.mxu0 0.0
    %2101 = vmatprep.subr.mxu0 0.0
    %2102 = vmatpush2.msra.mxu0 0.0
    %2103 = vmatprep.subr.mxu0 0.0
    %2104 = vmatpush2.msra.mxu0 0.0
    %2105 = vmatprep.mubr.f32.mxu0 0.0
    %2106 = vmatmul.mubr.f32.gmra.mxu0 %v2039
    %v2107 = vpop.f32.mrf.mxu0
    %v2108 = vadd.f32 0.0, %v2107
    %v2109 = vpop.f32.mrf.mxu0
    %2110 = vdwg.mxu0
    %v2111 = vsel %vm50, %v2022, 0
    %2113 = vmatprep.subr.mxu0 0.0
    %2114 = vmatpush1.msra.mxu0 0.0
    %2115 = vmatprep.subr.mxu0 0.0
    %2116 = vmatpush1.msra.mxu0 0.0
    %2117 = vmatprep.subr.mxu0 0.0
    %2118 = vmatpush1.msra.mxu0 0.0
    %2119 = vmatprep.subr.mxu0 0.0
    %2120 = vmatpush1.msra.mxu0 0.0
    %2121 = vmatprep.subr.mxu0 0.0
    %2122 = vmatpush1.msra.mxu0 0.0
    %2123 = vmatprep.subr.mxu0 0.0
    %2124 = vmatpush1.msra.mxu0 0.0
    %2125 = vmatprep.subr.mxu0 0.0
    %2126 = vmatpush1.msra.mxu0 0.0
    %2127 = vmatprep.subr.mxu0 0.0
    %2128 = vmatpush1.msra.mxu0 0.0
    %2129 = vmatprep.subr.mxu0 0.0
    %2130 = vmatpush1.msra.mxu0 0.0
    %2131 = vmatprep.subr.mxu0 0.0
    %2132 = vmatpush1.msra.mxu0 0.0
    %2133 = vmatprep.subr.mxu0 0.0
    %2134 = vmatpush1.msra.mxu0 0.0
    %2135 = vmatprep.subr.mxu0 0.0
    %2136 = vmatpush1.msra.mxu0 0.0
    %2137 = vmatprep.subr.mxu0 0.0
    %2138 = vmatpush1.msra.mxu0 %v2027
    %2139 = vmatprep.subr.mxu0 0.0
    %2140 = vmatpush1.msra.mxu0 %v2026
    %2141 = vmatprep.subr.mxu0 0.0
    %2142 = vmatpush1.msra.mxu0 %v2025
    %2143 = vmatprep.subr.mxu0 0.0
    %2144 = vmatpush1.msra.mxu0 %v2024
    %2145 = vmatprep.subr.mxu0 0.0
    %2146 = vmatpush2.msra.mxu0 0.0
    %2147 = vmatprep.subr.mxu0 0.0
    %2148 = vmatpush2.msra.mxu0 0.0
    %2149 = vmatprep.subr.mxu0 0.0
    %2150 = vmatpush2.msra.mxu0 0.0
    %2151 = vmatprep.subr.mxu0 0.0
    %2152 = vmatpush2.msra.mxu0 0.0
    %2153 = vmatprep.subr.mxu0 0.0
    %2154 = vmatpush2.msra.mxu0 0.0
    %2155 = vmatprep.subr.mxu0 0.0
    %2156 = vmatpush2.msra.mxu0 0.0
    %2157 = vmatprep.subr.mxu0 0.0
    %2158 = vmatpush2.msra.mxu0 0.0
    %2159 = vmatprep.subr.mxu0 0.0
    %2160 = vmatpush2.msra.mxu0 0.0
    %2161 = vmatprep.subr.mxu0 0.0
    %2162 = vmatpush2.msra.mxu0 0.0
    %2163 = vmatprep.subr.mxu0 0.0
    %2164 = vmatpush2.msra.mxu0 0.0
    %2165 = vmatprep.subr.mxu0 0.0
    %2166 = vmatpush2.msra.mxu0 0.0
    %2167 = vmatprep.subr.mxu0 0.0
    %2168 = vmatpush2.msra.mxu0 0.0
    %2169 = vmatprep.subr.mxu0 0.0
    %2170 = vmatpush2.msra.mxu0 0.0
    %2171 = vmatprep.subr.mxu0 0.0
    %2172 = vmatpush2.msra.mxu0 0.0
    %2173 = vmatprep.subr.mxu0 0.0
    %2174 = vmatpush2.msra.mxu0 0.0
    %2175 = vmatprep.subr.mxu0 0.0
    %2176 = vmatpush2.msra.mxu0 0.0
    %2177 = vmatprep.mubr.f32.mxu0 0.0
    %2178 = vmatmul.mubr.f32.gmra.mxu0 %v2111
    %v2179 = vpop.f32.mrf.mxu0
    %v2180 = vadd.f32 %v2108, %v2179
    %v2181 = vpop.f32.mrf.mxu0
    %2182 = vdwg.mxu0
    %s2183 = scalar_lea.vmem %s7, 64
    %v2184 = vld [vmem:[%s2183] sm:$0xff]
    %v2185 = vld [vmem:[%s2183 + $0x8] sm:$0xff]
    %v2186 = vld [vmem:[%s2183 + $0x10] sm:$0xff]
    %v2187 = vld [vmem:[%s2183 + $0x18] sm:$0xff]
    %vm2188 = vcmask 1045504
    %v2189 = vrot.slane %v2022, 2
    %v2190 = vrot.slane %v2023, 2
    %v2191 = vsel %vm2188, %v2189, %v2190
    %v2192 = vsel %vm50, %v2191, 0
    %2194 = vmatprep.subr.mxu0 0.0
    %2195 = vmatpush1.msra.mxu0 0.0
    %2196 = vmatprep.subr.mxu0 0.0
    %2197 = vmatpush1.msra.mxu0 0.0
    %2198 = vmatprep.subr.mxu0 0.0
    %2199 = vmatpush1.msra.mxu0 0.0
    %2200 = vmatprep.subr.mxu0 0.0
    %2201 = vmatpush1.msra.mxu0 0.0
    %2202 = vmatprep.subr.mxu0 0.0
    %2203 = vmatpush1.msra.mxu0 0.0
    %2204 = vmatprep.subr.mxu0 0.0
    %2205 = vmatpush1.msra.mxu0 0.0
    %2206 = vmatprep.subr.mxu0 0.0
    %2207 = vmatpush1.msra.mxu0 0.0
    %2208 = vmatprep.subr.mxu0 0.0
    %2209 = vmatpush1.msra.mxu0 0.0
    %2210 = vmatprep.subr.mxu0 0.0
    %2211 = vmatpush1.msra.mxu0 0.0
    %2212 = vmatprep.subr.mxu0 0.0
    %2213 = vmatpush1.msra.mxu0 0.0
    %2214 = vmatprep.subr.mxu0 0.0
    %2215 = vmatpush1.msra.mxu0 0.0
    %2216 = vmatprep.subr.mxu0 0.0
    %2217 = vmatpush1.msra.mxu0 0.0
    %2218 = vmatprep.subr.mxu0 0.0
    %2219 = vmatpush1.msra.mxu0 %v2187
    %2220 = vmatprep.subr.mxu0 0.0
    %2221 = vmatpush1.msra.mxu0 %v2186
    %2222 = vmatprep.subr.mxu0 0.0
    %2223 = vmatpush1.msra.mxu0 %v2185
    %2224 = vmatprep.subr.mxu0 0.0
    %2225 = vmatpush1.msra.mxu0 %v2184
    %2226 = vmatprep.subr.mxu0 0.0
    %2227 = vmatpush2.msra.mxu0 0.0
    %2228 = vmatprep.subr.mxu0 0.0
    %2229 = vmatpush2.msra.mxu0 0.0
    %2230 = vmatprep.subr.mxu0 0.0
    %2231 = vmatpush2.msra.mxu0 0.0
    %2232 = vmatprep.subr.mxu0 0.0
    %2233 = vmatpush2.msra.mxu0 0.0
    %2234 = vmatprep.subr.mxu0 0.0
    %2235 = vmatpush2.msra.mxu0 0.0
    %2236 = vmatprep.subr.mxu0 0.0
    %2237 = vmatpush2.msra.mxu0 0.0
    %2238 = vmatprep.subr.mxu0 0.0
    %2239 = vmatpush2.msra.mxu0 0.0
    %2240 = vmatprep.subr.mxu0 0.0
    %2241 = vmatpush2.msra.mxu0 0.0
    %2242 = vmatprep.subr.mxu0 0.0
    %2243 = vmatpush2.msra.mxu0 0.0
    %2244 = vmatprep.subr.mxu0 0.0
    %2245 = vmatpush2.msra.mxu0 0.0
    %2246 = vmatprep.subr.mxu0 0.0
    %2247 = vmatpush2.msra.mxu0 0.0
    %2248 = vmatprep.subr.mxu0 0.0
    %2249 = vmatpush2.msra.mxu0 0.0
    %2250 = vmatprep.subr.mxu0 0.0
    %2251 = vmatpush2.msra.mxu0 0.0
    %2252 = vmatprep.subr.mxu0 0.0
    %2253 = vmatpush2.msra.mxu0 0.0
    %2254 = vmatprep.subr.mxu0 0.0
    %2255 = vmatpush2.msra.mxu0 0.0
    %2256 = vmatprep.subr.mxu0 0.0
    %2257 = vmatpush2.msra.mxu0 0.0
    %2258 = vmatprep.mubr.f32.mxu0 0.0
    %2259 = vmatmul.mubr.f32.gmra.mxu0 %v2192
    %v2260 = vpop.f32.mrf.mxu0
    %v2261 = vadd.f32 0.0, %v2260
    %v2262 = vpop.f32.mrf.mxu0
    %2263 = vdwg.mxu0
    %v2264 = vadd.f32 %v2180, %v2261
    %s2265 = sadd.s32 %s2015, 1
    %s2266 = smul.u32 %s2265, 16
    %s2267 = scalar_lea.vmem [#allocation3], %s2266
    %v2268 = vld [vmem:[%s2267] sm:$0xff]
    %v2269 = vld [vmem:[%s2267 + $0x8] sm:$0x3]
    %s2270 = scalar_lea.vmem %s7, 96
    %v2271 = vld [vmem:[%s2270] sm:$0xff]
    %v2272 = vld [vmem:[%s2270 + $0x8] sm:$0xff]
    %v2273 = vld [vmem:[%s2270 + $0x10] sm:$0xff]
    %v2274 = vld [vmem:[%s2270 + $0x18] sm:$0xff]
    %v2276 = vsel %vm50, %v2268, 0
    %2278 = vmatprep.subr.mxu0 0.0
    %2279 = vmatpush1.msra.mxu0 0.0
    %2280 = vmatprep.subr.mxu0 0.0
    %2281 = vmatpush1.msra.mxu0 0.0
    %2282 = vmatprep.subr.mxu0 0.0
    %2283 = vmatpush1.msra.mxu0 0.0
    %2284 = vmatprep.subr.mxu0 0.0
    %2285 = vmatpush1.msra.mxu0 0.0
    %2286 = vmatprep.subr.mxu0 0.0
    %2287 = vmatpush1.msra.mxu0 0.0
    %2288 = vmatprep.subr.mxu0 0.0
    %2289 = vmatpush1.msra.mxu0 0.0
    %2290 = vmatprep.subr.mxu0 0.0
    %2291 = vmatpush1.msra.mxu0 0.0
    %2292 = vmatprep.subr.mxu0 0.0
    %2293 = vmatpush1.msra.mxu0 0.0
    %2294 = vmatprep.subr.mxu0 0.0
    %2295 = vmatpush1.msra.mxu0 0.0
    %2296 = vmatprep.subr.mxu0 0.0
    %2297 = vmatpush1.msra.mxu0 0.0
    %2298 = vmatprep.subr.mxu0 0.0
    %2299 = vmatpush1.msra.mxu0 0.0
    %2300 = vmatprep.subr.mxu0 0.0
    %2301 = vmatpush1.msra.mxu0 0.0
    %2302 = vmatprep.subr.mxu0 0.0
    %2303 = vmatpush1.msra.mxu0 %v2274
    %2304 = vmatprep.subr.mxu0 0.0
    %2305 = vmatpush1.msra.mxu0 %v2273
    %2306 = vmatprep.subr.mxu0 0.0
    %2307 = vmatpush1.msra.mxu0 %v2272
    %2308 = vmatprep.subr.mxu0 0.0
    %2309 = vmatpush1.msra.mxu0 %v2271
    %2310 = vmatprep.subr.mxu0 0.0
    %2311 = vmatpush2.msra.mxu0 0.0
    %2312 = vmatprep.subr.mxu0 0.0
    %2313 = vmatpush2.msra.mxu0 0.0
    %2314 = vmatprep.subr.mxu0 0.0
    %2315 = vmatpush2.msra.mxu0 0.0
    %2316 = vmatprep.subr.mxu0 0.0
    %2317 = vmatpush2.msra.mxu0 0.0
    %2318 = vmatprep.subr.mxu0 0.0
    %2319 = vmatpush2.msra.mxu0 0.0
    %2320 = vmatprep.subr.mxu0 0.0
    %2321 = vmatpush2.msra.mxu0 0.0
    %2322 = vmatprep.subr.mxu0 0.0
    %2323 = vmatpush2.msra.mxu0 0.0
    %2324 = vmatprep.subr.mxu0 0.0
    %2325 = vmatpush2.msra.mxu0 0.0
    %2326 = vmatprep.subr.mxu0 0.0
    %2327 = vmatpush2.msra.mxu0 0.0
    %2328 = vmatprep.subr.mxu0 0.0
    %2329 = vmatpush2.msra.mxu0 0.0
    %2330 = vmatprep.subr.mxu0 0.0
    %2331 = vmatpush2.msra.mxu0 0.0
    %2332 = vmatprep.subr.mxu0 0.0
    %2333 = vmatpush2.msra.mxu0 0.0
    %2334 = vmatprep.subr.mxu0 0.0
    %2335 = vmatpush2.msra.mxu0 0.0
    %2336 = vmatprep.subr.mxu0 0.0
    %2337 = vmatpush2.msra.mxu0 0.0
    %2338 = vmatprep.subr.mxu0 0.0
    %2339 = vmatpush2.msra.mxu0 0.0
    %2340 = vmatprep.subr.mxu0 0.0
    %2341 = vmatpush2.msra.mxu0 0.0
    %2342 = vmatprep.mubr.f32.mxu0 0.0
    %2343 = vmatmul.mubr.f32.gmra.mxu0 %v2276
    %v2344 = vpop.f32.mrf.mxu0
    %v2345 = vadd.f32 0.0, %v2344
    %v2346 = vpop.f32.mrf.mxu0
    %2347 = vdwg.mxu0
    %v2348 = vadd.f32 %v2264, %v2345
    %s2349 = scalar_lea.vmem %s7, 128
    %v2350 = vld [vmem:[%s2349] sm:$0xff]
    %v2351 = vld [vmem:[%s2349 + $0x8] sm:$0xff]
    %v2352 = vld [vmem:[%s2349 + $0x10] sm:$0xff]
    %v2353 = vld [vmem:[%s2349 + $0x18] sm:$0xff]
    %v2355 = vrot.slane %v2268, 1
    %v2356 = vrot.slane %v2269, 1
    %v2357 = vsel %vm2035, %v2355, %v2356
    %v2358 = vsel %vm50, %v2357, 0
    %2360 = vmatprep.subr.mxu0 0.0
    %2361 = vmatpush1.msra.mxu0 0.0
    %2362 = vmatprep.subr.mxu0 0.0
    %2363 = vmatpush1.msra.mxu0 0.0
    %2364 = vmatprep.subr.mxu0 0.0
    %2365 = vmatpush1.msra.mxu0 0.0
    %2366 = vmatprep.subr.mxu0 0.0
    %2367 = vmatpush1.msra.mxu0 0.0
    %2368 = vmatprep.subr.mxu0 0.0
    %2369 = vmatpush1.msra.mxu0 0.0
    %2370 = vmatprep.subr.mxu0 0.0
    %2371 = vmatpush1.msra.mxu0 0.0
    %2372 = vmatprep.subr.mxu0 0.0
    %2373 = vmatpush1.msra.mxu0 0.0
    %2374 = vmatprep.subr.mxu0 0.0
    %2375 = vmatpush1.msra.mxu0 0.0
    %2376 = vmatprep.subr.mxu0 0.0
    %2377 = vmatpush1.msra.mxu0 0.0
    %2378 = vmatprep.subr.mxu0 0.0
    %2379 = vmatpush1.msra.mxu0 0.0
    %2380 = vmatprep.subr.mxu0 0.0
    %2381 = vmatpush1.msra.mxu0 0.0
    %2382 = vmatprep.subr.mxu0 0.0
    %2383 = vmatpush1.msra.mxu0 0.0
    %2384 = vmatprep.subr.mxu0 0.0
    %2385 = vmatpush1.msra.mxu0 %v2353
    %2386 = vmatprep.subr.mxu0 0.0
    %2387 = vmatpush1.msra.mxu0 %v2352
    %2388 = vmatprep.subr.mxu0 0.0
    %2389 = vmatpush1.msra.mxu0 %v2351
    %2390 = vmatprep.subr.mxu0 0.0
    %2391 = vmatpush1.msra.mxu0 %v2350
    %2392 = vmatprep.subr.mxu0 0.0
    %2393 = vmatpush2.msra.mxu0 0.0
    %2394 = vmatprep.subr.mxu0 0.0
    %2395 = vmatpush2.msra.mxu0 0.0
    %2396 = vmatprep.subr.mxu0 0.0
    %2397 = vmatpush2.msra.mxu0 0.0
    %2398 = vmatprep.subr.mxu0 0.0
    %2399 = vmatpush2.msra.mxu0 0.0
    %2400 = vmatprep.subr.mxu0 0.0
    %2401 = vmatpush2.msra.mxu0 0.0
    %2402 = vmatprep.subr.mxu0 0.0
    %2403 = vmatpush2.msra.mxu0 0.0
    %2404 = vmatprep.subr.mxu0 0.0
    %2405 = vmatpush2.msra.mxu0 0.0
    %2406 = vmatprep.subr.mxu0 0.0
    %2407 = vmatpush2.msra.mxu0 0.0
    %2408 = vmatprep.subr.mxu0 0.0
    %2409 = vmatpush2.msra.mxu0 0.0
    %2410 = vmatprep.subr.mxu0 0.0
    %2411 = vmatpush2.msra.mxu0 0.0
    %2412 = vmatprep.subr.mxu0 0.0
    %2413 = vmatpush2.msra.mxu0 0.0
    %2414 = vmatprep.subr.mxu0 0.0
    %2415 = vmatpush2.msra.mxu0 0.0
    %2416 = vmatprep.subr.mxu0 0.0
    %2417 = vmatpush2.msra.mxu0 0.0
    %2418 = vmatprep.subr.mxu0 0.0
    %2419 = vmatpush2.msra.mxu0 0.0
    %2420 = vmatprep.subr.mxu0 0.0
    %2421 = vmatpush2.msra.mxu0 0.0
    %2422 = vmatprep.subr.mxu0 0.0
    %2423 = vmatpush2.msra.mxu0 0.0
    %2424 = vmatprep.mubr.f32.mxu0 0.0
    %2425 = vmatmul.mubr.f32.gmra.mxu0 %v2358
    %v2426 = vpop.f32.mrf.mxu0
    %v2427 = vadd.f32 0.0, %v2426
    %v2428 = vpop.f32.mrf.mxu0
    %2429 = vdwg.mxu0
    %v2430 = vadd.f32 %v2348, %v2427
    %s2431 = scalar_lea.vmem %s7, 160
    %v2432 = vld [vmem:[%s2431] sm:$0xff]
    %v2433 = vld [vmem:[%s2431 + $0x8] sm:$0xff]
    %v2434 = vld [vmem:[%s2431 + $0x10] sm:$0xff]
    %v2435 = vld [vmem:[%s2431 + $0x18] sm:$0xff]
    %v2436 = vrot.slane %v2268, 2
    %v2437 = vrot.slane %v2269, 2
    %v2438 = vsel %vm2188, %v2436, %v2437
    %v2439 = vsel %vm50, %v2438, 0
    %2441 = vmatprep.subr.mxu0 0.0
    %2442 = vmatpush1.msra.mxu0 0.0
    %2443 = vmatprep.subr.mxu0 0.0
    %2444 = vmatpush1.msra.mxu0 0.0
    %2445 = vmatprep.subr.mxu0 0.0
    %2446 = vmatpush1.msra.mxu0 0.0
    %2447 = vmatprep.subr.mxu0 0.0
    %2448 = vmatpush1.msra.mxu0 0.0
    %2449 = vmatprep.subr.mxu0 0.0
    %2450 = vmatpush1.msra.mxu0 0.0
    %2451 = vmatprep.subr.mxu0 0.0
    %2452 = vmatpush1.msra.mxu0 0.0
    %2453 = vmatprep.subr.mxu0 0.0
    %2454 = vmatpush1.msra.mxu0 0.0
    %2455 = vmatprep.subr.mxu0 0.0
    %2456 = vmatpush1.msra.mxu0 0.0
    %2457 = vmatprep.subr.mxu0 0.0
    %2458 = vmatpush1.msra.mxu0 0.0
    %2459 = vmatprep.subr.mxu0 0.0
    %2460 = vmatpush1.msra.mxu0 0.0
    %2461 = vmatprep.subr.mxu0 0.0
    %2462 = vmatpush1.msra.mxu0 0.0
    %2463 = vmatprep.subr.mxu0 0.0
    %2464 = vmatpush1.msra.mxu0 0.0
    %2465 = vmatprep.subr.mxu0 0.0
    %2466 = vmatpush1.msra.mxu0 %v2435
    %2467 = vmatprep.subr.mxu0 0.0
    %2468 = vmatpush1.msra.mxu0 %v2434
    %2469 = vmatprep.subr.mxu0 0.0
    %2470 = vmatpush1.msra.mxu0 %v2433
    %2471 = vmatprep.subr.mxu0 0.0
    %2472 = vmatpush1.msra.mxu0 %v2432
    %2473 = vmatprep.subr.mxu0 0.0
    %2474 = vmatpush2.msra.mxu0 0.0
    %2475 = vmatprep.subr.mxu0 0.0
    %2476 = vmatpush2.msra.mxu0 0.0
    %2477 = vmatprep.subr.mxu0 0.0
    %2478 = vmatpush2.msra.mxu0 0.0
    %2479 = vmatprep.subr.mxu0 0.0
    %2480 = vmatpush2.msra.mxu0 0.0
    %2481 = vmatprep.subr.mxu0 0.0
    %2482 = vmatpush2.msra.mxu0 0.0
    %2483 = vmatprep.subr.mxu0 0.0
    %2484 = vmatpush2.msra.mxu0 0.0
    %2485 = vmatprep.subr.mxu0 0.0
    %2486 = vmatpush2.msra.mxu0 0.0
    %2487 = vmatprep.subr.mxu0 0.0
    %2488 = vmatpush2.msra.mxu0 0.0
    %2489 = vmatprep.subr.mxu0 0.0
    %2490 = vmatpush2.msra.mxu0 0.0
    %2491 = vmatprep.subr.mxu0 0.0
    %2492 = vmatpush2.msra.mxu0 0.0
    %2493 = vmatprep.subr.mxu0 0.0
    %2494 = vmatpush2.msra.mxu0 0.0
    %2495 = vmatprep.subr.mxu0 0.0
    %2496 = vmatpush2.msra.mxu0 0.0
    %2497 = vmatprep.subr.mxu0 0.0
    %2498 = vmatpush2.msra.mxu0 0.0
    %2499 = vmatprep.subr.mxu0 0.0
    %2500 = vmatpush2.msra.mxu0 0.0
    %2501 = vmatprep.subr.mxu0 0.0
    %2502 = vmatpush2.msra.mxu0 0.0
    %2503 = vmatprep.subr.mxu0 0.0
    %2504 = vmatpush2.msra.mxu0 0.0
    %2505 = vmatprep.mubr.f32.mxu0 0.0
    %2506 = vmatmul.mubr.f32.gmra.mxu0 %v2439
    %v2507 = vpop.f32.mrf.mxu0
    %v2508 = vadd.f32 0.0, %v2507
    %v2509 = vpop.f32.mrf.mxu0
    %2510 = vdwg.mxu0
    %v2511 = vadd.f32 %v2430, %v2508
    %s2512 = sadd.s32 %s2015, 2
    %s2513 = smul.u32 %s2512, 16
    %s2514 = scalar_lea.vmem [#allocation3], %s2513
    %v2515 = vld [vmem:[%s2514] sm:$0xff]
    %v2516 = vld [vmem:[%s2514 + $0x8] sm:$0x3]
    %s2517 = scalar_lea.vmem %s7, 192
    %v2518 = vld [vmem:[%s2517] sm:$0xff]
    %v2519 = vld [vmem:[%s2517 + $0x8] sm:$0xff]
    %v2520 = vld [vmem:[%s2517 + $0x10] sm:$0xff]
    %v2521 = vld [vmem:[%s2517 + $0x18] sm:$0xff]
    %v2523 = vsel %vm50, %v2515, 0
    %2525 = vmatprep.subr.mxu0 0.0
    %2526 = vmatpush1.msra.mxu0 0.0
    %2527 = vmatprep.subr.mxu0 0.0
    %2528 = vmatpush1.msra.mxu0 0.0
    %2529 = vmatprep.subr.mxu0 0.0
    %2530 = vmatpush1.msra.mxu0 0.0
    %2531 = vmatprep.subr.mxu0 0.0
    %2532 = vmatpush1.msra.mxu0 0.0
    %2533 = vmatprep.subr.mxu0 0.0
    %2534 = vmatpush1.msra.mxu0 0.0
    %2535 = vmatprep.subr.mxu0 0.0
    %2536 = vmatpush1.msra.mxu0 0.0
    %2537 = vmatprep.subr.mxu0 0.0
    %2538 = vmatpush1.msra.mxu0 0.0
    %2539 = vmatprep.subr.mxu0 0.0
    %2540 = vmatpush1.msra.mxu0 0.0
    %2541 = vmatprep.subr.mxu0 0.0
    %2542 = vmatpush1.msra.mxu0 0.0
    %2543 = vmatprep.subr.mxu0 0.0
    %2544 = vmatpush1.msra.mxu0 0.0
    %2545 = vmatprep.subr.mxu0 0.0
    %2546 = vmatpush1.msra.mxu0 0.0
    %2547 = vmatprep.subr.mxu0 0.0
    %2548 = vmatpush1.msra.mxu0 0.0
    %2549 = vmatprep.subr.mxu0 0.0
    %2550 = vmatpush1.msra.mxu0 %v2521
    %2551 = vmatprep.subr.mxu0 0.0
    %2552 = vmatpush1.msra.mxu0 %v2520
    %2553 = vmatprep.subr.mxu0 0.0
    %2554 = vmatpush1.msra.mxu0 %v2519
    %2555 = vmatprep.subr.mxu0 0.0
    %2556 = vmatpush1.msra.mxu0 %v2518
    %2557 = vmatprep.subr.mxu0 0.0
    %2558 = vmatpush2.msra.mxu0 0.0
    %2559 = vmatprep.subr.mxu0 0.0
    %2560 = vmatpush2.msra.mxu0 0.0
    %2561 = vmatprep.subr.mxu0 0.0
    %2562 = vmatpush2.msra.mxu0 0.0
    %2563 = vmatprep.subr.mxu0 0.0
    %2564 = vmatpush2.msra.mxu0 0.0
    %2565 = vmatprep.subr.mxu0 0.0
    %2566 = vmatpush2.msra.mxu0 0.0
    %2567 = vmatprep.subr.mxu0 0.0
    %2568 = vmatpush2.msra.mxu0 0.0
    %2569 = vmatprep.subr.mxu0 0.0
    %2570 = vmatpush2.msra.mxu0 0.0
    %2571 = vmatprep.subr.mxu0 0.0
    %2572 = vmatpush2.msra.mxu0 0.0
    %2573 = vmatprep.subr.mxu0 0.0
    %2574 = vmatpush2.msra.mxu0 0.0
    %2575 = vmatprep.subr.mxu0 0.0
    %2576 = vmatpush2.msra.mxu0 0.0
    %2577 = vmatprep.subr.mxu0 0.0
    %2578 = vmatpush2.msra.mxu0 0.0
    %2579 = vmatprep.subr.mxu0 0.0
    %2580 = vmatpush2.msra.mxu0 0.0
    %2581 = vmatprep.subr.mxu0 0.0
    %2582 = vmatpush2.msra.mxu0 0.0
    %2583 = vmatprep.subr.mxu0 0.0
    %2584 = vmatpush2.msra.mxu0 0.0
    %2585 = vmatprep.subr.mxu0 0.0
    %2586 = vmatpush2.msra.mxu0 0.0
    %2587 = vmatprep.subr.mxu0 0.0
    %2588 = vmatpush2.msra.mxu0 0.0
    %2589 = vmatprep.mubr.f32.mxu0 0.0
    %2590 = vmatmul.mubr.f32.gmra.mxu0 %v2523
    %v2591 = vpop.f32.mrf.mxu0
    %v2592 = vadd.f32 0.0, %v2591
    %v2593 = vpop.f32.mrf.mxu0
    %2594 = vdwg.mxu0
    %v2595 = vadd.f32 %v2511, %v2592
    %s2596 = scalar_lea.vmem %s7, 224
    %v2597 = vld [vmem:[%s2596] sm:$0xff]
    %v2598 = vld [vmem:[%s2596 + $0x8] sm:$0xff]
    %v2599 = vld [vmem:[%s2596 + $0x10] sm:$0xff]
    %v2600 = vld [vmem:[%s2596 + $0x18] sm:$0xff]
    %v2602 = vrot.slane %v2515, 1
    %v2603 = vrot.slane %v2516, 1
    %v2604 = vsel %vm2035, %v2602, %v2603
    %v2605 = vsel %vm50, %v2604, 0
    %2607 = vmatprep.subr.mxu0 0.0
    %2608 = vmatpush1.msra.mxu0 0.0
    %2609 = vmatprep.subr.mxu0 0.0
    %2610 = vmatpush1.msra.mxu0 0.0
    %2611 = vmatprep.subr.mxu0 0.0
    %2612 = vmatpush1.msra.mxu0 0.0
    %2613 = vmatprep.subr.mxu0 0.0
    %2614 = vmatpush1.msra.mxu0 0.0
    %2615 = vmatprep.subr.mxu0 0.0
    %2616 = vmatpush1.msra.mxu0 0.0
    %2617 = vmatprep.subr.mxu0 0.0
    %2618 = vmatpush1.msra.mxu0 0.0
    %2619 = vmatprep.subr.mxu0 0.0
    %2620 = vmatpush1.msra.mxu0 0.0
    %2621 = vmatprep.subr.mxu0 0.0
    %2622 = vmatpush1.msra.mxu0 0.0
    %2623 = vmatprep.subr.mxu0 0.0
    %2624 = vmatpush1.msra.mxu0 0.0
    %2625 = vmatprep.subr.mxu0 0.0
    %2626 = vmatpush1.msra.mxu0 0.0
    %2627 = vmatprep.subr.mxu0 0.0
    %2628 = vmatpush1.msra.mxu0 0.0
    %2629 = vmatprep.subr.mxu0 0.0
    %2630 = vmatpush1.msra.mxu0 0.0
    %2631 = vmatprep.subr.mxu0 0.0
    %2632 = vmatpush1.msra.mxu0 %v2600
    %2633 = vmatprep.subr.mxu0 0.0
    %2634 = vmatpush1.msra.mxu0 %v2599
    %2635 = vmatprep.subr.mxu0 0.0
    %2636 = vmatpush1.msra.mxu0 %v2598
    %2637 = vmatprep.subr.mxu0 0.0
    %2638 = vmatpush1.msra.mxu0 %v2597
    %2639 = vmatprep.subr.mxu0 0.0
    %2640 = vmatpush2.msra.mxu0 0.0
    %2641 = vmatprep.subr.mxu0 0.0
    %2642 = vmatpush2.msra.mxu0 0.0
    %2643 = vmatprep.subr.mxu0 0.0
    %2644 = vmatpush2.msra.mxu0 0.0
    %2645 = vmatprep.subr.mxu0 0.0
    %2646 = vmatpush2.msra.mxu0 0.0
    %2647 = vmatprep.subr.mxu0 0.0
    %2648 = vmatpush2.msra.mxu0 0.0
    %2649 = vmatprep.subr.mxu0 0.0
    %2650 = vmatpush2.msra.mxu0 0.0
    %2651 = vmatprep.subr.mxu0 0.0
    %2652 = vmatpush2.msra.mxu0 0.0
    %2653 = vmatprep.subr.mxu0 0.0
    %2654 = vmatpush2.msra.mxu0 0.0
    %2655 = vmatprep.subr.mxu0 0.0
    %2656 = vmatpush2.msra.mxu0 0.0
    %2657 = vmatprep.subr.mxu0 0.0
    %2658 = vmatpush2.msra.mxu0 0.0
    %2659 = vmatprep.subr.mxu0 0.0
    %2660 = vmatpush2.msra.mxu0 0.0
    %2661 = vmatprep.subr.mxu0 0.0
    %2662 = vmatpush2.msra.mxu0 0.0
    %2663 = vmatprep.subr.mxu0 0.0
    %2664 = vmatpush2.msra.mxu0 0.0
    %2665 = vmatprep.subr.mxu0 0.0
    %2666 = vmatpush2.msra.mxu0 0.0
    %2667 = vmatprep.subr.mxu0 0.0
    %2668 = vmatpush2.msra.mxu0 0.0
    %2669 = vmatprep.subr.mxu0 0.0
    %2670 = vmatpush2.msra.mxu0 0.0
    %2671 = vmatprep.mubr.f32.mxu0 0.0
    %2672 = vmatmul.mubr.f32.gmra.mxu0 %v2605
    %v2673 = vpop.f32.mrf.mxu0
    %v2674 = vadd.f32 0.0, %v2673
    %v2675 = vpop.f32.mrf.mxu0
    %2676 = vdwg.mxu0
    %v2677 = vadd.f32 %v2595, %v2674
    %s2678 = scalar_lea.vmem %s7, 256
    %v2679 = vld [vmem:[%s2678] sm:$0xff]
    %v2680 = vld [vmem:[%s2678 + $0x8] sm:$0xff]
    %v2681 = vld [vmem:[%s2678 + $0x10] sm:$0xff]
    %v2682 = vld [vmem:[%s2678 + $0x18] sm:$0xff]
    %v2683 = vrot.slane %v2515, 2
    %v2684 = vrot.slane %v2516, 2
    %v2685 = vsel %vm2188, %v2683, %v2684
    %v2686 = vsel %vm50, %v2685, 0
    %2688 = vmatprep.subr.mxu0 0.0
    %2689 = vmatpush1.msra.mxu0 0.0
    %2690 = vmatprep.subr.mxu0 0.0
    %2691 = vmatpush1.msra.mxu0 0.0
    %2692 = vmatprep.subr.mxu0 0.0
    %2693 = vmatpush1.msra.mxu0 0.0
    %2694 = vmatprep.subr.mxu0 0.0
    %2695 = vmatpush1.msra.mxu0 0.0
    %2696 = vmatprep.subr.mxu0 0.0
    %2697 = vmatpush1.msra.mxu0 0.0
    %2698 = vmatprep.subr.mxu0 0.0
    %2699 = vmatpush1.msra.mxu0 0.0
    %2700 = vmatprep.subr.mxu0 0.0
    %2701 = vmatpush1.msra.mxu0 0.0
    %2702 = vmatprep.subr.mxu0 0.0
    %2703 = vmatpush1.msra.mxu0 0.0
    %2704 = vmatprep.subr.mxu0 0.0
    %2705 = vmatpush1.msra.mxu0 0.0
    %2706 = vmatprep.subr.mxu0 0.0
    %2707 = vmatpush1.msra.mxu0 0.0
    %2708 = vmatprep.subr.mxu0 0.0
    %2709 = vmatpush1.msra.mxu0 0.0
    %2710 = vmatprep.subr.mxu0 0.0
    %2711 = vmatpush1.msra.mxu0 0.0
    %2712 = vmatprep.subr.mxu0 0.0
    %2713 = vmatpush1.msra.mxu0 %v2682
    %2714 = vmatprep.subr.mxu0 0.0
    %2715 = vmatpush1.msra.mxu0 %v2681
    %2716 = vmatprep.subr.mxu0 0.0
    %2717 = vmatpush1.msra.mxu0 %v2680
    %2718 = vmatprep.subr.mxu0 0.0
    %2719 = vmatpush1.msra.mxu0 %v2679
    %2720 = vmatprep.subr.mxu0 0.0
    %2721 = vmatpush2.msra.mxu0 0.0
    %2722 = vmatprep.subr.mxu0 0.0
    %2723 = vmatpush2.msra.mxu0 0.0
    %2724 = vmatprep.subr.mxu0 0.0
    %2725 = vmatpush2.msra.mxu0 0.0
    %2726 = vmatprep.subr.mxu0 0.0
    %2727 = vmatpush2.msra.mxu0 0.0
    %2728 = vmatprep.subr.mxu0 0.0
    %2729 = vmatpush2.msra.mxu0 0.0
    %2730 = vmatprep.subr.mxu0 0.0
    %2731 = vmatpush2.msra.mxu0 0.0
    %2732 = vmatprep.subr.mxu0 0.0
    %2733 = vmatpush2.msra.mxu0 0.0
    %2734 = vmatprep.subr.mxu0 0.0
    %2735 = vmatpush2.msra.mxu0 0.0
    %2736 = vmatprep.subr.mxu0 0.0
    %2737 = vmatpush2.msra.mxu0 0.0
    %2738 = vmatprep.subr.mxu0 0.0
    %2739 = vmatpush2.msra.mxu0 0.0
    %2740 = vmatprep.subr.mxu0 0.0
    %2741 = vmatpush2.msra.mxu0 0.0
    %2742 = vmatprep.subr.mxu0 0.0
    %2743 = vmatpush2.msra.mxu0 0.0
    %2744 = vmatprep.subr.mxu0 0.0
    %2745 = vmatpush2.msra.mxu0 0.0
    %2746 = vmatprep.subr.mxu0 0.0
    %2747 = vmatpush2.msra.mxu0 0.0
    %2748 = vmatprep.subr.mxu0 0.0
    %2749 = vmatpush2.msra.mxu0 0.0
    %2750 = vmatprep.subr.mxu0 0.0
    %2751 = vmatpush2.msra.mxu0 0.0
    %2752 = vmatprep.mubr.f32.mxu0 0.0
    %2753 = vmatmul.mubr.f32.gmra.mxu0 %v2686
    %v2754 = vpop.f32.mrf.mxu0
    %v2755 = vadd.f32 0.0, %v2754
    %v2756 = vpop.f32.mrf.mxu0
    %2757 = vdwg.mxu0
    %v2758 = vadd.f32 %v2677, %v2755
    %v2759 = vld [vmem:[%s8] sm:$0x1]
    %v2761 = vlaneseq
    %v2762 = vshrl.u32 %v2761, 7
    %v2763 = vsub.s32 0, %v2762
    %v2764 = vrot.slane %v2759, %v2763
    %v2766 = vadd.f32 %v2758, %v2764
    %v2767 = vmax.f32 %v2766, 0.0
    %v2768 = vld [vmem:[%s9] sm:$0xff]
    %v2769 = vld [vmem:[%s9 + $0x8] sm:$0xff]
    %v2770 = vld [vmem:[%s9 + $0x10] sm:$0xff]
    %v2771 = vld [vmem:[%s9 + $0x18] sm:$0xff]
    %v2772 = vld [vmem:[%s10] sm:$0x1]
    %v2774 = vlaneseq
    %v2775 = vshrl.u32 %v2774, 7
    %v2776 = vsub.s32 0, %v2775
    %v2777 = vrot.slane %v2772, %v2776
    %v2780 = vsel %vm50, %v2767, 0
    %2782 = vmatprep.subr.mxu0 0.0
    %2783 = vmatpush1.msra.mxu0 0.0
    %2784 = vmatprep.subr.mxu0 0.0
    %2785 = vmatpush1.msra.mxu0 0.0
    %2786 = vmatprep.subr.mxu0 0.0
    %2787 = vmatpush1.msra.mxu0 0.0
    %2788 = vmatprep.subr.mxu0 0.0
    %2789 = vmatpush1.msra.mxu0 0.0
    %2790 = vmatprep.subr.mxu0 0.0
    %2791 = vmatpush1.msra.mxu0 0.0
    %2792 = vmatprep.subr.mxu0 0.0
    %2793 = vmatpush1.msra.mxu0 0.0
    %2794 = vmatprep.subr.mxu0 0.0
    %2795 = vmatpush1.msra.mxu0 0.0
    %2796 = vmatprep.subr.mxu0 0.0
    %2797 = vmatpush1.msra.mxu0 0.0
    %2798 = vmatprep.subr.mxu0 0.0
    %2799 = vmatpush1.msra.mxu0 0.0
    %2800 = vmatprep.subr.mxu0 0.0
    %2801 = vmatpush1.msra.mxu0 0.0
    %2802 = vmatprep.subr.mxu0 0.0
    %2803 = vmatpush1.msra.mxu0 0.0
    %2804 = vmatprep.subr.mxu0 0.0
    %2805 = vmatpush1.msra.mxu0 0.0
    %2806 = vmatprep.subr.mxu0 0.0
    %2807 = vmatpush1.msra.mxu0 %v2771
    %2808 = vmatprep.subr.mxu0 0.0
    %2809 = vmatpush1.msra.mxu0 %v2770
    %2810 = vmatprep.subr.mxu0 0.0
    %2811 = vmatpush1.msra.mxu0 %v2769
    %2812 = vmatprep.subr.mxu0 0.0
    %2813 = vmatpush1.msra.mxu0 %v2768
    %2814 = vmatprep.subr.mxu0 0.0
    %2815 = vmatpush2.msra.mxu0 0.0
    %2816 = vmatprep.subr.mxu0 0.0
    %2817 = vmatpush2.msra.mxu0 0.0
    %2818 = vmatprep.subr.mxu0 0.0
    %2819 = vmatpush2.msra.mxu0 0.0
    %2820 = vmatprep.subr.mxu0 0.0
    %2821 = vmatpush2.msra.mxu0 0.0
    %2822 = vmatprep.subr.mxu0 0.0
    %2823 = vmatpush2.msra.mxu0 0.0
    %2824 = vmatprep.subr.mxu0 0.0
    %2825 = vmatpush2.msra.mxu0 0.0
    %2826 = vmatprep.subr.mxu0 0.0
    %2827 = vmatpush2.msra.mxu0 0.0
    %2828 = vmatprep.subr.mxu0 0.0
    %2829 = vmatpush2.msra.mxu0 0.0
    %2830 = vmatprep.subr.mxu0 0.0
    %2831 = vmatpush2.msra.mxu0 0.0
    %2832 = vmatprep.subr.mxu0 0.0
    %2833 = vmatpush2.msra.mxu0 0.0
    %2834 = vmatprep.subr.mxu0 0.0
    %2835 = vmatpush2.msra.mxu0 0.0
    %2836 = vmatprep.subr.mxu0 0.0
    %2837 = vmatpush2.msra.mxu0 0.0
    %2838 = vmatprep.subr.mxu0 0.0
    %2839 = vmatpush2.msra.mxu0 0.0
    %2840 = vmatprep.subr.mxu0 0.0
    %2841 = vmatpush2.msra.mxu0 0.0
    %2842 = vmatprep.subr.mxu0 0.0
    %2843 = vmatpush2.msra.mxu0 0.0
    %2844 = vmatprep.subr.mxu0 0.0
    %2845 = vmatpush2.msra.mxu0 0.0
    %2846 = vmatprep.mubr.f32.mxu0 0.0
    %2847 = vmatmul.mubr.f32.gmra.mxu0 %v2780
    %v2848 = vpop.f32.mrf.mxu0
    %v2849 = vadd.f32 %v2777, %v2848
    %v2850 = vpop.f32.mrf.mxu0
    %2851 = vdwg.mxu0
    %s2852 = scalar_lea.vmem [#allocation4], %s2266
    %2853 = vst.msk [vmem:[%s2852 + $0x1] sm:$0xff] %vm50, %v2849
  $region80: #{model_forward.1} parent=0 // loop_footer
    %s2019 = sadd.s32 1, %s2015
  $region81: #{model_forward.1} parent=0 // loop_footer_branch
    %2014 = sbr.rel target = $region77
  $region82: #{model_forward.1} parent=0 // loop_exit
    _
  loop: start=0, step=1, limit=8
  $region83: #{model_forward.1} parent=0 // loop_pre_header
    _
  $region84: #{model_forward.1} parent=0 // loop_header
    %s2855 = sphi 0, %s2859
    %p2856 = scmp.ge.s32.totalorder %s2855, 8
  $region85: #{model_forward.1} parent=0 // loop_header_branch
    %2858 = sbr.rel (%p2856) target = $region89
  $region86: #{model_forward.1} parent=0 // loop_body
    %s2860 = smul.u32 %s2855, 16
    %s2861 = scalar_lea.vmem [#allocation4], %s2860
    %v2862 = vld [vmem:[%s2861] sm:$0xff]
    %v2863 = vld [vmem:[%s2861 + $0x8] sm:$0x3]
    %v2864 = vld [vmem:[%s11] sm:$0xff]
    %v2865 = vld [vmem:[%s11 + $0x8] sm:$0xff]
    %v2866 = vld [vmem:[%s11 + $0x10] sm:$0xff]
    %v2867 = vld [vmem:[%s11 + $0x18] sm:$0xff]
    %s2868 = scalar_lea.vmem %s11, 32
    %v2869 = vld [vmem:[%s2868] sm:$0xff]
    %v2870 = vld [vmem:[%s2868 + $0x8] sm:$0xff]
    %v2871 = vld [vmem:[%s2868 + $0x10] sm:$0xff]
    %v2872 = vld [vmem:[%s2868 + $0x18] sm:$0xff]
    %vm2875 = vcmask 1046528
    %v2876 = vrot.slane %v2862, 1
    %v2877 = vrot.slane %v2863, 1
    %v2878 = vsel %vm2875, %v2876, %v2877
    %v2879 = vsel %vm50, %v2878, 0
    %2881 = vmatprep.subr.mxu0 0.0
    %2882 = vmatpush1.msra.mxu0 0.0
    %2883 = vmatprep.subr.mxu0 0.0
    %2884 = vmatpush1.msra.mxu0 0.0
    %2885 = vmatprep.subr.mxu0 0.0
    %2886 = vmatpush1.msra.mxu0 0.0
    %2887 = vmatprep.subr.mxu0 0.0
    %2888 = vmatpush1.msra.mxu0 0.0
    %2889 = vmatprep.subr.mxu0 0.0
    %2890 = vmatpush1.msra.mxu0 0.0
    %2891 = vmatprep.subr.mxu0 0.0
    %2892 = vmatpush1.msra.mxu0 0.0
    %2893 = vmatprep.subr.mxu0 0.0
    %2894 = vmatpush1.msra.mxu0 0.0
    %2895 = vmatprep.subr.mxu0 0.0
    %2896 = vmatpush1.msra.mxu0 0.0
    %2897 = vmatprep.subr.mxu0 0.0
    %2898 = vmatpush1.msra.mxu0 0.0
    %2899 = vmatprep.subr.mxu0 0.0
    %2900 = vmatpush1.msra.mxu0 0.0
    %2901 = vmatprep.subr.mxu0 0.0
    %2902 = vmatpush1.msra.mxu0 0.0
    %2903 = vmatprep.subr.mxu0 0.0
    %2904 = vmatpush1.msra.mxu0 0.0
    %2905 = vmatprep.subr.mxu0 0.0
    %2906 = vmatpush1.msra.mxu0 %v2872
    %2907 = vmatprep.subr.mxu0 0.0
    %2908 = vmatpush1.msra.mxu0 %v2871
    %2909 = vmatprep.subr.mxu0 0.0
    %2910 = vmatpush1.msra.mxu0 %v2870
    %2911 = vmatprep.subr.mxu0 0.0
    %2912 = vmatpush1.msra.mxu0 %v2869
    %2913 = vmatprep.subr.mxu0 0.0
    %2914 = vmatpush2.msra.mxu0 0.0
    %2915 = vmatprep.subr.mxu0 0.0
    %2916 = vmatpush2.msra.mxu0 0.0
    %2917 = vmatprep.subr.mxu0 0.0
    %2918 = vmatpush2.msra.mxu0 0.0
    %2919 = vmatprep.subr.mxu0 0.0
    %2920 = vmatpush2.msra.mxu0 0.0
    %2921 = vmatprep.subr.mxu0 0.0
    %2922 = vmatpush2.msra.mxu0 0.0
    %2923 = vmatprep.subr.mxu0 0.0
    %2924 = vmatpush2.msra.mxu0 0.0
    %2925 = vmatprep.subr.mxu0 0.0
    %2926 = vmatpush2.msra.mxu0 0.0
    %2927 = vmatprep.subr.mxu0 0.0
    %2928 = vmatpush2.msra.mxu0 0.0
    %2929 = vmatprep.subr.mxu0 0.0
    %2930 = vmatpush2.msra.mxu0 0.0
    %2931 = vmatprep.subr.mxu0 0.0
    %2932 = vmatpush2.msra.mxu0 0.0
    %2933 = vmatprep.subr.mxu0 0.0
    %2934 = vmatpush2.msra.mxu0 0.0
    %2935 = vmatprep.subr.mxu0 0.0
    %2936 = vmatpush2.msra.mxu0 0.0
    %2937 = vmatprep.subr.mxu0 0.0
    %2938 = vmatpush2.msra.mxu0 0.0
    %2939 = vmatprep.subr.mxu0 0.0
    %2940 = vmatpush2.msra.mxu0 0.0
    %2941 = vmatprep.subr.mxu0 0.0
    %2942 = vmatpush2.msra.mxu0 0.0
    %2943 = vmatprep.subr.mxu0 0.0
    %2944 = vmatpush2.msra.mxu0 0.0
    %2945 = vmatprep.mubr.f32.mxu0 0.0
    %2946 = vmatmul.mubr.f32.gmra.mxu0 %v2879
    %v2947 = vpop.f32.mrf.mxu0
    %v2948 = vadd.f32 0.0, %v2947
    %v2949 = vpop.f32.mrf.mxu0
    %2950 = vdwg.mxu0
    %v2951 = vsel %vm50, %v2862, 0
    %2953 = vmatprep.subr.mxu0 0.0
    %2954 = vmatpush1.msra.mxu0 0.0
    %2955 = vmatprep.subr.mxu0 0.0
    %2956 = vmatpush1.msra.mxu0 0.0
    %2957 = vmatprep.subr.mxu0 0.0
    %2958 = vmatpush1.msra.mxu0 0.0
    %2959 = vmatprep.subr.mxu0 0.0
    %2960 = vmatpush1.msra.mxu0 0.0
    %2961 = vmatprep.subr.mxu0 0.0
    %2962 = vmatpush1.msra.mxu0 0.0
    %2963 = vmatprep.subr.mxu0 0.0
    %2964 = vmatpush1.msra.mxu0 0.0
    %2965 = vmatprep.subr.mxu0 0.0
    %2966 = vmatpush1.msra.mxu0 0.0
    %2967 = vmatprep.subr.mxu0 0.0
    %2968 = vmatpush1.msra.mxu0 0.0
    %2969 = vmatprep.subr.mxu0 0.0
    %2970 = vmatpush1.msra.mxu0 0.0
    %2971 = vmatprep.subr.mxu0 0.0
    %2972 = vmatpush1.msra.mxu0 0.0
    %2973 = vmatprep.subr.mxu0 0.0
    %2974 = vmatpush1.msra.mxu0 0.0
    %2975 = vmatprep.subr.mxu0 0.0
    %2976 = vmatpush1.msra.mxu0 0.0
    %2977 = vmatprep.subr.mxu0 0.0
    %2978 = vmatpush1.msra.mxu0 %v2867
    %2979 = vmatprep.subr.mxu0 0.0
    %2980 = vmatpush1.msra.mxu0 %v2866
    %2981 = vmatprep.subr.mxu0 0.0
    %2982 = vmatpush1.msra.mxu0 %v2865
    %2983 = vmatprep.subr.mxu0 0.0
    %2984 = vmatpush1.msra.mxu0 %v2864
    %2985 = vmatprep.subr.mxu0 0.0
    %2986 = vmatpush2.msra.mxu0 0.0
    %2987 = vmatprep.subr.mxu0 0.0
    %2988 = vmatpush2.msra.mxu0 0.0
    %2989 = vmatprep.subr.mxu0 0.0
    %2990 = vmatpush2.msra.mxu0 0.0
    %2991 = vmatprep.subr.mxu0 0.0
    %2992 = vmatpush2.msra.mxu0 0.0
    %2993 = vmatprep.subr.mxu0 0.0
    %2994 = vmatpush2.msra.mxu0 0.0
    %2995 = vmatprep.subr.mxu0 0.0
    %2996 = vmatpush2.msra.mxu0 0.0
    %2997 = vmatprep.subr.mxu0 0.0
    %2998 = vmatpush2.msra.mxu0 0.0
    %2999 = vmatprep.subr.mxu0 0.0
    %3000 = vmatpush2.msra.mxu0 0.0
    %3001 = vmatprep.subr.mxu0 0.0
    %3002 = vmatpush2.msra.mxu0 0.0
    %3003 = vmatprep.subr.mxu0 0.0
    %3004 = vmatpush2.msra.mxu0 0.0
    %3005 = vmatprep.subr.mxu0 0.0
    %3006 = vmatpush2.msra.mxu0 0.0
    %3007 = vmatprep.subr.mxu0 0.0
    %3008 = vmatpush2.msra.mxu0 0.0
    %3009 = vmatprep.subr.mxu0 0.0
    %3010 = vmatpush2.msra.mxu0 0.0
    %3011 = vmatprep.subr.mxu0 0.0
    %3012 = vmatpush2.msra.mxu0 0.0
    %3013 = vmatprep.subr.mxu0 0.0
    %3014 = vmatpush2.msra.mxu0 0.0
    %3015 = vmatprep.subr.mxu0 0.0
    %3016 = vmatpush2.msra.mxu0 0.0
    %3017 = vmatprep.mubr.f32.mxu0 0.0
    %3018 = vmatmul.mubr.f32.gmra.mxu0 %v2951
    %v3019 = vpop.f32.mrf.mxu0
    %v3020 = vadd.f32 %v2948, %v3019
    %v3021 = vpop.f32.mrf.mxu0
    %3022 = vdwg.mxu0
    %s3023 = scalar_lea.vmem %s11, 64
    %v3024 = vld [vmem:[%s3023] sm:$0xff]
    %v3025 = vld [vmem:[%s3023 + $0x8] sm:$0xff]
    %v3026 = vld [vmem:[%s3023 + $0x10] sm:$0xff]
    %v3027 = vld [vmem:[%s3023 + $0x18] sm:$0xff]
    %vm3028 = vcmask 1045504
    %v3029 = vrot.slane %v2862, 2
    %v3030 = vrot.slane %v2863, 2
    %v3031 = vsel %vm3028, %v3029, %v3030
    %v3032 = vsel %vm50, %v3031, 0
    %3034 = vmatprep.subr.mxu0 0.0
    %3035 = vmatpush1.msra.mxu0 0.0
    %3036 = vmatprep.subr.mxu0 0.0
    %3037 = vmatpush1.msra.mxu0 0.0
    %3038 = vmatprep.subr.mxu0 0.0
    %3039 = vmatpush1.msra.mxu0 0.0
    %3040 = vmatprep.subr.mxu0 0.0
    %3041 = vmatpush1.msra.mxu0 0.0
    %3042 = vmatprep.subr.mxu0 0.0
    %3043 = vmatpush1.msra.mxu0 0.0
    %3044 = vmatprep.subr.mxu0 0.0
    %3045 = vmatpush1.msra.mxu0 0.0
    %3046 = vmatprep.subr.mxu0 0.0
    %3047 = vmatpush1.msra.mxu0 0.0
    %3048 = vmatprep.subr.mxu0 0.0
    %3049 = vmatpush1.msra.mxu0 0.0
    %3050 = vmatprep.subr.mxu0 0.0
    %3051 = vmatpush1.msra.mxu0 0.0
    %3052 = vmatprep.subr.mxu0 0.0
    %3053 = vmatpush1.msra.mxu0 0.0
    %3054 = vmatprep.subr.mxu0 0.0
    %3055 = vmatpush1.msra.mxu0 0.0
    %3056 = vmatprep.subr.mxu0 0.0
    %3057 = vmatpush1.msra.mxu0 0.0
    %3058 = vmatprep.subr.mxu0 0.0
    %3059 = vmatpush1.msra.mxu0 %v3027
    %3060 = vmatprep.subr.mxu0 0.0
    %3061 = vmatpush1.msra.mxu0 %v3026
    %3062 = vmatprep.subr.mxu0 0.0
    %3063 = vmatpush1.msra.mxu0 %v3025
    %3064 = vmatprep.subr.mxu0 0.0
    %3065 = vmatpush1.msra.mxu0 %v3024
    %3066 = vmatprep.subr.mxu0 0.0
    %3067 = vmatpush2.msra.mxu0 0.0
    %3068 = vmatprep.subr.mxu0 0.0
    %3069 = vmatpush2.msra.mxu0 0.0
    %3070 = vmatprep.subr.mxu0 0.0
    %3071 = vmatpush2.msra.mxu0 0.0
    %3072 = vmatprep.subr.mxu0 0.0
    %3073 = vmatpush2.msra.mxu0 0.0
    %3074 = vmatprep.subr.mxu0 0.0
    %3075 = vmatpush2.msra.mxu0 0.0
    %3076 = vmatprep.subr.mxu0 0.0
    %3077 = vmatpush2.msra.mxu0 0.0
    %3078 = vmatprep.subr.mxu0 0.0
    %3079 = vmatpush2.msra.mxu0 0.0
    %3080 = vmatprep.subr.mxu0 0.0
    %3081 = vmatpush2.msra.mxu0 0.0
    %3082 = vmatprep.subr.mxu0 0.0
    %3083 = vmatpush2.msra.mxu0 0.0
    %3084 = vmatprep.subr.mxu0 0.0
    %3085 = vmatpush2.msra.mxu0 0.0
    %3086 = vmatprep.subr.mxu0 0.0
    %3087 = vmatpush2.msra.mxu0 0.0
    %3088 = vmatprep.subr.mxu0 0.0
    %3089 = vmatpush2.msra.mxu0 0.0
    %3090 = vmatprep.subr.mxu0 0.0
    %3091 = vmatpush2.msra.mxu0 0.0
    %3092 = vmatprep.subr.mxu0 0.0
    %3093 = vmatpush2.msra.mxu0 0.0
    %3094 = vmatprep.subr.mxu0 0.0
    %3095 = vmatpush2.msra.mxu0 0.0
    %3096 = vmatprep.subr.mxu0 0.0
    %3097 = vmatpush2.msra.mxu0 0.0
    %3098 = vmatprep.mubr.f32.mxu0 0.0
    %3099 = vmatmul.mubr.f32.gmra.mxu0 %v3032
    %v3100 = vpop.f32.mrf.mxu0
    %v3101 = vadd.f32 0.0, %v3100
    %v3102 = vpop.f32.mrf.mxu0
    %3103 = vdwg.mxu0
    %v3104 = vadd.f32 %v3020, %v3101
    %s3105 = sadd.s32 %s2855, 1
    %s3106 = smul.u32 %s3105, 16
    %s3107 = scalar_lea.vmem [#allocation4], %s3106
    %v3108 = vld [vmem:[%s3107] sm:$0xff]
    %v3109 = vld [vmem:[%s3107 + $0x8] sm:$0x3]
    %s3110 = scalar_lea.vmem %s11, 96
    %v3111 = vld [vmem:[%s3110] sm:$0xff]
    %v3112 = vld [vmem:[%s3110 + $0x8] sm:$0xff]
    %v3113 = vld [vmem:[%s3110 + $0x10] sm:$0xff]
    %v3114 = vld [vmem:[%s3110 + $0x18] sm:$0xff]
    %v3116 = vsel %vm50, %v3108, 0
    %3118 = vmatprep.subr.mxu0 0.0
    %3119 = vmatpush1.msra.mxu0 0.0
    %3120 = vmatprep.subr.mxu0 0.0
    %3121 = vmatpush1.msra.mxu0 0.0
    %3122 = vmatprep.subr.mxu0 0.0
    %3123 = vmatpush1.msra.mxu0 0.0
    %3124 = vmatprep.subr.mxu0 0.0
    %3125 = vmatpush1.msra.mxu0 0.0
    %3126 = vmatprep.subr.mxu0 0.0
    %3127 = vmatpush1.msra.mxu0 0.0
    %3128 = vmatprep.subr.mxu0 0.0
    %3129 = vmatpush1.msra.mxu0 0.0
    %3130 = vmatprep.subr.mxu0 0.0
    %3131 = vmatpush1.msra.mxu0 0.0
    %3132 = vmatprep.subr.mxu0 0.0
    %3133 = vmatpush1.msra.mxu0 0.0
    %3134 = vmatprep.subr.mxu0 0.0
    %3135 = vmatpush1.msra.mxu0 0.0
    %3136 = vmatprep.subr.mxu0 0.0
    %3137 = vmatpush1.msra.mxu0 0.0
    %3138 = vmatprep.subr.mxu0 0.0
    %3139 = vmatpush1.msra.mxu0 0.0
    %3140 = vmatprep.subr.mxu0 0.0
    %3141 = vmatpush1.msra.mxu0 0.0
    %3142 = vmatprep.subr.mxu0 0.0
    %3143 = vmatpush1.msra.mxu0 %v3114
    %3144 = vmatprep.subr.mxu0 0.0
    %3145 = vmatpush1.msra.mxu0 %v3113
    %3146 = vmatprep.subr.mxu0 0.0
    %3147 = vmatpush1.msra.mxu0 %v3112
    %3148 = vmatprep.subr.mxu0 0.0
    %3149 = vmatpush1.msra.mxu0 %v3111
    %3150 = vmatprep.subr.mxu0 0.0
    %3151 = vmatpush2.msra.mxu0 0.0
    %3152 = vmatprep.subr.mxu0 0.0
    %3153 = vmatpush2.msra.mxu0 0.0
    %3154 = vmatprep.subr.mxu0 0.0
    %3155 = vmatpush2.msra.mxu0 0.0
    %3156 = vmatprep.subr.mxu0 0.0
    %3157 = vmatpush2.msra.mxu0 0.0
    %3158 = vmatprep.subr.mxu0 0.0
    %3159 = vmatpush2.msra.mxu0 0.0
    %3160 = vmatprep.subr.mxu0 0.0
    %3161 = vmatpush2.msra.mxu0 0.0
    %3162 = vmatprep.subr.mxu0 0.0
    %3163 = vmatpush2.msra.mxu0 0.0
    %3164 = vmatprep.subr.mxu0 0.0
    %3165 = vmatpush2.msra.mxu0 0.0
    %3166 = vmatprep.subr.mxu0 0.0
    %3167 = vmatpush2.msra.mxu0 0.0
    %3168 = vmatprep.subr.mxu0 0.0
    %3169 = vmatpush2.msra.mxu0 0.0
    %3170 = vmatprep.subr.mxu0 0.0
    %3171 = vmatpush2.msra.mxu0 0.0
    %3172 = vmatprep.subr.mxu0 0.0
    %3173 = vmatpush2.msra.mxu0 0.0
    %3174 = vmatprep.subr.mxu0 0.0
    %3175 = vmatpush2.msra.mxu0 0.0
    %3176 = vmatprep.subr.mxu0 0.0
    %3177 = vmatpush2.msra.mxu0 0.0
    %3178 = vmatprep.subr.mxu0 0.0
    %3179 = vmatpush2.msra.mxu0 0.0
    %3180 = vmatprep.subr.mxu0 0.0
    %3181 = vmatpush2.msra.mxu0 0.0
    %3182 = vmatprep.mubr.f32.mxu0 0.0
    %3183 = vmatmul.mubr.f32.gmra.mxu0 %v3116
    %v3184 = vpop.f32.mrf.mxu0
    %v3185 = vadd.f32 0.0, %v3184
    %v3186 = vpop.f32.mrf.mxu0
    %3187 = vdwg.mxu0
    %v3188 = vadd.f32 %v3104, %v3185
    %s3189 = scalar_lea.vmem %s11, 128
    %v3190 = vld [vmem:[%s3189] sm:$0xff]
    %v3191 = vld [vmem:[%s3189 + $0x8] sm:$0xff]
    %v3192 = vld [vmem:[%s3189 + $0x10] sm:$0xff]
    %v3193 = vld [vmem:[%s3189 + $0x18] sm:$0xff]
    %v3195 = vrot.slane %v3108, 1
    %v3196 = vrot.slane %v3109, 1
    %v3197 = vsel %vm2875, %v3195, %v3196
    %v3198 = vsel %vm50, %v3197, 0
    %3200 = vmatprep.subr.mxu0 0.0
    %3201 = vmatpush1.msra.mxu0 0.0
    %3202 = vmatprep.subr.mxu0 0.0
    %3203 = vmatpush1.msra.mxu0 0.0
    %3204 = vmatprep.subr.mxu0 0.0
    %3205 = vmatpush1.msra.mxu0 0.0
    %3206 = vmatprep.subr.mxu0 0.0
    %3207 = vmatpush1.msra.mxu0 0.0
    %3208 = vmatprep.subr.mxu0 0.0
    %3209 = vmatpush1.msra.mxu0 0.0
    %3210 = vmatprep.subr.mxu0 0.0
    %3211 = vmatpush1.msra.mxu0 0.0
    %3212 = vmatprep.subr.mxu0 0.0
    %3213 = vmatpush1.msra.mxu0 0.0
    %3214 = vmatprep.subr.mxu0 0.0
    %3215 = vmatpush1.msra.mxu0 0.0
    %3216 = vmatprep.subr.mxu0 0.0
    %3217 = vmatpush1.msra.mxu0 0.0
    %3218 = vmatprep.subr.mxu0 0.0
    %3219 = vmatpush1.msra.mxu0 0.0
    %3220 = vmatprep.subr.mxu0 0.0
    %3221 = vmatpush1.msra.mxu0 0.0
    %3222 = vmatprep.subr.mxu0 0.0
    %3223 = vmatpush1.msra.mxu0 0.0
    %3224 = vmatprep.subr.mxu0 0.0
    %3225 = vmatpush1.msra.mxu0 %v3193
    %3226 = vmatprep.subr.mxu0 0.0
    %3227 = vmatpush1.msra.mxu0 %v3192
    %3228 = vmatprep.subr.mxu0 0.0
    %3229 = vmatpush1.msra.mxu0 %v3191
    %3230 = vmatprep.subr.mxu0 0.0
    %3231 = vmatpush1.msra.mxu0 %v3190
    %3232 = vmatprep.subr.mxu0 0.0
    %3233 = vmatpush2.msra.mxu0 0.0
    %3234 = vmatprep.subr.mxu0 0.0
    %3235 = vmatpush2.msra.mxu0 0.0
    %3236 = vmatprep.subr.mxu0 0.0
    %3237 = vmatpush2.msra.mxu0 0.0
    %3238 = vmatprep.subr.mxu0 0.0
    %3239 = vmatpush2.msra.mxu0 0.0
    %3240 = vmatprep.subr.mxu0 0.0
    %3241 = vmatpush2.msra.mxu0 0.0
    %3242 = vmatprep.subr.mxu0 0.0
    %3243 = vmatpush2.msra.mxu0 0.0
    %3244 = vmatprep.subr.mxu0 0.0
    %3245 = vmatpush2.msra.mxu0 0.0
    %3246 = vmatprep.subr.mxu0 0.0
    %3247 = vmatpush2.msra.mxu0 0.0
    %3248 = vmatprep.subr.mxu0 0.0
    %3249 = vmatpush2.msra.mxu0 0.0
    %3250 = vmatprep.subr.mxu0 0.0
    %3251 = vmatpush2.msra.mxu0 0.0
    %3252 = vmatprep.subr.mxu0 0.0
    %3253 = vmatpush2.msra.mxu0 0.0
    %3254 = vmatprep.subr.mxu0 0.0
    %3255 = vmatpush2.msra.mxu0 0.0
    %3256 = vmatprep.subr.mxu0 0.0
    %3257 = vmatpush2.msra.mxu0 0.0
    %3258 = vmatprep.subr.mxu0 0.0
    %3259 = vmatpush2.msra.mxu0 0.0
    %3260 = vmatprep.subr.mxu0 0.0
    %3261 = vmatpush2.msra.mxu0 0.0
    %3262 = vmatprep.subr.mxu0 0.0
    %3263 = vmatpush2.msra.mxu0 0.0
    %3264 = vmatprep.mubr.f32.mxu0 0.0
    %3265 = vmatmul.mubr.f32.gmra.mxu0 %v3198
    %v3266 = vpop.f32.mrf.mxu0
    %v3267 = vadd.f32 0.0, %v3266
    %v3268 = vpop.f32.mrf.mxu0
    %3269 = vdwg.mxu0
    %v3270 = vadd.f32 %v3188, %v3267
    %s3271 = scalar_lea.vmem %s11, 160
    %v3272 = vld [vmem:[%s3271] sm:$0xff]
    %v3273 = vld [vmem:[%s3271 + $0x8] sm:$0xff]
    %v3274 = vld [vmem:[%s3271 + $0x10] sm:$0xff]
    %v3275 = vld [vmem:[%s3271 + $0x18] sm:$0xff]
    %v3276 = vrot.slane %v3108, 2
    %v3277 = vrot.slane %v3109, 2
    %v3278 = vsel %vm3028, %v3276, %v3277
    %v3279 = vsel %vm50, %v3278, 0
    %3281 = vmatprep.subr.mxu0 0.0
    %3282 = vmatpush1.msra.mxu0 0.0
    %3283 = vmatprep.subr.mxu0 0.0
    %3284 = vmatpush1.msra.mxu0 0.0
    %3285 = vmatprep.subr.mxu0 0.0
    %3286 = vmatpush1.msra.mxu0 0.0
    %3287 = vmatprep.subr.mxu0 0.0
    %3288 = vmatpush1.msra.mxu0 0.0
    %3289 = vmatprep.subr.mxu0 0.0
    %3290 = vmatpush1.msra.mxu0 0.0
    %3291 = vmatprep.subr.mxu0 0.0
    %3292 = vmatpush1.msra.mxu0 0.0
    %3293 = vmatprep.subr.mxu0 0.0
    %3294 = vmatpush1.msra.mxu0 0.0
    %3295 = vmatprep.subr.mxu0 0.0
    %3296 = vmatpush1.msra.mxu0 0.0
    %3297 = vmatprep.subr.mxu0 0.0
    %3298 = vmatpush1.msra.mxu0 0.0
    %3299 = vmatprep.subr.mxu0 0.0
    %3300 = vmatpush1.msra.mxu0 0.0
    %3301 = vmatprep.subr.mxu0 0.0
    %3302 = vmatpush1.msra.mxu0 0.0
    %3303 = vmatprep.subr.mxu0 0.0
    %3304 = vmatpush1.msra.mxu0 0.0
    %3305 = vmatprep.subr.mxu0 0.0
    %3306 = vmatpush1.msra.mxu0 %v3275
    %3307 = vmatprep.subr.mxu0 0.0
    %3308 = vmatpush1.msra.mxu0 %v3274
    %3309 = vmatprep.subr.mxu0 0.0
    %3310 = vmatpush1.msra.mxu0 %v3273
    %3311 = vmatprep.subr.mxu0 0.0
    %3312 = vmatpush1.msra.mxu0 %v3272
    %3313 = vmatprep.subr.mxu0 0.0
    %3314 = vmatpush2.msra.mxu0 0.0
    %3315 = vmatprep.subr.mxu0 0.0
    %3316 = vmatpush2.msra.mxu0 0.0
    %3317 = vmatprep.subr.mxu0 0.0
    %3318 = vmatpush2.msra.mxu0 0.0
    %3319 = vmatprep.subr.mxu0 0.0
    %3320 = vmatpush2.msra.mxu0 0.0
    %3321 = vmatprep.subr.mxu0 0.0
    %3322 = vmatpush2.msra.mxu0 0.0
    %3323 = vmatprep.subr.mxu0 0.0
    %3324 = vmatpush2.msra.mxu0 0.0
    %3325 = vmatprep.subr.mxu0 0.0
    %3326 = vmatpush2.msra.mxu0 0.0
    %3327 = vmatprep.subr.mxu0 0.0
    %3328 = vmatpush2.msra.mxu0 0.0
    %3329 = vmatprep.subr.mxu0 0.0
    %3330 = vmatpush2.msra.mxu0 0.0
    %3331 = vmatprep.subr.mxu0 0.0
    %3332 = vmatpush2.msra.mxu0 0.0
    %3333 = vmatprep.subr.mxu0 0.0
    %3334 = vmatpush2.msra.mxu0 0.0
    %3335 = vmatprep.subr.mxu0 0.0
    %3336 = vmatpush2.msra.mxu0 0.0
    %3337 = vmatprep.subr.mxu0 0.0
    %3338 = vmatpush2.msra.mxu0 0.0
    %3339 = vmatprep.subr.mxu0 0.0
    %3340 = vmatpush2.msra.mxu0 0.0
    %3341 = vmatprep.subr.mxu0 0.0
    %3342 = vmatpush2.msra.mxu0 0.0
    %3343 = vmatprep.subr.mxu0 0.0
    %3344 = vmatpush2.msra.mxu0 0.0
    %3345 = vmatprep.mubr.f32.mxu0 0.0
    %3346 = vmatmul.mubr.f32.gmra.mxu0 %v3279
    %v3347 = vpop.f32.mrf.mxu0
    %v3348 = vadd.f32 0.0, %v3347
    %v3349 = vpop.f32.mrf.mxu0
    %3350 = vdwg.mxu0
    %v3351 = vadd.f32 %v3270, %v3348
    %s3352 = sadd.s32 %s2855, 2
    %s3353 = smul.u32 %s3352, 16
    %s3354 = scalar_lea.vmem [#allocation4], %s3353
    %v3355 = vld [vmem:[%s3354] sm:$0xff]
    %v3356 = vld [vmem:[%s3354 + $0x8] sm:$0x3]
    %s3357 = scalar_lea.vmem %s11, 192
    %v3358 = vld [vmem:[%s3357] sm:$0xff]
    %v3359 = vld [vmem:[%s3357 + $0x8] sm:$0xff]
    %v3360 = vld [vmem:[%s3357 + $0x10] sm:$0xff]
    %v3361 = vld [vmem:[%s3357 + $0x18] sm:$0xff]
    %v3363 = vsel %vm50, %v3355, 0
    %3365 = vmatprep.subr.mxu0 0.0
    %3366 = vmatpush1.msra.mxu0 0.0
    %3367 = vmatprep.subr.mxu0 0.0
    %3368 = vmatpush1.msra.mxu0 0.0
    %3369 = vmatprep.subr.mxu0 0.0
    %3370 = vmatpush1.msra.mxu0 0.0
    %3371 = vmatprep.subr.mxu0 0.0
    %3372 = vmatpush1.msra.mxu0 0.0
    %3373 = vmatprep.subr.mxu0 0.0
    %3374 = vmatpush1.msra.mxu0 0.0
    %3375 = vmatprep.subr.mxu0 0.0
    %3376 = vmatpush1.msra.mxu0 0.0
    %3377 = vmatprep.subr.mxu0 0.0
    %3378 = vmatpush1.msra.mxu0 0.0
    %3379 = vmatprep.subr.mxu0 0.0
    %3380 = vmatpush1.msra.mxu0 0.0
    %3381 = vmatprep.subr.mxu0 0.0
    %3382 = vmatpush1.msra.mxu0 0.0
    %3383 = vmatprep.subr.mxu0 0.0
    %3384 = vmatpush1.msra.mxu0 0.0
    %3385 = vmatprep.subr.mxu0 0.0
    %3386 = vmatpush1.msra.mxu0 0.0
    %3387 = vmatprep.subr.mxu0 0.0
    %3388 = vmatpush1.msra.mxu0 0.0
    %3389 = vmatprep.subr.mxu0 0.0
    %3390 = vmatpush1.msra.mxu0 %v3361
    %3391 = vmatprep.subr.mxu0 0.0
    %3392 = vmatpush1.msra.mxu0 %v3360
    %3393 = vmatprep.subr.mxu0 0.0
    %3394 = vmatpush1.msra.mxu0 %v3359
    %3395 = vmatprep.subr.mxu0 0.0
    %3396 = vmatpush1.msra.mxu0 %v3358
    %3397 = vmatprep.subr.mxu0 0.0
    %3398 = vmatpush2.msra.mxu0 0.0
    %3399 = vmatprep.subr.mxu0 0.0
    %3400 = vmatpush2.msra.mxu0 0.0
    %3401 = vmatprep.subr.mxu0 0.0
    %3402 = vmatpush2.msra.mxu0 0.0
    %3403 = vmatprep.subr.mxu0 0.0
    %3404 = vmatpush2.msra.mxu0 0.0
    %3405 = vmatprep.subr.mxu0 0.0
    %3406 = vmatpush2.msra.mxu0 0.0
    %3407 = vmatprep.subr.mxu0 0.0
    %3408 = vmatpush2.msra.mxu0 0.0
    %3409 = vmatprep.subr.mxu0 0.0
    %3410 = vmatpush2.msra.mxu0 0.0
    %3411 = vmatprep.subr.mxu0 0.0
    %3412 = vmatpush2.msra.mxu0 0.0
    %3413 = vmatprep.subr.mxu0 0.0
    %3414 = vmatpush2.msra.mxu0 0.0
    %3415 = vmatprep.subr.mxu0 0.0
    %3416 = vmatpush2.msra.mxu0 0.0
    %3417 = vmatprep.subr.mxu0 0.0
    %3418 = vmatpush2.msra.mxu0 0.0
    %3419 = vmatprep.subr.mxu0 0.0
    %3420 = vmatpush2.msra.mxu0 0.0
    %3421 = vmatprep.subr.mxu0 0.0
    %3422 = vmatpush2.msra.mxu0 0.0
    %3423 = vmatprep.subr.mxu0 0.0
    %3424 = vmatpush2.msra.mxu0 0.0
    %3425 = vmatprep.subr.mxu0 0.0
    %3426 = vmatpush2.msra.mxu0 0.0
    %3427 = vmatprep.subr.mxu0 0.0
    %3428 = vmatpush2.msra.mxu0 0.0
    %3429 = vmatprep.mubr.f32.mxu0 0.0
    %3430 = vmatmul.mubr.f32.gmra.mxu0 %v3363
    %v3431 = vpop.f32.mrf.mxu0
    %v3432 = vadd.f32 0.0, %v3431
    %v3433 = vpop.f32.mrf.mxu0
    %3434 = vdwg.mxu0
    %v3435 = vadd.f32 %v3351, %v3432
    %s3436 = scalar_lea.vmem %s11, 224
    %v3437 = vld [vmem:[%s3436] sm:$0xff]
    %v3438 = vld [vmem:[%s3436 + $0x8] sm:$0xff]
    %v3439 = vld [vmem:[%s3436 + $0x10] sm:$0xff]
    %v3440 = vld [vmem:[%s3436 + $0x18] sm:$0xff]
    %v3442 = vrot.slane %v3355, 1
    %v3443 = vrot.slane %v3356, 1
    %v3444 = vsel %vm2875, %v3442, %v3443
    %v3445 = vsel %vm50, %v3444, 0
    %3447 = vmatprep.subr.mxu0 0.0
    %3448 = vmatpush1.msra.mxu0 0.0
    %3449 = vmatprep.subr.mxu0 0.0
    %3450 = vmatpush1.msra.mxu0 0.0
    %3451 = vmatprep.subr.mxu0 0.0
    %3452 = vmatpush1.msra.mxu0 0.0
    %3453 = vmatprep.subr.mxu0 0.0
    %3454 = vmatpush1.msra.mxu0 0.0
    %3455 = vmatprep.subr.mxu0 0.0
    %3456 = vmatpush1.msra.mxu0 0.0
    %3457 = vmatprep.subr.mxu0 0.0
    %3458 = vmatpush1.msra.mxu0 0.0
    %3459 = vmatprep.subr.mxu0 0.0
    %3460 = vmatpush1.msra.mxu0 0.0
    %3461 = vmatprep.subr.mxu0 0.0
    %3462 = vmatpush1.msra.mxu0 0.0
    %3463 = vmatprep.subr.mxu0 0.0
    %3464 = vmatpush1.msra.mxu0 0.0
    %3465 = vmatprep.subr.mxu0 0.0
    %3466 = vmatpush1.msra.mxu0 0.0
    %3467 = vmatprep.subr.mxu0 0.0
    %3468 = vmatpush1.msra.mxu0 0.0
    %3469 = vmatprep.subr.mxu0 0.0
    %3470 = vmatpush1.msra.mxu0 0.0
    %3471 = vmatprep.subr.mxu0 0.0
    %3472 = vmatpush1.msra.mxu0 %v3440
    %3473 = vmatprep.subr.mxu0 0.0
    %3474 = vmatpush1.msra.mxu0 %v3439
    %3475 = vmatprep.subr.mxu0 0.0
    %3476 = vmatpush1.msra.mxu0 %v3438
    %3477 = vmatprep.subr.mxu0 0.0
    %3478 = vmatpush1.msra.mxu0 %v3437
    %3479 = vmatprep.subr.mxu0 0.0
    %3480 = vmatpush2.msra.mxu0 0.0
    %3481 = vmatprep.subr.mxu0 0.0
    %3482 = vmatpush2.msra.mxu0 0.0
    %3483 = vmatprep.subr.mxu0 0.0
    %3484 = vmatpush2.msra.mxu0 0.0
    %3485 = vmatprep.subr.mxu0 0.0
    %3486 = vmatpush2.msra.mxu0 0.0
    %3487 = vmatprep.subr.mxu0 0.0
    %3488 = vmatpush2.msra.mxu0 0.0
    %3489 = vmatprep.subr.mxu0 0.0
    %3490 = vmatpush2.msra.mxu0 0.0
    %3491 = vmatprep.subr.mxu0 0.0
    %3492 = vmatpush2.msra.mxu0 0.0
    %3493 = vmatprep.subr.mxu0 0.0
    %3494 = vmatpush2.msra.mxu0 0.0
    %3495 = vmatprep.subr.mxu0 0.0
    %3496 = vmatpush2.msra.mxu0 0.0
    %3497 = vmatprep.subr.mxu0 0.0
    %3498 = vmatpush2.msra.mxu0 0.0
    %3499 = vmatprep.subr.mxu0 0.0
    %3500 = vmatpush2.msra.mxu0 0.0
    %3501 = vmatprep.subr.mxu0 0.0
    %3502 = vmatpush2.msra.mxu0 0.0
    %3503 = vmatprep.subr.mxu0 0.0
    %3504 = vmatpush2.msra.mxu0 0.0
    %3505 = vmatprep.subr.mxu0 0.0
    %3506 = vmatpush2.msra.mxu0 0.0
    %3507 = vmatprep.subr.mxu0 0.0
    %3508 = vmatpush2.msra.mxu0 0.0
    %3509 = vmatprep.subr.mxu0 0.0
    %3510 = vmatpush2.msra.mxu0 0.0
    %3511 = vmatprep.mubr.f32.mxu0 0.0
    %3512 = vmatmul.mubr.f32.gmra.mxu0 %v3445
    %v3513 = vpop.f32.mrf.mxu0
    %v3514 = vadd.f32 0.0, %v3513
    %v3515 = vpop.f32.mrf.mxu0
    %3516 = vdwg.mxu0
    %v3517 = vadd.f32 %v3435, %v3514
    %s3518 = scalar_lea.vmem %s11, 256
    %v3519 = vld [vmem:[%s3518] sm:$0xff]
    %v3520 = vld [vmem:[%s3518 + $0x8] sm:$0xff]
    %v3521 = vld [vmem:[%s3518 + $0x10] sm:$0xff]
    %v3522 = vld [vmem:[%s3518 + $0x18] sm:$0xff]
    %v3523 = vrot.slane %v3355, 2
    %v3524 = vrot.slane %v3356, 2
    %v3525 = vsel %vm3028, %v3523, %v3524
    %v3526 = vsel %vm50, %v3525, 0
    %3528 = vmatprep.subr.mxu0 0.0
    %3529 = vmatpush1.msra.mxu0 0.0
    %3530 = vmatprep.subr.mxu0 0.0
    %3531 = vmatpush1.msra.mxu0 0.0
    %3532 = vmatprep.subr.mxu0 0.0
    %3533 = vmatpush1.msra.mxu0 0.0
    %3534 = vmatprep.subr.mxu0 0.0
    %3535 = vmatpush1.msra.mxu0 0.0
    %3536 = vmatprep.subr.mxu0 0.0
    %3537 = vmatpush1.msra.mxu0 0.0
    %3538 = vmatprep.subr.mxu0 0.0
    %3539 = vmatpush1.msra.mxu0 0.0
    %3540 = vmatprep.subr.mxu0 0.0
    %3541 = vmatpush1.msra.mxu0 0.0
    %3542 = vmatprep.subr.mxu0 0.0
    %3543 = vmatpush1.msra.mxu0 0.0
    %3544 = vmatprep.subr.mxu0 0.0
    %3545 = vmatpush1.msra.mxu0 0.0
    %3546 = vmatprep.subr.mxu0 0.0
    %3547 = vmatpush1.msra.mxu0 0.0
    %3548 = vmatprep.subr.mxu0 0.0
    %3549 = vmatpush1.msra.mxu0 0.0
    %3550 = vmatprep.subr.mxu0 0.0
    %3551 = vmatpush1.msra.mxu0 0.0
    %3552 = vmatprep.subr.mxu0 0.0
    %3553 = vmatpush1.msra.mxu0 %v3522
    %3554 = vmatprep.subr.mxu0 0.0
    %3555 = vmatpush1.msra.mxu0 %v3521
    %3556 = vmatprep.subr.mxu0 0.0
    %3557 = vmatpush1.msra.mxu0 %v3520
    %3558 = vmatprep.subr.mxu0 0.0
    %3559 = vmatpush1.msra.mxu0 %v3519
    %3560 = vmatprep.subr.mxu0 0.0
    %3561 = vmatpush2.msra.mxu0 0.0
    %3562 = vmatprep.subr.mxu0 0.0
    %3563 = vmatpush2.msra.mxu0 0.0
    %3564 = vmatprep.subr.mxu0 0.0
    %3565 = vmatpush2.msra.mxu0 0.0
    %3566 = vmatprep.subr.mxu0 0.0
    %3567 = vmatpush2.msra.mxu0 0.0
    %3568 = vmatprep.subr.mxu0 0.0
    %3569 = vmatpush2.msra.mxu0 0.0
    %3570 = vmatprep.subr.mxu0 0.0
    %3571 = vmatpush2.msra.mxu0 0.0
    %3572 = vmatprep.subr.mxu0 0.0
    %3573 = vmatpush2.msra.mxu0 0.0
    %3574 = vmatprep.subr.mxu0 0.0
    %3575 = vmatpush2.msra.mxu0 0.0
    %3576 = vmatprep.subr.mxu0 0.0
    %3577 = vmatpush2.msra.mxu0 0.0
    %3578 = vmatprep.subr.mxu0 0.0
    %3579 = vmatpush2.msra.mxu0 0.0
    %3580 = vmatprep.subr.mxu0 0.0
    %3581 = vmatpush2.msra.mxu0 0.0
    %3582 = vmatprep.subr.mxu0 0.0
    %3583 = vmatpush2.msra.mxu0 0.0
    %3584 = vmatprep.subr.mxu0 0.0
    %3585 = vmatpush2.msra.mxu0 0.0
    %3586 = vmatprep.subr.mxu0 0.0
    %3587 = vmatpush2.msra.mxu0 0.0
    %3588 = vmatprep.subr.mxu0 0.0
    %3589 = vmatpush2.msra.mxu0 0.0
    %3590 = vmatprep.subr.mxu0 0.0
    %3591 = vmatpush2.msra.mxu0 0.0
    %3592 = vmatprep.mubr.f32.mxu0 0.0
    %3593 = vmatmul.mubr.f32.gmra.mxu0 %v3526
    %v3594 = vpop.f32.mrf.mxu0
    %v3595 = vadd.f32 0.0, %v3594
    %v3596 = vpop.f32.mrf.mxu0
    %3597 = vdwg.mxu0
    %v3598 = vadd.f32 %v3517, %v3595
    %v3599 = vld [vmem:[%s12] sm:$0x1]
    %v3601 = vlaneseq
    %v3602 = vshrl.u32 %v3601, 7
    %v3603 = vsub.s32 0, %v3602
    %v3604 = vrot.slane %v3599, %v3603
    %v3606 = vadd.f32 %v3598, %v3604
    %v3607 = vmax.f32 %v3606, 0.0
    %v3608 = vld [vmem:[%s13] sm:$0xff]
    %v3609 = vld [vmem:[%s13 + $0x8] sm:$0xff]
    %v3610 = vld [vmem:[%s13 + $0x10] sm:$0xff]
    %v3611 = vld [vmem:[%s13 + $0x18] sm:$0xff]
    %v3612 = vld [vmem:[%s14] sm:$0x1]
    %v3614 = vlaneseq
    %v3615 = vshrl.u32 %v3614, 7
    %v3616 = vsub.s32 0, %v3615
    %v3617 = vrot.slane %v3612, %v3616
    %v3620 = vsel %vm50, %v3607, 0
    %3622 = vmatprep.subr.mxu0 0.0
    %3623 = vmatpush1.msra.mxu0 0.0
    %3624 = vmatprep.subr.mxu0 0.0
    %3625 = vmatpush1.msra.mxu0 0.0
    %3626 = vmatprep.subr.mxu0 0.0
    %3627 = vmatpush1.msra.mxu0 0.0
    %3628 = vmatprep.subr.mxu0 0.0
    %3629 = vmatpush1.msra.mxu0 0.0
    %3630 = vmatprep.subr.mxu0 0.0
    %3631 = vmatpush1.msra.mxu0 0.0
    %3632 = vmatprep.subr.mxu0 0.0
    %3633 = vmatpush1.msra.mxu0 0.0
    %3634 = vmatprep.subr.mxu0 0.0
    %3635 = vmatpush1.msra.mxu0 0.0
    %3636 = vmatprep.subr.mxu0 0.0
    %3637 = vmatpush1.msra.mxu0 0.0
    %3638 = vmatprep.subr.mxu0 0.0
    %3639 = vmatpush1.msra.mxu0 0.0
    %3640 = vmatprep.subr.mxu0 0.0
    %3641 = vmatpush1.msra.mxu0 0.0
    %3642 = vmatprep.subr.mxu0 0.0
    %3643 = vmatpush1.msra.mxu0 0.0
    %3644 = vmatprep.subr.mxu0 0.0
    %3645 = vmatpush1.msra.mxu0 0.0
    %3646 = vmatprep.subr.mxu0 0.0
    %3647 = vmatpush1.msra.mxu0 %v3611
    %3648 = vmatprep.subr.mxu0 0.0
    %3649 = vmatpush1.msra.mxu0 %v3610
    %3650 = vmatprep.subr.mxu0 0.0
    %3651 = vmatpush1.msra.mxu0 %v3609
    %3652 = vmatprep.subr.mxu0 0.0
    %3653 = vmatpush1.msra.mxu0 %v3608
    %3654 = vmatprep.subr.mxu0 0.0
    %3655 = vmatpush2.msra.mxu0 0.0
    %3656 = vmatprep.subr.mxu0 0.0
    %3657 = vmatpush2.msra.mxu0 0.0
    %3658 = vmatprep.subr.mxu0 0.0
    %3659 = vmatpush2.msra.mxu0 0.0
    %3660 = vmatprep.subr.mxu0 0.0
    %3661 = vmatpush2.msra.mxu0 0.0
    %3662 = vmatprep.subr.mxu0 0.0
    %3663 = vmatpush2.msra.mxu0 0.0
    %3664 = vmatprep.subr.mxu0 0.0
    %3665 = vmatpush2.msra.mxu0 0.0
    %3666 = vmatprep.subr.mxu0 0.0
    %3667 = vmatpush2.msra.mxu0 0.0
    %3668 = vmatprep.subr.mxu0 0.0
    %3669 = vmatpush2.msra.mxu0 0.0
    %3670 = vmatprep.subr.mxu0 0.0
    %3671 = vmatpush2.msra.mxu0 0.0
    %3672 = vmatprep.subr.mxu0 0.0
    %3673 = vmatpush2.msra.mxu0 0.0
    %3674 = vmatprep.subr.mxu0 0.0
    %3675 = vmatpush2.msra.mxu0 0.0
    %3676 = vmatprep.subr.mxu0 0.0
    %3677 = vmatpush2.msra.mxu0 0.0
    %3678 = vmatprep.subr.mxu0 0.0
    %3679 = vmatpush2.msra.mxu0 0.0
    %3680 = vmatprep.subr.mxu0 0.0
    %3681 = vmatpush2.msra.mxu0 0.0
    %3682 = vmatprep.subr.mxu0 0.0
    %3683 = vmatpush2.msra.mxu0 0.0
    %3684 = vmatprep.subr.mxu0 0.0
    %3685 = vmatpush2.msra.mxu0 0.0
    %3686 = vmatprep.mubr.f32.mxu0 0.0
    %3687 = vmatmul.mubr.f32.gmra.mxu0 %v3620
    %v3688 = vpop.f32.mrf.mxu0
    %v3689 = vadd.f32 %v3617, %v3688
    %v3690 = vpop.f32.mrf.mxu0
    %3691 = vdwg.mxu0
    %s3692 = smul.u32 %s2855, 8
    %s3693 = scalar_lea.vmem %s15, %s3692
    %vm3694 = vcmask 23552
    %3695 = vst.msk [vmem:[%s3693] sm:$0xff] %vm3694, %v3689
  $region87: #{model_forward.1} parent=0 // loop_footer
    %s2859 = sadd.s32 1, %s2855
  $region88: #{model_forward.1} parent=0 // loop_footer_branch
    %2854 = sbr.rel target = $region84
  $region89: #{model_forward.1} parent=0 // loop_exit
    _
  // Predicated region
  $region90: #{model_forward.1} parent=0 // pred_check
    _
  $region91: #{model_forward.1} parent=0 // pred_check_branch
    %3697 = sbr.rel (0) target = $region93
  $region92: #{model_forward.1} parent=0 // pred_region
    _
  $region93: #{model_forward.1} parent=0 // pred_fallthru
    _
  // Predicated region
  $region94: #{model_forward.1} parent=0 // pred_check
    _
  $region95: #{model_forward.1} parent=0 // pred_check_branch
    %3699 = sbr.rel (0) target = $region97
  $region96: #{model_forward.1} parent=0 // pred_region
    _
  $region97: #{model_forward.1} parent=0 // pred_fallthru
    _

</llo_original>
